<compile_context>
chip_gen: v5e
topology: v5e:2x2
jax: 0.10.0
libtpu: 0.0.40
codegen_flags: <defaults>
</compile_context>

<pallas_src>
import jax
import jax.numpy as jnp
from jax import lax
from jax.experimental import pallas as pl
from jax.experimental.pallas import tpu as pltpu


def _mlp_kernel(x_ref,
                w1, b1, w2, b2, w3, b3, w4, b4, w5, b5, w6, b6,
                o_ref):
    """One batch tile of the 6-layer MLP, computed feature-major (batch on lanes).

    x_ref : (batch_tile, D) f32  -- batch on sublanes, exactly as stored in HBM
    w1..w5: (out_k, in_k)  bf16  -- PyTorch nn.Linear layout, resident in VMEM
    w6    : (8, 1)         f32   -- fc6 weight, column vector for the VPU layer
    b1..b6: (out_k, 1)     f32
    o_ref : (1, batch_tile) f32  -- lane-dense output row
    """
    # In-kernel f32->bf16 cast (VPU, co-issues for free; no wrapper HBM pass).
    x = x_ref[...].astype(jnp.bfloat16)                         # (bt, D) bf16

    def layer(w, b, h_bf16):
        # (out, in) @ (in, bt) -> (out, bt); accumulate in f32 on the MXU.
        z = jnp.dot(w[...], h_bf16, preferred_element_type=jnp.float32)
        return z + b[...]                                       # bias broadcasts along lanes (batch)

    # Layer 1: contract x's feature dim directly (transposed-rhs matmul fused
    # into the MXU), so activations are batch-on-lanes with zero layout work.
    z1 = lax.dot_general(w1[...], x,
                         dimension_numbers=(((1,), (1,)), ((), ())),
                         preferred_element_type=jnp.float32) + b1[...]   # (16, bt) f32

    # bf16 epilogue: round accumulator once, ReLU in bf16 (equivalent numerics,
    # half the VALU work / vreg footprint on v6e & v7x).
    h = jnp.maximum(z1.astype(jnp.bfloat16), 0.0)               # (16, bt)  bf16
    h = jnp.maximum(layer(w2, b2, h).astype(jnp.bfloat16), 0.0)  # (128, bt) bf16
    h = jnp.maximum(layer(w3, b3, h).astype(jnp.bfloat16), 0.0)  # (64, bt)  bf16
    h = jnp.maximum(layer(w4, b4, h).astype(jnp.bfloat16), 0.0)  # (64, bt)  bf16
    h5 = jnp.maximum(layer(w5, b5, h), 0.0)                      # (8, bt) f32 (feeds VPU only)

    # Layer 6: out-dim 1 -> skip the MXU entirely: broadcast-mul + sublane reduce.
    z6 = jnp.sum(w6[...] * h5, axis=0, keepdims=True) + b6[...]  # (1, bt) f32

    # Exact sigmoid; exp lands on the EUP, (1, bt) is tiny.
    o_ref[...] = 1.0 / (1.0 + jnp.exp(-z6))


def mlp_forward(x, params, *, batch_tile=1024):
    """x: (B, input_size) float. params: [(W (out,in) f32, b (out,) f32)] x 6."""
    B, D = x.shape
    assert batch_tile % 128 == 0, "batch_tile must be a multiple of 128 (lane-dense output)"
    pad = (-B) % batch_tile
    xin = x.astype(jnp.float32)
    if pad:                                    # only pay the pad pass when B doesn't divide
        xin = jnp.pad(xin, ((0, pad), (0, 0)))
    Bp = B + pad
    num_tiles = Bp // batch_tile               # for v7x pick batch_tile so this is even

    flat = []
    n_layers = len(params)
    for i, (w, b) in enumerate(params):
        if i < n_layers - 1:
            flat.append(w.astype(jnp.bfloat16))                  # bf16 weights for the MXU
        else:
            flat.append(w.reshape(-1, 1).astype(jnp.float32))    # fc6: (1,8) -> (8,1) f32 for VPU layer
        flat.append(b.reshape(-1, 1).astype(jnp.float32))        # f32 bias added to f32 accumulator

    # Weights/biases: full-array blocks with constant index_map -> resident in VMEM,
    # not re-DMA'd per grid step.
    def full_spec(arr):
        return pl.BlockSpec(arr.shape, lambda i: (0, 0))

    in_specs = [pl.BlockSpec((batch_tile, D), lambda i: (i, 0))]  # x stays batch-major in HBM
    in_specs += [full_spec(p) for p in flat]

    # Lane-dense output: one (1, batch_tile) f32 row per grid step (unmasked vst).
    out_specs = pl.BlockSpec((1, batch_tile), lambda i: (0, i))

    out = pl.pallas_call(
        _mlp_kernel,
        out_shape=jax.ShapeDtypeStruct((1, Bp), jnp.float32),
        grid_spec=pltpu.PrefetchScalarGridSpec(
            num_scalar_prefetch=0,
            grid=(num_tiles,),
            in_specs=in_specs,
            out_specs=out_specs,
        ),
        compiler_params=pltpu.CompilerParams(
            dimension_semantics=("parallel",),   # batch tiles shard across TCs on v7x
        ),
    )(xin, *flat)

    return out.reshape(Bp, 1)[:B]                # (1, Bp) -> (B, 1), tiny layout plumbing


def init_params(key, input_size):
    """Deterministic init matching nn.Linear shapes (W: (out, in), uniform +-1/sqrt(fan_in))."""
    dims = [input_size, 16, 128, 64, 64, 8, 1]
    params = []
    for i in range(len(dims) - 1):
        fan_in, fan_out = dims[i], dims[i + 1]
        key, kw, kb = jax.random.split(key, 3)
        bound = 1.0 / (fan_in ** 0.5)
        w = jax.random.uniform(kw, (fan_out, fan_in), jnp.float32, -bound, bound)
        b = jax.random.uniform(kb, (fan_out,), jnp.float32, -bound, bound)
        params.append((w, b))
    return params


def reference_forward(x, params):
    """Pure-f32 reference matching the PyTorch module."""
    h = x
    for i, (w, b) in enumerate(params):
        h = h @ w.T + b
        if i < len(params) - 1:
            h = jnp.maximum(h, 0.0)
    return jax.nn.sigmoid(h)


def reference_forward_bf16(x, params):
    """Reference mirroring the kernel's bf16-in / f32-accumulate quantization."""
    f32 = jnp.float32
    h = x.astype(jnp.bfloat16).astype(f32)
    # Layers 1-5: bf16 weights, f32 accumulation; layers 1-4 activations rounded to bf16.
    for i, (w, b) in enumerate(params[:5]):
        wq = w.astype(jnp.bfloat16).astype(f32)
        h = jnp.maximum(h @ wq.T + b, 0.0)
        if i < 4:
            h = h.astype(jnp.bfloat16).astype(f32)
    # Layer 6 entirely in f32 (VPU path in the kernel).
    w6, b6 = params[5]
    z = h @ w6.T + b6
    return jax.nn.sigmoid(z)


if __name__ == "__main__":
    key = jax.random.PRNGKey(0)
    input_size = 32
    batch = 2048          # 2 batch tiles of 1024 -> even grid keeps both v7x TCs busy

    kx, kp = jax.random.split(key)
    x = jax.random.normal(kx, (batch, input_size), jnp.float32)
    params = init_params(kp, input_size)

    out = jax.block_until_ready(mlp_forward(x, params, batch_tile=1024))

    ref_q = reference_forward_bf16(x, params)     # mirrors kernel quantization (tight check)
    ref_f = reference_forward(x, params)          # original f32 semantics (sanity check)

    assert out.shape == (batch, 1)
    assert jnp.allclose(out, ref_q, atol=1e-2, rtol=1e-2), float(jnp.max(jnp.abs(out - ref_q)))
    assert jnp.allclose(out, ref_f, atol=5e-2, rtol=5e-2), float(jnp.max(jnp.abs(out - ref_f)))

    print("KERNEL_OK")
</pallas_src>

<mosaic_0001>
module attributes {stable_mosaic.version = 11 : i64} {
  func.func @_mlp_kernel(%arg0: i32, %arg1: memref<1024x32xf32, #tpu.memory_space<vmem>>, %arg2: memref<16x32xbf16, #tpu.memory_space<vmem>>, %arg3: memref<16x1xf32, #tpu.memory_space<vmem>>, %arg4: memref<128x16xbf16, #tpu.memory_space<vmem>>, %arg5: memref<128x1xf32, #tpu.memory_space<vmem>>, %arg6: memref<64x128xbf16, #tpu.memory_space<vmem>>, %arg7: memref<64x1xf32, #tpu.memory_space<vmem>>, %arg8: memref<64x64xbf16, #tpu.memory_space<vmem>>, %arg9: memref<64x1xf32, #tpu.memory_space<vmem>>, %arg10: memref<8x64xbf16, #tpu.memory_space<vmem>>, %arg11: memref<8x1xf32, #tpu.memory_space<vmem>>, %arg12: memref<8x1xf32, #tpu.memory_space<vmem>>, %arg13: memref<1x1xf32, #tpu.memory_space<vmem>>, %arg14: memref<1x1024xf32, #tpu.memory_space<vmem>>) attributes {dimension_semantics = [#tpu.dimension_semantics<parallel>], iteration_bounds = array<i64: 2>, scalar_prefetch = 0 : i64, scratch_operands = 0 : i64, tpu.core_type = #tpu.core_type<tc>, window_params = [{transform_indices = @transform_0, window_bounds = array<i64: 1024, 32>}, {pipeline_mode = #tpu.pipeline_mode<synchronous>, transform_indices = @transform_1, window_bounds = array<i64: 16, 32>}, {pipeline_mode = #tpu.pipeline_mode<synchronous>, transform_indices = @transform_2, window_bounds = array<i64: 16, 1>}, {pipeline_mode = #tpu.pipeline_mode<synchronous>, transform_indices = @transform_3, window_bounds = array<i64: 128, 16>}, {pipeline_mode = #tpu.pipeline_mode<synchronous>, transform_indices = @transform_4, window_bounds = array<i64: 128, 1>}, {pipeline_mode = #tpu.pipeline_mode<synchronous>, transform_indices = @transform_5, window_bounds = array<i64: 64, 128>}, {pipeline_mode = #tpu.pipeline_mode<synchronous>, transform_indices = @transform_6, window_bounds = array<i64: 64, 1>}, {pipeline_mode = #tpu.pipeline_mode<synchronous>, transform_indices = @transform_7, window_bounds = array<i64: 64, 64>}, {pipeline_mode = #tpu.pipeline_mode<synchronous>, transform_indices = @transform_8, window_bounds = array<i64: 64, 1>}, {pipeline_mode = #tpu.pipeline_mode<synchronous>, transform_indices = @transform_9, window_bounds = array<i64: 8, 64>}, {pipeline_mode = #tpu.pipeline_mode<synchronous>, transform_indices = @transform_10, window_bounds = array<i64: 8, 1>}, {pipeline_mode = #tpu.pipeline_mode<synchronous>, transform_indices = @transform_11, window_bounds = array<i64: 8, 1>}, {pipeline_mode = #tpu.pipeline_mode<synchronous>, transform_indices = @transform_12, window_bounds = array<i64: 1, 1>}, {transform_indices = @transform_13, window_bounds = array<i64: 1, 1024>}]} {
    %c0 = arith.constant 0 : index
    %c0_0 = arith.constant 0 : index
    %0 = vector.load %arg1[%c0, %c0_0] : memref<1024x32xf32, #tpu.memory_space<vmem>>, vector<1024x32xf32>
    %1 = arith.truncf %0 : vector<1024x32xf32> to vector<1024x32xbf16>
    %c0_1 = arith.constant 0 : index
    %c0_2 = arith.constant 0 : index
    %2 = vector.load %arg2[%c0_1, %c0_2] : memref<16x32xbf16, #tpu.memory_space<vmem>>, vector<16x32xbf16>
    %cst = arith.constant dense<0.000000e+00> : vector<16x1024xf32>
    %3 = tpu.matmul %2, %1, %cst {dimension_numbers = #tpu.dot_dimension_numbers<[1], [1], [0], [0], [0, 0, 1, 0], [], []>} : vector<16x32xbf16>, vector<1024x32xbf16>, vector<16x1024xf32> -> vector<16x1024xf32>
    %c0_3 = arith.constant 0 : index
    %c0_4 = arith.constant 0 : index
    %4 = vector.load %arg3[%c0_3, %c0_4] : memref<16x1xf32, #tpu.memory_space<vmem>>, vector<16x1xf32>
    %5 = vector.broadcast %4 : vector<16x1xf32> to vector<16x1024xf32>
    %6 = arith.addf %3, %5 : vector<16x1024xf32>
    %7 = arith.truncf %6 : vector<16x1024xf32> to vector<16x1024xbf16>
    %cst_5 = arith.constant 0.000000e+00 : bf16
    %8 = vector.broadcast %cst_5 : bf16 to vector<16x1024xbf16>
    %9 = arith.maximumf %7, %8 : vector<16x1024xbf16>
    %c0_6 = arith.constant 0 : index
    %c0_7 = arith.constant 0 : index
    %10 = vector.load %arg4[%c0_6, %c0_7] : memref<128x16xbf16, #tpu.memory_space<vmem>>, vector<128x16xbf16>
    %cst_8 = arith.constant dense<0.000000e+00> : vector<128x1024xf32>
    %11 = tpu.matmul %10, %9, %cst_8 {dimension_numbers = #tpu.dot_dimension_numbers<[1], [0], [0], [1], [0, 0, 1, 1], [], []>} : vector<128x16xbf16>, vector<16x1024xbf16>, vector<128x1024xf32> -> vector<128x1024xf32>
    %c0_9 = arith.constant 0 : index
    %c0_10 = arith.constant 0 : index
    %12 = vector.load %arg5[%c0_9, %c0_10] : memref<128x1xf32, #tpu.memory_space<vmem>>, vector<128x1xf32>
    %13 = vector.broadcast %12 : vector<128x1xf32> to vector<128x1024xf32>
    %14 = arith.addf %11, %13 : vector<128x1024xf32>
    %15 = arith.truncf %14 : vector<128x1024xf32> to vector<128x1024xbf16>
    %cst_11 = arith.constant 0.000000e+00 : bf16
    %16 = vector.broadcast %cst_11 : bf16 to vector<128x1024xbf16>
    %17 = arith.maximumf %15, %16 : vector<128x1024xbf16>
    %c0_12 = arith.constant 0 : index
    %c0_13 = arith.constant 0 : index
    %18 = vector.load %arg6[%c0_12, %c0_13] : memref<64x128xbf16, #tpu.memory_space<vmem>>, vector<64x128xbf16>
    %cst_14 = arith.constant dense<0.000000e+00> : vector<64x1024xf32>
    %19 = tpu.matmul %18, %17, %cst_14 {dimension_numbers = #tpu.dot_dimension_numbers<[1], [0], [0], [1], [0, 0, 1, 1], [], []>} : vector<64x128xbf16>, vector<128x1024xbf16>, vector<64x1024xf32> -> vector<64x1024xf32>
    %c0_15 = arith.constant 0 : index
    %c0_16 = arith.constant 0 : index
    %20 = vector.load %arg7[%c0_15, %c0_16] : memref<64x1xf32, #tpu.memory_space<vmem>>, vector<64x1xf32>
    %21 = vector.broadcast %20 : vector<64x1xf32> to vector<64x1024xf32>
    %22 = arith.addf %19, %21 : vector<64x1024xf32>
    %23 = arith.truncf %22 : vector<64x1024xf32> to vector<64x1024xbf16>
    %cst_17 = arith.constant 0.000000e+00 : bf16
    %24 = vector.broadcast %cst_17 : bf16 to vector<64x1024xbf16>
    %25 = arith.maximumf %23, %24 : vector<64x1024xbf16>
    %c0_18 = arith.constant 0 : index
    %c0_19 = arith.constant 0 : index
    %26 = vector.load %arg8[%c0_18, %c0_19] : memref<64x64xbf16, #tpu.memory_space<vmem>>, vector<64x64xbf16>
    %cst_20 = arith.constant dense<0.000000e+00> : vector<64x1024xf32>
    %27 = tpu.matmul %26, %25, %cst_20 {dimension_numbers = #tpu.dot_dimension_numbers<[1], [0], [0], [1], [0, 0, 1, 1], [], []>} : vector<64x64xbf16>, vector<64x1024xbf16>, vector<64x1024xf32> -> vector<64x1024xf32>
    %c0_21 = arith.constant 0 : index
    %c0_22 = arith.constant 0 : index
    %28 = vector.load %arg9[%c0_21, %c0_22] : memref<64x1xf32, #tpu.memory_space<vmem>>, vector<64x1xf32>
    %29 = vector.broadcast %28 : vector<64x1xf32> to vector<64x1024xf32>
    %30 = arith.addf %27, %29 : vector<64x1024xf32>
    %31 = arith.truncf %30 : vector<64x1024xf32> to vector<64x1024xbf16>
    %cst_23 = arith.constant 0.000000e+00 : bf16
    %32 = vector.broadcast %cst_23 : bf16 to vector<64x1024xbf16>
    %33 = arith.maximumf %31, %32 : vector<64x1024xbf16>
    %c0_24 = arith.constant 0 : index
    %c0_25 = arith.constant 0 : index
    %34 = vector.load %arg10[%c0_24, %c0_25] : memref<8x64xbf16, #tpu.memory_space<vmem>>, vector<8x64xbf16>
    %cst_26 = arith.constant dense<0.000000e+00> : vector<8x1024xf32>
    %35 = tpu.matmul %34, %33, %cst_26 {dimension_numbers = #tpu.dot_dimension_numbers<[1], [0], [0], [1], [0, 0, 1, 1], [], []>} : vector<8x64xbf16>, vector<64x1024xbf16>, vector<8x1024xf32> -> vector<8x1024xf32>
    %c0_27 = arith.constant 0 : index
    %c0_28 = arith.constant 0 : index
    %36 = vector.load %arg11[%c0_27, %c0_28] : memref<8x1xf32, #tpu.memory_space<vmem>>, vector<8x1xf32>
    %37 = vector.broadcast %36 : vector<8x1xf32> to vector<8x1024xf32>
    %38 = arith.addf %35, %37 : vector<8x1024xf32>
    %cst_29 = arith.constant 0.000000e+00 : f32
    %39 = vector.broadcast %cst_29 : f32 to vector<8x1024xf32>
    %40 = arith.maximumf %38, %39 : vector<8x1024xf32>
    %c0_30 = arith.constant 0 : index
    %c0_31 = arith.constant 0 : index
    %41 = vector.load %arg12[%c0_30, %c0_31] : memref<8x1xf32, #tpu.memory_space<vmem>>, vector<8x1xf32>
    %42 = vector.broadcast %41 : vector<8x1xf32> to vector<8x1024xf32>
    %43 = arith.mulf %42, %40 : vector<8x1024xf32>
    %cst_32 = arith.constant dense<0.000000e+00> : vector<1024xf32>
    %44 = vector.multi_reduction <add>, %43, %cst_32 [0] : vector<8x1024xf32> to vector<1024xf32>
    %45 = vector.shape_cast %44 : vector<1024xf32> to vector<1x1024xf32>
    %c0_33 = arith.constant 0 : index
    %c0_34 = arith.constant 0 : index
    %46 = vector.load %arg13[%c0_33, %c0_34] : memref<1x1xf32, #tpu.memory_space<vmem>>, vector<1x1xf32>
    %47 = vector.broadcast %46 : vector<1x1xf32> to vector<1x1024xf32>
    %48 = arith.addf %45, %47 : vector<1x1024xf32>
    %cst_35 = arith.constant 0.000000e+00 : f32
    %49 = vector.broadcast %cst_35 : f32 to vector<1x1024xf32>
    %50 = arith.subf %49, %48 : vector<1x1024xf32>
    %51 = math.exp %50 : vector<1x1024xf32>
    %cst_36 = arith.constant 1.000000e+00 : f32
    %52 = vector.broadcast %cst_36 : f32 to vector<1x1024xf32>
    %53 = arith.addf %52, %51 : vector<1x1024xf32>
    %cst_37 = arith.constant 1.000000e+00 : f32
    %54 = vector.broadcast %cst_37 : f32 to vector<1x1024xf32>
    %55 = arith.divf %54, %53 : vector<1x1024xf32>
    %c0_38 = arith.constant 0 : index
    %c0_39 = arith.constant 0 : index
    %56 = vector.load %arg14[%c0_38, %c0_39] : memref<1x1024xf32, #tpu.memory_space<vmem>>, vector<1x1024xf32>
    tpu.vector_store %arg14[%c0_38, %c0_39], %55 {strides = array<i32>} : memref<1x1024xf32, #tpu.memory_space<vmem>>, vector<1x1024xf32>,
    return
  }
  func.func @transform_0(%arg0: i32) -> (i32, i32) {
    %c0_i32 = arith.constant 0 : i32
    %c0_i32_0 = arith.constant 0 : i32
    return %arg0, %c0_i32 : i32, i32
  }
  func.func @transform_1(%arg0: i32) -> (i32, i32) {
    %c0_i32 = arith.constant 0 : i32
    %c0_i32_0 = arith.constant 0 : i32
    %c0_i32_1 = arith.constant 0 : i32
    return %c0_i32, %c0_i32_0 : i32, i32
  }
  func.func @transform_2(%arg0: i32) -> (i32, i32) {
    %c0_i32 = arith.constant 0 : i32
    %c0_i32_0 = arith.constant 0 : i32
    %c0_i32_1 = arith.constant 0 : i32
    return %c0_i32, %c0_i32_0 : i32, i32
  }
  func.func @transform_3(%arg0: i32) -> (i32, i32) {
    %c0_i32 = arith.constant 0 : i32
    %c0_i32_0 = arith.constant 0 : i32
    %c0_i32_1 = arith.constant 0 : i32
    return %c0_i32, %c0_i32_0 : i32, i32
  }
  func.func @transform_4(%arg0: i32) -> (i32, i32) {
    %c0_i32 = arith.constant 0 : i32
    %c0_i32_0 = arith.constant 0 : i32
    %c0_i32_1 = arith.constant 0 : i32
    return %c0_i32, %c0_i32_0 : i32, i32
  }
  func.func @transform_5(%arg0: i32) -> (i32, i32) {
    %c0_i32 = arith.constant 0 : i32
    %c0_i32_0 = arith.constant 0 : i32
    %c0_i32_1 = arith.constant 0 : i32
    return %c0_i32, %c0_i32_0 : i32, i32
  }
  func.func @transform_6(%arg0: i32) -> (i32, i32) {
    %c0_i32 = arith.constant 0 : i32
    %c0_i32_0 = arith.constant 0 : i32
    %c0_i32_1 = arith.constant 0 : i32
    return %c0_i32, %c0_i32_0 : i32, i32
  }
  func.func @transform_7(%arg0: i32) -> (i32, i32) {
    %c0_i32 = arith.constant 0 : i32
    %c0_i32_0 = arith.constant 0 : i32
    %c0_i32_1 = arith.constant 0 : i32
    return %c0_i32, %c0_i32_0 : i32, i32
  }
  func.func @transform_8(%arg0: i32) -> (i32, i32) {
    %c0_i32 = arith.constant 0 : i32
    %c0_i32_0 = arith.constant 0 : i32
    %c0_i32_1 = arith.constant 0 : i32
    return %c0_i32, %c0_i32_0 : i32, i32
  }
  func.func @transform_9(%arg0: i32) -> (i32, i32) {
    %c0_i32 = arith.constant 0 : i32
    %c0_i32_0 = arith.constant 0 : i32
    %c0_i32_1 = arith.constant 0 : i32
    return %c0_i32, %c0_i32_0 : i32, i32
  }
  func.func @transform_10(%arg0: i32) -> (i32, i32) {
    %c0_i32 = arith.constant 0 : i32
    %c0_i32_0 = arith.constant 0 : i32
    %c0_i32_1 = arith.constant 0 : i32
    return %c0_i32, %c0_i32_0 : i32, i32
  }
  func.func @transform_11(%arg0: i32) -> (i32, i32) {
    %c0_i32 = arith.constant 0 : i32
    %c0_i32_0 = arith.constant 0 : i32
    %c0_i32_1 = arith.constant 0 : i32
    return %c0_i32, %c0_i32_0 : i32, i32
  }
  func.func @transform_12(%arg0: i32) -> (i32, i32) {
    %c0_i32 = arith.constant 0 : i32
    %c0_i32_0 = arith.constant 0 : i32
    %c0_i32_1 = arith.constant 0 : i32
    return %c0_i32, %c0_i32_0 : i32, i32
  }
  func.func @transform_13(%arg0: i32) -> (i32, i32) {
    %c0_i32 = arith.constant 0 : i32
    %c0_i32_0 = arith.constant 0 : i32
    return %c0_i32, %arg0 : i32, i32
  }
}

</mosaic_0001>

<llo_original>
// kernel: tpu_custom_call.1
$region0: #{tpu_custom_call.1}
  #allocation0 [shape = 'u32[]', space=smem, size = 0x4, offset = 0x4, fixed_abs, tag = 'smem constant byte address 0x4 - core index']
  #allocation1 [shape = 'u32[72,128]{1,0:T(1,128)}', space=vmem, size = 0x9000, scoped, tag = 'internal scratch']
  #allocation2 [shape = 'f32[1,1]{1,0:T(1,128)S(1)}', space=vmem, size = 0x200, scoped, tag = 'scoped memory for tpu_custom_call.1']
  %s0 = inlined_call_operand.vmem [shape: f32[2048,32], index: 0, kind: input, shape index: {}]
  %s1 = inlined_call_operand.vmem [shape: bf16[16,32], index: 1, kind: input, shape index: {}]
  %s2 = inlined_call_operand.vmem [shape: f32[16,1], index: 2, kind: input, shape index: {}]
  %s3 = inlined_call_operand.vmem [shape: bf16[128,16], index: 3, kind: input, shape index: {}]
  %s4 = inlined_call_operand.vmem [shape: f32[128,1], index: 4, kind: input, shape index: {}]
  %s5 = inlined_call_operand.vmem [shape: bf16[64,128], index: 5, kind: input, shape index: {}]
  %s6 = inlined_call_operand.vmem [shape: f32[64,1], index: 6, kind: input, shape index: {}]
  %s7 = inlined_call_operand.vmem [shape: bf16[64,64], index: 7, kind: input, shape index: {}]
  %s8 = inlined_call_operand.vmem [shape: f32[64,1], index: 8, kind: input, shape index: {}]
  %s9 = inlined_call_operand.vmem [shape: bf16[8,64], index: 9, kind: input, shape index: {}]
  %s10 = inlined_call_operand.vmem [shape: f32[8,1], index: 10, kind: input, shape index: {}]
  %s11 = inlined_call_operand.vmem [shape: f32[8,1], index: 11, kind: input, shape index: {}]
  %s12 = inlined_call_operand.<no memory space> [shape: f32[1,1], index: 12, kind: input, shape index: {}]
  %s13 = inlined_call_operand.hbm [shape: f32[1,2048], index: 13, kind: output, shape index: {}]
  %s14 = sld [smem:[#allocation0]]
  $region85: #{tpu_custom_call.1} parent=0
    _
  %s16 = ssub.s32 1, %s14
  %s17 = scalar_select 0, %s16, %s14
  %v18 = vstv %s12
  %19 = vst [vmem:[#allocation2] sm:$0x1] %v18
  $region1: #{tpu_custom_call.1} parent=0
    #allocation3 [shape = 'u8[8192]{0}', space=vmem, size = 0x2000, scoped, tag = 'output window, operand 0']
    #allocation4 [shape = 's32[2]{0}', space=sflag, size = 0x8, scoped, tag = 'scoped memory for tpu_custom_call.1']
    %20 = vsyncpa [#allocation4], 0
    %s21 = scalar_lea.sflag [#allocation4], 1
    %22 = vsyncpa %s21, 0
    loop: start=0, step=1, limit=4
    $region2: #{tpu_custom_call.1} parent=1 // loop_pre_header
      _
    $region3: #{tpu_custom_call.1} parent=1 // loop_header
      %s24 = sphi 0, %s28
      %p25 = scmp.ge.s32.totalorder %s24, 4
      %s34 = sphi 0, %s36
      %s37 = sphi 0, %s34
      %s38 = sphi 0, %s37
      %s54 = sphi 0, %s38
      %s58 = sphi 0, %s58
      %s60 = sphi 0, %s58
      %s61 = sphi 0, %s60
      %s75 = sphi 0, %s61
      %s79 = sphi 0, %s79
      %s81 = sphi 0, %s79
      %s82 = sphi 0, %s81
      %s96 = sphi 0, %s82
      %s100 = sphi 0, %s100
      %s102 = sphi 0, %s100
      %s103 = sphi 0, %s102
      %s117 = sphi 0, %s103
      %s121 = sphi 0, %s121
      %s123 = sphi 0, %s121
      %s124 = sphi 0, %s123
      %s138 = sphi 0, %s124
      %s142 = sphi 0, %s142
      %s144 = sphi 0, %s142
      %s145 = sphi 0, %s144
      %s159 = sphi 0, %s145
      %s163 = sphi 0, %s163
      %s165 = sphi 0, %s163
      %s166 = sphi 0, %s165
      %s180 = sphi 0, %s166
      %s184 = sphi 0, %s184
      %s186 = sphi 0, %s184
      %s187 = sphi 0, %s186
      %s201 = sphi 0, %s187
      %s205 = sphi 0, %s205
      %s207 = sphi 0, %s205
      %s208 = sphi 0, %s207
      %s222 = sphi 0, %s208
      %s226 = sphi 0, %s226
      %s228 = sphi 0, %s226
      %s229 = sphi 0, %s228
      %s243 = sphi 0, %s229
      %s247 = sphi 0, %s247
      %s249 = sphi 0, %s247
      %s250 = sphi 0, %s249
      %s264 = sphi 0, %s250
      %s268 = sphi 0, %s268
      %s270 = sphi 0, %s268
      %s271 = sphi 0, %s270
      %s285 = sphi 0, %s271
      %s289 = sphi 0, %s289
      %s291 = sphi 0, %s289
      %s292 = sphi 0, %s291
      %s306 = sphi 0, %s292
      %s312 = sphi 0, %s314
      %s315 = sphi 0, %s312
      %s316 = sphi 0, %s315
      %s332 = sphi 0, %s316
    $region4: #{tpu_custom_call.1} parent=1 // loop_header_branch
      %27 = sbr.rel (%p25) target = $region8
    $region5: #{tpu_custom_call.1} parent=1 // loop_body
      %s29 = ssub.s32 %s24, 1
      %s30 = ssub.s32 %s24, 2
      %s31 = sadd.s32 %s24, 1
      %s32 = ssub.s32 %s24, %s31
      %p33 = scmp.eq.s32.totalorder %s32, 0
      %s35 = sadd.s32 %s34, 1
      %s36 = scalar_select %p33, %s34, %s35
      %p39 = pneg %p33
      %p40 = scmp.eq.s32.totalorder %s24, 1
      %p41 = por %p39, %p40
      %p42 = scmp.ne.s32.totalorder %s34, %s37
      %p43 = scmp.eq.s32.totalorder %s24, 0
      %p44 = por %p42, %p43
      %p45 = scmp.ne.s32.totalorder %s34, %s37
      %p46 = scmp.eq.s32.totalorder %s29, 1
      %p47 = por %p45, %p46
      %p48 = scmp.ne.s32.totalorder %s37, %s38
      %p49 = scmp.eq.s32.totalorder %s29, 0
      %p50 = por %p48, %p49
      %p51 = scmp.ne.s32.totalorder %s37, %s38
      %p52 = scmp.eq.s32.totalorder %s30, 1
      %p53 = por %p51, %p52
      %p55 = scmp.ne.s32.totalorder %s38, %s54
      %p56 = scmp.eq.s32.totalorder %s30, 0
      %p57 = por %p55, %p56
      %s59 = sadd.s32 %s58, 1
      %p62 = scmp.eq.s32.totalorder %s24, 1
      %p63 = scmp.ne.s32.totalorder %s58, %s60
      %p64 = scmp.eq.s32.totalorder %s24, 0
      %p65 = por %p63, %p64
      %p66 = scmp.ne.s32.totalorder %s58, %s60
      %p67 = scmp.eq.s32.totalorder %s29, 1
      %p68 = por %p66, %p67
      %p69 = scmp.ne.s32.totalorder %s60, %s61
      %p70 = scmp.eq.s32.totalorder %s29, 0
      %p71 = por %p69, %p70
      %p72 = scmp.ne.s32.totalorder %s60, %s61
      %p73 = scmp.eq.s32.totalorder %s30, 1
      %p74 = por %p72, %p73
      %p76 = scmp.ne.s32.totalorder %s61, %s75
      %p77 = scmp.eq.s32.totalorder %s30, 0
      %p78 = por %p76, %p77
      %s80 = sadd.s32 %s79, 1
      %p83 = scmp.eq.s32.totalorder %s24, 1
      %p84 = scmp.ne.s32.totalorder %s79, %s81
      %p85 = scmp.eq.s32.totalorder %s24, 0
      %p86 = por %p84, %p85
      %p87 = scmp.ne.s32.totalorder %s79, %s81
      %p88 = scmp.eq.s32.totalorder %s29, 1
      %p89 = por %p87, %p88
      %p90 = scmp.ne.s32.totalorder %s81, %s82
      %p91 = scmp.eq.s32.totalorder %s29, 0
      %p92 = por %p90, %p91
      %p93 = scmp.ne.s32.totalorder %s81, %s82
      %p94 = scmp.eq.s32.totalorder %s30, 1
      %p95 = por %p93, %p94
      %p97 = scmp.ne.s32.totalorder %s82, %s96
      %p98 = scmp.eq.s32.totalorder %s30, 0
      %p99 = por %p97, %p98
      %s101 = sadd.s32 %s100, 1
      %p104 = scmp.eq.s32.totalorder %s24, 1
      %p105 = scmp.ne.s32.totalorder %s100, %s102
      %p106 = scmp.eq.s32.totalorder %s24, 0
      %p107 = por %p105, %p106
      %p108 = scmp.ne.s32.totalorder %s100, %s102
      %p109 = scmp.eq.s32.totalorder %s29, 1
      %p110 = por %p108, %p109
      %p111 = scmp.ne.s32.totalorder %s102, %s103
      %p112 = scmp.eq.s32.totalorder %s29, 0
      %p113 = por %p111, %p112
      %p114 = scmp.ne.s32.totalorder %s102, %s103
      %p115 = scmp.eq.s32.totalorder %s30, 1
      %p116 = por %p114, %p115
      %p118 = scmp.ne.s32.totalorder %s103, %s117
      %p119 = scmp.eq.s32.totalorder %s30, 0
      %p120 = por %p118, %p119
      %s122 = sadd.s32 %s121, 1
      %p125 = scmp.eq.s32.totalorder %s24, 1
      %p126 = scmp.ne.s32.totalorder %s121, %s123
      %p127 = scmp.eq.s32.totalorder %s24, 0
      %p128 = por %p126, %p127
      %p129 = scmp.ne.s32.totalorder %s121, %s123
      %p130 = scmp.eq.s32.totalorder %s29, 1
      %p131 = por %p129, %p130
      %p132 = scmp.ne.s32.totalorder %s123, %s124
      %p133 = scmp.eq.s32.totalorder %s29, 0
      %p134 = por %p132, %p133
      %p135 = scmp.ne.s32.totalorder %s123, %s124
      %p136 = scmp.eq.s32.totalorder %s30, 1
      %p137 = por %p135, %p136
      %p139 = scmp.ne.s32.totalorder %s124, %s138
      %p140 = scmp.eq.s32.totalorder %s30, 0
      %p141 = por %p139, %p140
      %s143 = sadd.s32 %s142, 1
      %p146 = scmp.eq.s32.totalorder %s24, 1
      %p147 = scmp.ne.s32.totalorder %s142, %s144
      %p148 = scmp.eq.s32.totalorder %s24, 0
      %p149 = por %p147, %p148
      %p150 = scmp.ne.s32.totalorder %s142, %s144
      %p151 = scmp.eq.s32.totalorder %s29, 1
      %p152 = por %p150, %p151
      %p153 = scmp.ne.s32.totalorder %s144, %s145
      %p154 = scmp.eq.s32.totalorder %s29, 0
      %p155 = por %p153, %p154
      %p156 = scmp.ne.s32.totalorder %s144, %s145
      %p157 = scmp.eq.s32.totalorder %s30, 1
      %p158 = por %p156, %p157
      %p160 = scmp.ne.s32.totalorder %s145, %s159
      %p161 = scmp.eq.s32.totalorder %s30, 0
      %p162 = por %p160, %p161
      %s164 = sadd.s32 %s163, 1
      %p167 = scmp.eq.s32.totalorder %s24, 1
      %p168 = scmp.ne.s32.totalorder %s163, %s165
      %p169 = scmp.eq.s32.totalorder %s24, 0
      %p170 = por %p168, %p169
      %p171 = scmp.ne.s32.totalorder %s163, %s165
      %p172 = scmp.eq.s32.totalorder %s29, 1
      %p173 = por %p171, %p172
      %p174 = scmp.ne.s32.totalorder %s165, %s166
      %p175 = scmp.eq.s32.totalorder %s29, 0
      %p176 = por %p174, %p175
      %p177 = scmp.ne.s32.totalorder %s165, %s166
      %p178 = scmp.eq.s32.totalorder %s30, 1
      %p179 = por %p177, %p178
      %p181 = scmp.ne.s32.totalorder %s166, %s180
      %p182 = scmp.eq.s32.totalorder %s30, 0
      %p183 = por %p181, %p182
      %s185 = sadd.s32 %s184, 1
      %p188 = scmp.eq.s32.totalorder %s24, 1
      %p189 = scmp.ne.s32.totalorder %s184, %s186
      %p190 = scmp.eq.s32.totalorder %s24, 0
      %p191 = por %p189, %p190
      %p192 = scmp.ne.s32.totalorder %s184, %s186
      %p193 = scmp.eq.s32.totalorder %s29, 1
      %p194 = por %p192, %p193
      %p195 = scmp.ne.s32.totalorder %s186, %s187
      %p196 = scmp.eq.s32.totalorder %s29, 0
      %p197 = por %p195, %p196
      %p198 = scmp.ne.s32.totalorder %s186, %s187
      %p199 = scmp.eq.s32.totalorder %s30, 1
      %p200 = por %p198, %p199
      %p202 = scmp.ne.s32.totalorder %s187, %s201
      %p203 = scmp.eq.s32.totalorder %s30, 0
      %p204 = por %p202, %p203
      %s206 = sadd.s32 %s205, 1
      %p209 = scmp.eq.s32.totalorder %s24, 1
      %p210 = scmp.ne.s32.totalorder %s205, %s207
      %p211 = scmp.eq.s32.totalorder %s24, 0
      %p212 = por %p210, %p211
      %p213 = scmp.ne.s32.totalorder %s205, %s207
      %p214 = scmp.eq.s32.totalorder %s29, 1
      %p215 = por %p213, %p214
      %p216 = scmp.ne.s32.totalorder %s207, %s208
      %p217 = scmp.eq.s32.totalorder %s29, 0
      %p218 = por %p216, %p217
      %p219 = scmp.ne.s32.totalorder %s207, %s208
      %p220 = scmp.eq.s32.totalorder %s30, 1
      %p221 = por %p219, %p220
      %p223 = scmp.ne.s32.totalorder %s208, %s222
      %p224 = scmp.eq.s32.totalorder %s30, 0
      %p225 = por %p223, %p224
      %s227 = sadd.s32 %s226, 1
      %p230 = scmp.eq.s32.totalorder %s24, 1
      %p231 = scmp.ne.s32.totalorder %s226, %s228
      %p232 = scmp.eq.s32.totalorder %s24, 0
      %p233 = por %p231, %p232
      %p234 = scmp.ne.s32.totalorder %s226, %s228
      %p235 = scmp.eq.s32.totalorder %s29, 1
      %p236 = por %p234, %p235
      %p237 = scmp.ne.s32.totalorder %s228, %s229
      %p238 = scmp.eq.s32.totalorder %s29, 0
      %p239 = por %p237, %p238
      %p240 = scmp.ne.s32.totalorder %s228, %s229
      %p241 = scmp.eq.s32.totalorder %s30, 1
      %p242 = por %p240, %p241
      %p244 = scmp.ne.s32.totalorder %s229, %s243
      %p245 = scmp.eq.s32.totalorder %s30, 0
      %p246 = por %p244, %p245
      %s248 = sadd.s32 %s247, 1
      %p251 = scmp.eq.s32.totalorder %s24, 1
      %p252 = scmp.ne.s32.totalorder %s247, %s249
      %p253 = scmp.eq.s32.totalorder %s24, 0
      %p254 = por %p252, %p253
      %p255 = scmp.ne.s32.totalorder %s247, %s249
      %p256 = scmp.eq.s32.totalorder %s29, 1
      %p257 = por %p255, %p256
      %p258 = scmp.ne.s32.totalorder %s249, %s250
      %p259 = scmp.eq.s32.totalorder %s29, 0
      %p260 = por %p258, %p259
      %p261 = scmp.ne.s32.totalorder %s249, %s250
      %p262 = scmp.eq.s32.totalorder %s30, 1
      %p263 = por %p261, %p262
      %p265 = scmp.ne.s32.totalorder %s250, %s264
      %p266 = scmp.eq.s32.totalorder %s30, 0
      %p267 = por %p265, %p266
      %s269 = sadd.s32 %s268, 1
      %p272 = scmp.eq.s32.totalorder %s24, 1
      %p273 = scmp.ne.s32.totalorder %s268, %s270
      %p274 = scmp.eq.s32.totalorder %s24, 0
      %p275 = por %p273, %p274
      %p276 = scmp.ne.s32.totalorder %s268, %s270
      %p277 = scmp.eq.s32.totalorder %s29, 1
      %p278 = por %p276, %p277
      %p279 = scmp.ne.s32.totalorder %s270, %s271
      %p280 = scmp.eq.s32.totalorder %s29, 0
      %p281 = por %p279, %p280
      %p282 = scmp.ne.s32.totalorder %s270, %s271
      %p283 = scmp.eq.s32.totalorder %s30, 1
      %p284 = por %p282, %p283
      %p286 = scmp.ne.s32.totalorder %s271, %s285
      %p287 = scmp.eq.s32.totalorder %s30, 0
      %p288 = por %p286, %p287
      %s290 = sadd.s32 %s289, 1
      %p293 = scmp.eq.s32.totalorder %s24, 1
      %p294 = scmp.ne.s32.totalorder %s289, %s291
      %p295 = scmp.eq.s32.totalorder %s24, 0
      %p296 = por %p294, %p295
      %p297 = scmp.ne.s32.totalorder %s289, %s291
      %p298 = scmp.eq.s32.totalorder %s29, 1
      %p299 = por %p297, %p298
      %p300 = scmp.ne.s32.totalorder %s291, %s292
      %p301 = scmp.eq.s32.totalorder %s29, 0
      %p302 = por %p300, %p301
      %p303 = scmp.ne.s32.totalorder %s291, %s292
      %p304 = scmp.eq.s32.totalorder %s30, 1
      %p305 = por %p303, %p304
      %p307 = scmp.ne.s32.totalorder %s292, %s306
      %p308 = scmp.eq.s32.totalorder %s30, 0
      %p309 = por %p307, %p308
      %s310 = ssub.s32 %s24, %s31
      %p311 = scmp.eq.s32.totalorder %s310, 0
      %s313 = sadd.s32 %s312, 1
      %s314 = scalar_select %p311, %s312, %s313
      %p317 = pneg %p311
      %p318 = scmp.eq.s32.totalorder %s24, 1
      %p319 = por %p317, %p318
      %p320 = scmp.ne.s32.totalorder %s312, %s315
      %p321 = scmp.eq.s32.totalorder %s24, 0
      %p322 = por %p320, %p321
      %p323 = scmp.ne.s32.totalorder %s312, %s315
      %p324 = scmp.eq.s32.totalorder %s29, 1
      %p325 = por %p323, %p324
      %p326 = scmp.ne.s32.totalorder %s315, %s316
      %p327 = scmp.eq.s32.totalorder %s29, 0
      %p328 = por %p326, %p327
      %p329 = scmp.ne.s32.totalorder %s315, %s316
      %p330 = scmp.eq.s32.totalorder %s30, 1
      %p331 = por %p329, %p330
      %p333 = scmp.ne.s32.totalorder %s316, %s332
      %p334 = scmp.eq.s32.totalorder %s30, 0
      %p335 = por %p333, %p334
      %p336 = scmp.le.s32.totalorder 1, %s24
      %p337 = scmp.lt.s32.totalorder %s24, 3
      %p338 = pnand %p336, %p337
      %p339 = pneg %p338
      // Predicated region
      $region9: #{tpu_custom_call.1} parent=5 // pred_check
        _
      $region10: #{tpu_custom_call.1} parent=5 // pred_check_branch
        %341 = sbr.rel (%p338) target = $region12
      $region11: #{tpu_custom_call.1} parent=5 // pred_region
        %s342 = ssub.s32 %s24, 1
        // Predicated region
        $region13: #{tpu_custom_call.1} parent=11 // pred_check
          %p343 = pneg %p71
        $region14: #{tpu_custom_call.1} parent=11 // pred_check_branch
          %345 = sbr.rel (%p343) target = $region16
        $region15: #{tpu_custom_call.1} parent=11 // pred_region
          _
        $region16: #{tpu_custom_call.1} parent=11 // pred_fallthru
          _
        // Predicated region
        $region17: #{tpu_custom_call.1} parent=11 // pred_check
          %p346 = pneg %p92
        $region18: #{tpu_custom_call.1} parent=11 // pred_check_branch
          %348 = sbr.rel (%p346) target = $region20
        $region19: #{tpu_custom_call.1} parent=11 // pred_region
          _
        $region20: #{tpu_custom_call.1} parent=11 // pred_fallthru
          _
        // Predicated region
        $region21: #{tpu_custom_call.1} parent=11 // pred_check
          %p349 = pneg %p113
        $region22: #{tpu_custom_call.1} parent=11 // pred_check_branch
          %351 = sbr.rel (%p349) target = $region24
        $region23: #{tpu_custom_call.1} parent=11 // pred_region
          _
        $region24: #{tpu_custom_call.1} parent=11 // pred_fallthru
          _
        // Predicated region
        $region25: #{tpu_custom_call.1} parent=11 // pred_check
          %p352 = pneg %p134
        $region26: #{tpu_custom_call.1} parent=11 // pred_check_branch
          %354 = sbr.rel (%p352) target = $region28
        $region27: #{tpu_custom_call.1} parent=11 // pred_region
          _
        $region28: #{tpu_custom_call.1} parent=11 // pred_fallthru
          _
        // Predicated region
        $region29: #{tpu_custom_call.1} parent=11 // pred_check
          %p355 = pneg %p155
        $region30: #{tpu_custom_call.1} parent=11 // pred_check_branch
          %357 = sbr.rel (%p355) target = $region32
        $region31: #{tpu_custom_call.1} parent=11 // pred_region
          _
        $region32: #{tpu_custom_call.1} parent=11 // pred_fallthru
          _
        // Predicated region
        $region33: #{tpu_custom_call.1} parent=11 // pred_check
          %p358 = pneg %p176
        $region34: #{tpu_custom_call.1} parent=11 // pred_check_branch
          %360 = sbr.rel (%p358) target = $region36
        $region35: #{tpu_custom_call.1} parent=11 // pred_region
          _
        $region36: #{tpu_custom_call.1} parent=11 // pred_fallthru
          _
        // Predicated region
        $region37: #{tpu_custom_call.1} parent=11 // pred_check
          %p361 = pneg %p197
        $region38: #{tpu_custom_call.1} parent=11 // pred_check_branch
          %363 = sbr.rel (%p361) target = $region40
        $region39: #{tpu_custom_call.1} parent=11 // pred_region
          _
        $region40: #{tpu_custom_call.1} parent=11 // pred_fallthru
          _
        // Predicated region
        $region41: #{tpu_custom_call.1} parent=11 // pred_check
          %p364 = pneg %p218
        $region42: #{tpu_custom_call.1} parent=11 // pred_check_branch
          %366 = sbr.rel (%p364) target = $region44
        $region43: #{tpu_custom_call.1} parent=11 // pred_region
          _
        $region44: #{tpu_custom_call.1} parent=11 // pred_fallthru
          _
        // Predicated region
        $region45: #{tpu_custom_call.1} parent=11 // pred_check
          %p367 = pneg %p239
        $region46: #{tpu_custom_call.1} parent=11 // pred_check_branch
          %369 = sbr.rel (%p367) target = $region48
        $region47: #{tpu_custom_call.1} parent=11 // pred_region
          _
        $region48: #{tpu_custom_call.1} parent=11 // pred_fallthru
          _
        // Predicated region
        $region49: #{tpu_custom_call.1} parent=11 // pred_check
          %p370 = pneg %p260
        $region50: #{tpu_custom_call.1} parent=11 // pred_check_branch
          %372 = sbr.rel (%p370) target = $region52
        $region51: #{tpu_custom_call.1} parent=11 // pred_region
          _
        $region52: #{tpu_custom_call.1} parent=11 // pred_fallthru
          _
        // Predicated region
        $region53: #{tpu_custom_call.1} parent=11 // pred_check
          %p373 = pneg %p281
        $region54: #{tpu_custom_call.1} parent=11 // pred_check_branch
          %375 = sbr.rel (%p373) target = $region56
        $region55: #{tpu_custom_call.1} parent=11 // pred_region
          _
        $region56: #{tpu_custom_call.1} parent=11 // pred_fallthru
          _
        // Predicated region
        $region57: #{tpu_custom_call.1} parent=11 // pred_check
          %p376 = pneg %p302
        $region58: #{tpu_custom_call.1} parent=11 // pred_check_branch
          %378 = sbr.rel (%p376) target = $region60
        $region59: #{tpu_custom_call.1} parent=11 // pred_region
          _
        $region60: #{tpu_custom_call.1} parent=11 // pred_fallthru
          _
      $region12: #{tpu_custom_call.1} parent=5 // pred_fallthru
        _
      %p379 = scmp.lt.s32.totalorder %s24, 2
      // Predicated region
      $region61: #{tpu_custom_call.1} parent=5 // pred_check
        %p380 = pneg %p379
      $region62: #{tpu_custom_call.1} parent=5 // pred_check_branch
        %382 = sbr.rel (%p380) target = $region64
      $region63: #{tpu_custom_call.1} parent=5 // pred_region
        // Predicated region
        $region65: #{tpu_custom_call.1} parent=63 // pred_check
          %p383 = pneg %p44
        $region66: #{tpu_custom_call.1} parent=63 // pred_check_branch
          %385 = sbr.rel (%p383) target = $region68
        $region67: #{tpu_custom_call.1} parent=63 // pred_region
          %s386 = smul.u32 128, %s24
          %p387 = scmp.lt.s32.totalorder %s386, 255
          %s388 = scalar_select %p387, %s386, 255
          %s389 = smul.addr %s388, 8
          %s390 = scalar_lea.vmem %s0, %s389
          %s391 = smul.u32 128, %s24
        $region68: #{tpu_custom_call.1} parent=63 // pred_fallthru
          _
      $region64: #{tpu_custom_call.1} parent=5 // pred_fallthru
        _
      %p392 = scmp.le.s32.totalorder 1, %s24
      %p393 = scmp.lt.s32.totalorder %s24, 3
      %p394 = pnand %p392, %p393
      %p395 = pneg %p394
      // Predicated region
      $region69: #{tpu_custom_call.1} parent=5 // pred_check
        _
      $region70: #{tpu_custom_call.1} parent=5 // pred_check_branch
        %397 = sbr.rel (%p394) target = $region72
      $region71: #{tpu_custom_call.1} parent=5 // pred_region
        %s398 = ssub.s32 %s24, 1
        %s399 = smul.u32 128, %s29
        %p400 = scmp.lt.s32.totalorder %s399, 255
        %s401 = scalar_select %p400, %s399, 255
        %s402 = smul.addr %s401, 8
        %s403 = scalar_lea.vmem %s0, %s402
        %p404 = pneg %p50
        %p405 = pneg %p47
        %p406 = pneg %p71
        %p407 = pneg %p68
        %p408 = pneg %p92
        %p409 = pneg %p89
        %p410 = pneg %p113
        %p411 = pneg %p110
        %p412 = pneg %p134
        %p413 = pneg %p131
        %p414 = pneg %p155
        %p415 = pneg %p152
        %p416 = pneg %p176
        %p417 = pneg %p173
        %p418 = pneg %p197
        %p419 = pneg %p194
        %p420 = pneg %p218
        %p421 = pneg %p215
        %p422 = pneg %p239
        %p423 = pneg %p236
        %p424 = pneg %p260
        %p425 = pneg %p257
        %p426 = pneg %p281
        %p427 = pneg %p278
        %p428 = pneg %p302
        %p429 = pneg %p299
        %p430 = pneg %p328
        %p431 = pneg %p325
        %s432 = sand.u32 %s315, 1
        %s433 = scalar_lea.sflag [#allocation4], %s432
        %s434 = sand.u32 %s315, 1
        %s435 = smul.addr %s434, 8
        %s436 = scalar_lea.vmem [#allocation3], %s435
        %s437 = smul.u32 128, %s29
        %p438 = scmp.lt.s32.totalorder %s437, 255
        %s439 = scalar_select %p438, %s437, 255
        %s440 = smul.addr %s439, 8
        %s441 = scalar_lea.vmem %s0, %s440
        %s442 = smul.u32 128, %s29
        %s443 = smul.u32 8, %s29
        %v445 = vld [vmem:[%s441] sm:$0xff]
        %v446 = vld [vmem:[%s441 + $0x8] sm:$0xff]
        %v447 = vld [vmem:[%s441 + $0x10] sm:$0xff]
        %v448 = vld [vmem:[%s441 + $0x18] sm:$0xff]
        %v449 = vld [vmem:[%s441 + $0x20] sm:$0xff]
        %v450 = vld [vmem:[%s441 + $0x28] sm:$0xff]
        %v451 = vld [vmem:[%s441 + $0x30] sm:$0xff]
        %v452 = vld [vmem:[%s441 + $0x38] sm:$0xff]
        %v453 = vld [vmem:[%s441 + $0x40] sm:$0xff]
        %v454 = vld [vmem:[%s441 + $0x48] sm:$0xff]
        %v455 = vld [vmem:[%s441 + $0x50] sm:$0xff]
        %v456 = vld [vmem:[%s441 + $0x58] sm:$0xff]
        %v457 = vld [vmem:[%s441 + $0x60] sm:$0xff]
        %v458 = vld [vmem:[%s441 + $0x68] sm:$0xff]
        %v459 = vld [vmem:[%s441 + $0x70] sm:$0xff]
        %v460 = vld [vmem:[%s441 + $0x78] sm:$0xff]
        %v461 = vld [vmem:[%s441 + $0x80] sm:$0xff]
        %v462 = vld [vmem:[%s441 + $0x88] sm:$0xff]
        %v463 = vld [vmem:[%s441 + $0x90] sm:$0xff]
        %v464 = vld [vmem:[%s441 + $0x98] sm:$0xff]
        %v465 = vld [vmem:[%s441 + $0xa0] sm:$0xff]
        %v466 = vld [vmem:[%s441 + $0xa8] sm:$0xff]
        %v467 = vld [vmem:[%s441 + $0xb0] sm:$0xff]
        %v468 = vld [vmem:[%s441 + $0xb8] sm:$0xff]
        %v469 = vld [vmem:[%s441 + $0xc0] sm:$0xff]
        %v470 = vld [vmem:[%s441 + $0xc8] sm:$0xff]
        %v471 = vld [vmem:[%s441 + $0xd0] sm:$0xff]
        %v472 = vld [vmem:[%s441 + $0xd8] sm:$0xff]
        %v473 = vld [vmem:[%s441 + $0xe0] sm:$0xff]
        %v474 = vld [vmem:[%s441 + $0xe8] sm:$0xff]
        %v475 = vld [vmem:[%s441 + $0xf0] sm:$0xff]
        %v476 = vld [vmem:[%s441 + $0xf8] sm:$0xff]
        %v477 = vld [vmem:[%s441 + $0x100] sm:$0xff]
        %v478 = vld [vmem:[%s441 + $0x108] sm:$0xff]
        %v479 = vld [vmem:[%s441 + $0x110] sm:$0xff]
        %v480 = vld [vmem:[%s441 + $0x118] sm:$0xff]
        %v481 = vld [vmem:[%s441 + $0x120] sm:$0xff]
        %v482 = vld [vmem:[%s441 + $0x128] sm:$0xff]
        %v483 = vld [vmem:[%s441 + $0x130] sm:$0xff]
        %v484 = vld [vmem:[%s441 + $0x138] sm:$0xff]
        %v485 = vld [vmem:[%s441 + $0x140] sm:$0xff]
        %v486 = vld [vmem:[%s441 + $0x148] sm:$0xff]
        %v487 = vld [vmem:[%s441 + $0x150] sm:$0xff]
        %v488 = vld [vmem:[%s441 + $0x158] sm:$0xff]
        %v489 = vld [vmem:[%s441 + $0x160] sm:$0xff]
        %v490 = vld [vmem:[%s441 + $0x168] sm:$0xff]
        %v491 = vld [vmem:[%s441 + $0x170] sm:$0xff]
        %v492 = vld [vmem:[%s441 + $0x178] sm:$0xff]
        %v493 = vld [vmem:[%s441 + $0x180] sm:$0xff]
        %v494 = vld [vmem:[%s441 + $0x188] sm:$0xff]
        %v495 = vld [vmem:[%s441 + $0x190] sm:$0xff]
        %v496 = vld [vmem:[%s441 + $0x198] sm:$0xff]
        %v497 = vld [vmem:[%s441 + $0x1a0] sm:$0xff]
        %v498 = vld [vmem:[%s441 + $0x1a8] sm:$0xff]
        %v499 = vld [vmem:[%s441 + $0x1b0] sm:$0xff]
        %v500 = vld [vmem:[%s441 + $0x1b8] sm:$0xff]
        %v501 = vld [vmem:[%s441 + $0x1c0] sm:$0xff]
        %v502 = vld [vmem:[%s441 + $0x1c8] sm:$0xff]
        %v503 = vld [vmem:[%s441 + $0x1d0] sm:$0xff]
        %v504 = vld [vmem:[%s441 + $0x1d8] sm:$0xff]
        %v505 = vld [vmem:[%s441 + $0x1e0] sm:$0xff]
        %v506 = vld [vmem:[%s441 + $0x1e8] sm:$0xff]
        %v507 = vld [vmem:[%s441 + $0x1f0] sm:$0xff]
        %v508 = vld [vmem:[%s441 + $0x1f8] sm:$0xff]
        %v509 = vld [vmem:[%s441 + $0x200] sm:$0xff]
        %v510 = vld [vmem:[%s441 + $0x208] sm:$0xff]
        %v511 = vld [vmem:[%s441 + $0x210] sm:$0xff]
        %v512 = vld [vmem:[%s441 + $0x218] sm:$0xff]
        %v513 = vld [vmem:[%s441 + $0x220] sm:$0xff]
        %v514 = vld [vmem:[%s441 + $0x228] sm:$0xff]
        %v515 = vld [vmem:[%s441 + $0x230] sm:$0xff]
        %v516 = vld [vmem:[%s441 + $0x238] sm:$0xff]
        %v517 = vld [vmem:[%s441 + $0x240] sm:$0xff]
        %v518 = vld [vmem:[%s441 + $0x248] sm:$0xff]
        %v519 = vld [vmem:[%s441 + $0x250] sm:$0xff]
        %v520 = vld [vmem:[%s441 + $0x258] sm:$0xff]
        %v521 = vld [vmem:[%s441 + $0x260] sm:$0xff]
        %v522 = vld [vmem:[%s441 + $0x268] sm:$0xff]
        %v523 = vld [vmem:[%s441 + $0x270] sm:$0xff]
        %v524 = vld [vmem:[%s441 + $0x278] sm:$0xff]
        %v525 = vld [vmem:[%s441 + $0x280] sm:$0xff]
        %v526 = vld [vmem:[%s441 + $0x288] sm:$0xff]
        %v527 = vld [vmem:[%s441 + $0x290] sm:$0xff]
        %v528 = vld [vmem:[%s441 + $0x298] sm:$0xff]
        %v529 = vld [vmem:[%s441 + $0x2a0] sm:$0xff]
        %v530 = vld [vmem:[%s441 + $0x2a8] sm:$0xff]
        %v531 = vld [vmem:[%s441 + $0x2b0] sm:$0xff]
        %v532 = vld [vmem:[%s441 + $0x2b8] sm:$0xff]
        %v533 = vld [vmem:[%s441 + $0x2c0] sm:$0xff]
        %v534 = vld [vmem:[%s441 + $0x2c8] sm:$0xff]
        %v535 = vld [vmem:[%s441 + $0x2d0] sm:$0xff]
        %v536 = vld [vmem:[%s441 + $0x2d8] sm:$0xff]
        %v537 = vld [vmem:[%s441 + $0x2e0] sm:$0xff]
        %v538 = vld [vmem:[%s441 + $0x2e8] sm:$0xff]
        %v539 = vld [vmem:[%s441 + $0x2f0] sm:$0xff]
        %v540 = vld [vmem:[%s441 + $0x2f8] sm:$0xff]
        %v541 = vld [vmem:[%s441 + $0x300] sm:$0xff]
        %v542 = vld [vmem:[%s441 + $0x308] sm:$0xff]
        %v543 = vld [vmem:[%s441 + $0x310] sm:$0xff]
        %v544 = vld [vmem:[%s441 + $0x318] sm:$0xff]
        %v545 = vld [vmem:[%s441 + $0x320] sm:$0xff]
        %v546 = vld [vmem:[%s441 + $0x328] sm:$0xff]
        %v547 = vld [vmem:[%s441 + $0x330] sm:$0xff]
        %v548 = vld [vmem:[%s441 + $0x338] sm:$0xff]
        %v549 = vld [vmem:[%s441 + $0x340] sm:$0xff]
        %v550 = vld [vmem:[%s441 + $0x348] sm:$0xff]
        %v551 = vld [vmem:[%s441 + $0x350] sm:$0xff]
        %v552 = vld [vmem:[%s441 + $0x358] sm:$0xff]
        %v553 = vld [vmem:[%s441 + $0x360] sm:$0xff]
        %v554 = vld [vmem:[%s441 + $0x368] sm:$0xff]
        %v555 = vld [vmem:[%s441 + $0x370] sm:$0xff]
        %v556 = vld [vmem:[%s441 + $0x378] sm:$0xff]
        %v557 = vld [vmem:[%s441 + $0x380] sm:$0xff]
        %v558 = vld [vmem:[%s441 + $0x388] sm:$0xff]
        %v559 = vld [vmem:[%s441 + $0x390] sm:$0xff]
        %v560 = vld [vmem:[%s441 + $0x398] sm:$0xff]
        %v561 = vld [vmem:[%s441 + $0x3a0] sm:$0xff]
        %v562 = vld [vmem:[%s441 + $0x3a8] sm:$0xff]
        %v563 = vld [vmem:[%s441 + $0x3b0] sm:$0xff]
        %v564 = vld [vmem:[%s441 + $0x3b8] sm:$0xff]
        %v565 = vld [vmem:[%s441 + $0x3c0] sm:$0xff]
        %v566 = vld [vmem:[%s441 + $0x3c8] sm:$0xff]
        %v567 = vld [vmem:[%s441 + $0x3d0] sm:$0xff]
        %v568 = vld [vmem:[%s441 + $0x3d8] sm:$0xff]
        %v569 = vld [vmem:[%s441 + $0x3e0] sm:$0xff]
        %v570 = vld [vmem:[%s441 + $0x3e8] sm:$0xff]
        %v571 = vld [vmem:[%s441 + $0x3f0] sm:$0xff]
        %v572 = vld [vmem:[%s441 + $0x3f8] sm:$0xff]
        %v573 = vpack.c.bf16 %v446, %v445
        %v574 = vpack.c.bf16 %v448, %v447
        %v575 = vpack.c.bf16 %v450, %v449
        %v576 = vpack.c.bf16 %v452, %v451
        %v577 = vpack.c.bf16 %v454, %v453
        %v578 = vpack.c.bf16 %v456, %v455
        %v579 = vpack.c.bf16 %v458, %v457
        %v580 = vpack.c.bf16 %v460, %v459
        %v581 = vpack.c.bf16 %v462, %v461
        %v582 = vpack.c.bf16 %v464, %v463
        %v583 = vpack.c.bf16 %v466, %v465
        %v584 = vpack.c.bf16 %v468, %v467
        %v585 = vpack.c.bf16 %v470, %v469
        %v586 = vpack.c.bf16 %v472, %v471
        %v587 = vpack.c.bf16 %v474, %v473
        %v588 = vpack.c.bf16 %v476, %v475
        %v589 = vpack.c.bf16 %v478, %v477
        %v590 = vpack.c.bf16 %v480, %v479
        %v591 = vpack.c.bf16 %v482, %v481
        %v592 = vpack.c.bf16 %v484, %v483
        %v593 = vpack.c.bf16 %v486, %v485
        %v594 = vpack.c.bf16 %v488, %v487
        %v595 = vpack.c.bf16 %v490, %v489
        %v596 = vpack.c.bf16 %v492, %v491
        %v597 = vpack.c.bf16 %v494, %v493
        %v598 = vpack.c.bf16 %v496, %v495
        %v599 = vpack.c.bf16 %v498, %v497
        %v600 = vpack.c.bf16 %v500, %v499
        %v601 = vpack.c.bf16 %v502, %v501
        %v602 = vpack.c.bf16 %v504, %v503
        %v603 = vpack.c.bf16 %v506, %v505
        %v604 = vpack.c.bf16 %v508, %v507
        %v605 = vpack.c.bf16 %v510, %v509
        %v606 = vpack.c.bf16 %v512, %v511
        %v607 = vpack.c.bf16 %v514, %v513
        %v608 = vpack.c.bf16 %v516, %v515
        %v609 = vpack.c.bf16 %v518, %v517
        %v610 = vpack.c.bf16 %v520, %v519
        %v611 = vpack.c.bf16 %v522, %v521
        %v612 = vpack.c.bf16 %v524, %v523
        %v613 = vpack.c.bf16 %v526, %v525
        %v614 = vpack.c.bf16 %v528, %v527
        %v615 = vpack.c.bf16 %v530, %v529
        %v616 = vpack.c.bf16 %v532, %v531
        %v617 = vpack.c.bf16 %v534, %v533
        %v618 = vpack.c.bf16 %v536, %v535
        %v619 = vpack.c.bf16 %v538, %v537
        %v620 = vpack.c.bf16 %v540, %v539
        %v621 = vpack.c.bf16 %v542, %v541
        %v622 = vpack.c.bf16 %v544, %v543
        %v623 = vpack.c.bf16 %v546, %v545
        %v624 = vpack.c.bf16 %v548, %v547
        %v625 = vpack.c.bf16 %v550, %v549
        %v626 = vpack.c.bf16 %v552, %v551
        %v627 = vpack.c.bf16 %v554, %v553
        %v628 = vpack.c.bf16 %v556, %v555
        %v629 = vpack.c.bf16 %v558, %v557
        %v630 = vpack.c.bf16 %v560, %v559
        %v631 = vpack.c.bf16 %v562, %v561
        %v632 = vpack.c.bf16 %v564, %v563
        %v633 = vpack.c.bf16 %v566, %v565
        %v634 = vpack.c.bf16 %v568, %v567
        %v635 = vpack.c.bf16 %v570, %v569
        %v636 = vpack.c.bf16 %v572, %v571
        %v637 = vld [vmem:[%s1] sm:$0xf]
        %v638 = vld [vmem:[%s1 + $0x4] sm:$0xf]
        %v639 = vld [vmem:[%s2] sm:$0xff]
        %v640 = vld [vmem:[%s2 + $0x8] sm:$0xff]
        %642 = vset.pattern.permute.xlu0 0
        %643 = vperm.xlu0 %642, %v639
        %v644 = vpop.permute.xlu0 %643
        %647 = vset.pattern.permute.xlu0 0
        %648 = vperm.xlu0 %647, %v640
        %v649 = vpop.permute.xlu0 %648
        %v653 = vunpack.c.l.b16 %v637
        %v654 = vunpack.c.l.b16 %v638
        %v655 = vpack.c.b16 %v654, %v653
        %vm656 = vcmask 261120
        %v658 = vsel %vm656, %v655, 0
        %v661 = vsel %vm656, %v573, 0
        %v664 = vsel %vm656, %v574, 0
        %v667 = vsel %vm656, %v575, 0
        %v670 = vsel %vm656, %v576, 0
        %v673 = vsel %vm656, %v577, 0
        %v676 = vsel %vm656, %v578, 0
        %v679 = vsel %vm656, %v579, 0
        %v682 = vsel %vm656, %v580, 0
        %v685 = vsel %vm656, %v581, 0
        %v688 = vsel %vm656, %v582, 0
        %v691 = vsel %vm656, %v583, 0
        %v694 = vsel %vm656, %v584, 0
        %v697 = vsel %vm656, %v585, 0
        %v700 = vsel %vm656, %v586, 0
        %v703 = vsel %vm656, %v587, 0
        %v706 = vsel %vm656, %v588, 0
        %v709 = vsel %vm656, %v589, 0
        %v712 = vsel %vm656, %v590, 0
        %v715 = vsel %vm656, %v591, 0
        %v718 = vsel %vm656, %v592, 0
        %v721 = vsel %vm656, %v593, 0
        %v724 = vsel %vm656, %v594, 0
        %v727 = vsel %vm656, %v595, 0
        %v730 = vsel %vm656, %v596, 0
        %v733 = vsel %vm656, %v597, 0
        %v736 = vsel %vm656, %v598, 0
        %v739 = vsel %vm656, %v599, 0
        %v742 = vsel %vm656, %v600, 0
        %v745 = vsel %vm656, %v601, 0
        %v748 = vsel %vm656, %v602, 0
        %v751 = vsel %vm656, %v603, 0
        %v754 = vsel %vm656, %v604, 0
        %v757 = vsel %vm656, %v605, 0
        %v760 = vsel %vm656, %v606, 0
        %v763 = vsel %vm656, %v607, 0
        %v766 = vsel %vm656, %v608, 0
        %v769 = vsel %vm656, %v609, 0
        %v772 = vsel %vm656, %v610, 0
        %v775 = vsel %vm656, %v611, 0
        %v778 = vsel %vm656, %v612, 0
        %v781 = vsel %vm656, %v613, 0
        %v784 = vsel %vm656, %v614, 0
        %v787 = vsel %vm656, %v615, 0
        %v790 = vsel %vm656, %v616, 0
        %v793 = vsel %vm656, %v617, 0
        %v796 = vsel %vm656, %v618, 0
        %v799 = vsel %vm656, %v619, 0
        %v802 = vsel %vm656, %v620, 0
        %v805 = vsel %vm656, %v621, 0
        %v808 = vsel %vm656, %v622, 0
        %v811 = vsel %vm656, %v623, 0
        %v814 = vsel %vm656, %v624, 0
        %v817 = vsel %vm656, %v625, 0
        %v820 = vsel %vm656, %v626, 0
        %v823 = vsel %vm656, %v627, 0
        %v826 = vsel %vm656, %v628, 0
        %v829 = vsel %vm656, %v629, 0
        %v832 = vsel %vm656, %v630, 0
        %v835 = vsel %vm656, %v631, 0
        %v838 = vsel %vm656, %v632, 0
        %v841 = vsel %vm656, %v633, 0
        %v844 = vsel %vm656, %v634, 0
        %v847 = vsel %vm656, %v635, 0
        %v850 = vsel %vm656, %v636, 0
        %852 = vmatpush.bf16.xpose.msra.mxu0 %v682
        %853 = vmatpush.bf16.xpose.msra.mxu0 %v679
        %854 = vmatpush.bf16.xpose.msra.mxu0 %v676
        %855 = vmatpush.bf16.xpose.msra.mxu0 %v673
        %856 = vmatpush.bf16.xpose.msra.mxu0 %v670
        %857 = vmatpush.bf16.xpose.msra.mxu0 %v667
        %858 = vmatpush.bf16.xpose.msra.mxu0 %v664
        %859 = vmatpush.bf16.xpose.msra.mxu0 %v661
        %860 = vmatmul.bf16.gmra.mxu0 %v658
        %v861 = vpop.f32.mrf.mxu0
        %v862 = vadd.f32 %v644, %v861
        %v863 = vpop.f32.mrf.mxu0
        %v864 = vadd.f32 %v649, %v863
        %865 = vdwg.mxu0
        %866 = vmatpush.bf16.xpose.msra.mxu0 %v706
        %867 = vmatpush.bf16.xpose.msra.mxu0 %v703
        %868 = vmatpush.bf16.xpose.msra.mxu0 %v700
        %869 = vmatpush.bf16.xpose.msra.mxu0 %v697
        %870 = vmatpush.bf16.xpose.msra.mxu0 %v694
        %871 = vmatpush.bf16.xpose.msra.mxu0 %v691
        %872 = vmatpush.bf16.xpose.msra.mxu0 %v688
        %873 = vmatpush.bf16.xpose.msra.mxu0 %v685
        %874 = vmatmul.bf16.gmra.mxu0 %v658
        %v875 = vpop.f32.mrf.mxu0
        %v876 = vadd.f32 %v644, %v875
        %v877 = vpop.f32.mrf.mxu0
        %v878 = vadd.f32 %v649, %v877
        %879 = vdwg.mxu0
        %880 = vmatpush.bf16.xpose.msra.mxu0 %v730
        %881 = vmatpush.bf16.xpose.msra.mxu0 %v727
        %882 = vmatpush.bf16.xpose.msra.mxu0 %v724
        %883 = vmatpush.bf16.xpose.msra.mxu0 %v721
        %884 = vmatpush.bf16.xpose.msra.mxu0 %v718
        %885 = vmatpush.bf16.xpose.msra.mxu0 %v715
        %886 = vmatpush.bf16.xpose.msra.mxu0 %v712
        %887 = vmatpush.bf16.xpose.msra.mxu0 %v709
        %888 = vmatmul.bf16.gmra.mxu0 %v658
        %v889 = vpop.f32.mrf.mxu0
        %v890 = vadd.f32 %v644, %v889
        %v891 = vpop.f32.mrf.mxu0
        %v892 = vadd.f32 %v649, %v891
        %893 = vdwg.mxu0
        %894 = vmatpush.bf16.xpose.msra.mxu0 %v754
        %895 = vmatpush.bf16.xpose.msra.mxu0 %v751
        %896 = vmatpush.bf16.xpose.msra.mxu0 %v748
        %897 = vmatpush.bf16.xpose.msra.mxu0 %v745
        %898 = vmatpush.bf16.xpose.msra.mxu0 %v742
        %899 = vmatpush.bf16.xpose.msra.mxu0 %v739
        %900 = vmatpush.bf16.xpose.msra.mxu0 %v736
        %901 = vmatpush.bf16.xpose.msra.mxu0 %v733
        %902 = vmatmul.bf16.gmra.mxu0 %v658
        %v903 = vpop.f32.mrf.mxu0
        %v904 = vadd.f32 %v644, %v903
        %v905 = vpop.f32.mrf.mxu0
        %v906 = vadd.f32 %v649, %v905
        %907 = vdwg.mxu0
        %908 = vmatpush.bf16.xpose.msra.mxu0 %v778
        %909 = vmatpush.bf16.xpose.msra.mxu0 %v775
        %910 = vmatpush.bf16.xpose.msra.mxu0 %v772
        %911 = vmatpush.bf16.xpose.msra.mxu0 %v769
        %912 = vmatpush.bf16.xpose.msra.mxu0 %v766
        %913 = vmatpush.bf16.xpose.msra.mxu0 %v763
        %914 = vmatpush.bf16.xpose.msra.mxu0 %v760
        %915 = vmatpush.bf16.xpose.msra.mxu0 %v757
        %916 = vmatmul.bf16.gmra.mxu0 %v658
        %v917 = vpop.f32.mrf.mxu0
        %v918 = vadd.f32 %v644, %v917
        %v919 = vpop.f32.mrf.mxu0
        %v920 = vadd.f32 %v649, %v919
        %921 = vdwg.mxu0
        %922 = vmatpush.bf16.xpose.msra.mxu0 %v802
        %923 = vmatpush.bf16.xpose.msra.mxu0 %v799
        %924 = vmatpush.bf16.xpose.msra.mxu0 %v796
        %925 = vmatpush.bf16.xpose.msra.mxu0 %v793
        %926 = vmatpush.bf16.xpose.msra.mxu0 %v790
        %927 = vmatpush.bf16.xpose.msra.mxu0 %v787
        %928 = vmatpush.bf16.xpose.msra.mxu0 %v784
        %929 = vmatpush.bf16.xpose.msra.mxu0 %v781
        %930 = vmatmul.bf16.gmra.mxu0 %v658
        %v931 = vpop.f32.mrf.mxu0
        %v932 = vadd.f32 %v644, %v931
        %v933 = vpop.f32.mrf.mxu0
        %v934 = vadd.f32 %v649, %v933
        %935 = vdwg.mxu0
        %936 = vmatpush.bf16.xpose.msra.mxu0 %v826
        %937 = vmatpush.bf16.xpose.msra.mxu0 %v823
        %938 = vmatpush.bf16.xpose.msra.mxu0 %v820
        %939 = vmatpush.bf16.xpose.msra.mxu0 %v817
        %940 = vmatpush.bf16.xpose.msra.mxu0 %v814
        %941 = vmatpush.bf16.xpose.msra.mxu0 %v811
        %942 = vmatpush.bf16.xpose.msra.mxu0 %v808
        %943 = vmatpush.bf16.xpose.msra.mxu0 %v805
        %944 = vmatmul.bf16.gmra.mxu0 %v658
        %v945 = vpop.f32.mrf.mxu0
        %v946 = vadd.f32 %v644, %v945
        %v947 = vpop.f32.mrf.mxu0
        %v948 = vadd.f32 %v649, %v947
        %949 = vdwg.mxu0
        %950 = vmatpush.bf16.xpose.msra.mxu0 %v850
        %951 = vmatpush.bf16.xpose.msra.mxu0 %v847
        %952 = vmatpush.bf16.xpose.msra.mxu0 %v844
        %953 = vmatpush.bf16.xpose.msra.mxu0 %v841
        %954 = vmatpush.bf16.xpose.msra.mxu0 %v838
        %955 = vmatpush.bf16.xpose.msra.mxu0 %v835
        %956 = vmatpush.bf16.xpose.msra.mxu0 %v832
        %957 = vmatpush.bf16.xpose.msra.mxu0 %v829
        %958 = vmatmul.bf16.gmra.mxu0 %v658
        %v959 = vpop.f32.mrf.mxu0
        %v960 = vadd.f32 %v644, %v959
        %v961 = vpop.f32.mrf.mxu0
        %v962 = vadd.f32 %v649, %v961
        %963 = vdwg.mxu0
        %v964 = vpack.c.bf16 %v876, %v862
        %v965 = vpack.c.bf16 %v904, %v890
        %v966 = vpack.c.bf16 %v932, %v918
        %v967 = vpack.c.bf16 %v960, %v946
        %v968 = vpack.c.bf16 %v878, %v864
        %v969 = vpack.c.bf16 %v906, %v892
        %v970 = vpack.c.bf16 %v934, %v920
        %v971 = vpack.c.bf16 %v962, %v948
        %v972 = vunpack.c.l.bf16 %v964
        %v973 = vunpack.c.h.bf16 %v964
        %v974 = vunpack.c.l.bf16 %v965
        %v975 = vunpack.c.h.bf16 %v965
        %v976 = vunpack.c.l.bf16 %v966
        %v977 = vunpack.c.h.bf16 %v966
        %v978 = vunpack.c.l.bf16 %v967
        %v979 = vunpack.c.h.bf16 %v967
        %v980 = vunpack.c.l.bf16 %v968
        %v981 = vunpack.c.h.bf16 %v968
        %v982 = vunpack.c.l.bf16 %v969
        %v983 = vunpack.c.h.bf16 %v969
        %v984 = vunpack.c.l.bf16 %v970
        %v985 = vunpack.c.h.bf16 %v970
        %v986 = vunpack.c.l.bf16 %v971
        %v987 = vunpack.c.h.bf16 %v971
        %v988 = vmax.f32 %v972, 0.0
        %v989 = vmax.f32 %v973, 0.0
        %v990 = vmax.f32 %v974, 0.0
        %v991 = vmax.f32 %v975, 0.0
        %v992 = vmax.f32 %v976, 0.0
        %v993 = vmax.f32 %v977, 0.0
        %v994 = vmax.f32 %v978, 0.0
        %v995 = vmax.f32 %v979, 0.0
        %v996 = vmax.f32 %v980, 0.0
        %v997 = vmax.f32 %v981, 0.0
        %v998 = vmax.f32 %v982, 0.0
        %v999 = vmax.f32 %v983, 0.0
        %v1000 = vmax.f32 %v984, 0.0
        %v1001 = vmax.f32 %v985, 0.0
        %v1002 = vmax.f32 %v986, 0.0
        %v1003 = vmax.f32 %v987, 0.0
        %v1004 = vpack.c.bf16 %v996, %v988
        %v1005 = vpack.c.bf16 %v997, %v989
        %v1006 = vpack.c.bf16 %v998, %v990
        %v1007 = vpack.c.bf16 %v999, %v991
        %v1008 = vpack.c.bf16 %v1000, %v992
        %v1009 = vpack.c.bf16 %v1001, %v993
        %v1010 = vpack.c.bf16 %v1002, %v994
        %v1011 = vpack.c.bf16 %v1003, %v995
        %v1012 = vld [vmem:[%s3] sm:$0xf]
        %v1013 = vld [vmem:[%s3 + $0x4] sm:$0xf]
        %v1014 = vld [vmem:[%s3 + $0x8] sm:$0xf]
        %v1015 = vld [vmem:[%s3 + $0xc] sm:$0xf]
        %v1016 = vld [vmem:[%s3 + $0x10] sm:$0xf]
        %v1017 = vld [vmem:[%s3 + $0x14] sm:$0xf]
        %v1018 = vld [vmem:[%s3 + $0x18] sm:$0xf]
        %v1019 = vld [vmem:[%s3 + $0x1c] sm:$0xf]
        %v1020 = vld [vmem:[%s3 + $0x20] sm:$0xf]
        %v1021 = vld [vmem:[%s3 + $0x24] sm:$0xf]
        %v1022 = vld [vmem:[%s3 + $0x28] sm:$0xf]
        %v1023 = vld [vmem:[%s3 + $0x2c] sm:$0xf]
        %v1024 = vld [vmem:[%s3 + $0x30] sm:$0xf]
        %v1025 = vld [vmem:[%s3 + $0x34] sm:$0xf]
        %v1026 = vld [vmem:[%s3 + $0x38] sm:$0xf]
        %v1027 = vld [vmem:[%s3 + $0x3c] sm:$0xf]
        %v1028 = vld [vmem:[%s4] sm:$0xff]
        %v1029 = vld [vmem:[%s4 + $0x8] sm:$0xff]
        %v1030 = vld [vmem:[%s4 + $0x10] sm:$0xff]
        %v1031 = vld [vmem:[%s4 + $0x18] sm:$0xff]
        %v1032 = vld [vmem:[%s4 + $0x20] sm:$0xff]
        %v1033 = vld [vmem:[%s4 + $0x28] sm:$0xff]
        %v1034 = vld [vmem:[%s4 + $0x30] sm:$0xff]
        %v1035 = vld [vmem:[%s4 + $0x38] sm:$0xff]
        %v1036 = vld [vmem:[%s4 + $0x40] sm:$0xff]
        %v1037 = vld [vmem:[%s4 + $0x48] sm:$0xff]
        %v1038 = vld [vmem:[%s4 + $0x50] sm:$0xff]
        %v1039 = vld [vmem:[%s4 + $0x58] sm:$0xff]
        %v1040 = vld [vmem:[%s4 + $0x60] sm:$0xff]
        %v1041 = vld [vmem:[%s4 + $0x68] sm:$0xff]
        %v1042 = vld [vmem:[%s4 + $0x70] sm:$0xff]
        %v1043 = vld [vmem:[%s4 + $0x78] sm:$0xff]
        %1045 = vset.pattern.permute.xlu0 0
        %1046 = vperm.xlu0 %1045, %v1028
        %v1047 = vpop.permute.xlu0 %1046
        %1050 = vset.pattern.permute.xlu0 0
        %1051 = vperm.xlu0 %1050, %v1029
        %v1052 = vpop.permute.xlu0 %1051
        %1055 = vset.pattern.permute.xlu0 0
        %1056 = vperm.xlu0 %1055, %v1030
        %v1057 = vpop.permute.xlu0 %1056
        %1060 = vset.pattern.permute.xlu0 0
        %1061 = vperm.xlu0 %1060, %v1031
        %v1062 = vpop.permute.xlu0 %1061
        %1065 = vset.pattern.permute.xlu0 0
        %1066 = vperm.xlu0 %1065, %v1032
        %v1067 = vpop.permute.xlu0 %1066
        %1070 = vset.pattern.permute.xlu0 0
        %1071 = vperm.xlu0 %1070, %v1033
        %v1072 = vpop.permute.xlu0 %1071
        %1075 = vset.pattern.permute.xlu0 0
        %1076 = vperm.xlu0 %1075, %v1034
        %v1077 = vpop.permute.xlu0 %1076
        %1080 = vset.pattern.permute.xlu0 0
        %1081 = vperm.xlu0 %1080, %v1035
        %v1082 = vpop.permute.xlu0 %1081
        %1085 = vset.pattern.permute.xlu0 0
        %1086 = vperm.xlu0 %1085, %v1036
        %v1087 = vpop.permute.xlu0 %1086
        %1090 = vset.pattern.permute.xlu0 0
        %1091 = vperm.xlu0 %1090, %v1037
        %v1092 = vpop.permute.xlu0 %1091
        %1095 = vset.pattern.permute.xlu0 0
        %1096 = vperm.xlu0 %1095, %v1038
        %v1097 = vpop.permute.xlu0 %1096
        %1100 = vset.pattern.permute.xlu0 0
        %1101 = vperm.xlu0 %1100, %v1039
        %v1102 = vpop.permute.xlu0 %1101
        %1105 = vset.pattern.permute.xlu0 0
        %1106 = vperm.xlu0 %1105, %v1040
        %v1107 = vpop.permute.xlu0 %1106
        %1110 = vset.pattern.permute.xlu0 0
        %1111 = vperm.xlu0 %1110, %v1041
        %v1112 = vpop.permute.xlu0 %1111
        %1115 = vset.pattern.permute.xlu0 0
        %1116 = vperm.xlu0 %1115, %v1042
        %v1117 = vpop.permute.xlu0 %1116
        %1120 = vset.pattern.permute.xlu0 0
        %1121 = vperm.xlu0 %1120, %v1043
        %v1122 = vpop.permute.xlu0 %1121
        %v1140 = vunpack.c.l.b16 %v1012
        %v1141 = vunpack.c.l.b16 %v1013
        %v1142 = vunpack.c.l.b16 %v1014
        %v1143 = vunpack.c.l.b16 %v1015
        %v1144 = vunpack.c.l.b16 %v1016
        %v1145 = vunpack.c.l.b16 %v1017
        %v1146 = vunpack.c.l.b16 %v1018
        %v1147 = vunpack.c.l.b16 %v1019
        %v1148 = vunpack.c.l.b16 %v1020
        %v1149 = vunpack.c.l.b16 %v1021
        %v1150 = vunpack.c.l.b16 %v1022
        %v1151 = vunpack.c.l.b16 %v1023
        %v1152 = vunpack.c.l.b16 %v1024
        %v1153 = vunpack.c.l.b16 %v1025
        %v1154 = vunpack.c.l.b16 %v1026
        %v1155 = vunpack.c.l.b16 %v1027
        %v1156 = vpack.c.b16 %v1141, %v1140
        %v1157 = vpack.c.b16 %v1143, %v1142
        %v1158 = vpack.c.b16 %v1145, %v1144
        %v1159 = vpack.c.b16 %v1147, %v1146
        %v1160 = vpack.c.b16 %v1149, %v1148
        %v1161 = vpack.c.b16 %v1151, %v1150
        %v1162 = vpack.c.b16 %v1153, %v1152
        %v1163 = vpack.c.b16 %v1155, %v1154
        %vm1164 = vcmask 130048
        %v1166 = vsel %vm1164, %v1156, 0
        %v1169 = vsel %vm1164, %v1157, 0
        %v1172 = vsel %vm1164, %v1158, 0
        %v1175 = vsel %vm1164, %v1159, 0
        %v1178 = vsel %vm1164, %v1160, 0
        %v1181 = vsel %vm1164, %v1161, 0
        %v1184 = vsel %vm1164, %v1162, 0
        %v1187 = vsel %vm1164, %v1163, 0
        %1189 = vmatpush.bf16.msra.mxu0 0
        %1190 = vmatpush.bf16.msra.mxu0 0
        %1191 = vmatpush.bf16.msra.mxu0 0
        %1192 = vmatpush.bf16.msra.mxu0 0
        %1193 = vmatpush.bf16.msra.mxu0 0
        %1194 = vmatpush.bf16.msra.mxu0 0
        %1195 = vmatpush.bf16.msra.mxu0 0
        %1196 = vmatpush.bf16.msra.mxu0 %v1004
        %1197 = vmatmul.bf16.gmra.mxu0 %v1166
        %v1198 = vpop.f32.mrf.mxu0
        %v1199 = vadd.f32 %v1047, %v1198
        %v1200 = vpop.f32.mrf.mxu0
        %v1201 = vadd.f32 %v1052, %v1200
        %1202 = vmatmul.bf16.gmra.mxu0 %v1169
        %v1203 = vpop.f32.mrf.mxu0
        %v1204 = vadd.f32 %v1057, %v1203
        %v1205 = vpop.f32.mrf.mxu0
        %v1206 = vadd.f32 %v1062, %v1205
        %1207 = vmatmul.bf16.gmra.mxu0 %v1172
        %v1208 = vpop.f32.mrf.mxu0
        %v1209 = vadd.f32 %v1067, %v1208
        %v1210 = vpop.f32.mrf.mxu0
        %v1211 = vadd.f32 %v1072, %v1210
        %1212 = vmatmul.bf16.gmra.mxu0 %v1175
        %v1213 = vpop.f32.mrf.mxu0
        %v1214 = vadd.f32 %v1077, %v1213
        %v1215 = vpop.f32.mrf.mxu0
        %v1216 = vadd.f32 %v1082, %v1215
        %1217 = vmatmul.bf16.gmra.mxu0 %v1178
        %v1218 = vpop.f32.mrf.mxu0
        %v1219 = vadd.f32 %v1087, %v1218
        %v1220 = vpop.f32.mrf.mxu0
        %v1221 = vadd.f32 %v1092, %v1220
        %1222 = vmatmul.bf16.gmra.mxu0 %v1181
        %v1223 = vpop.f32.mrf.mxu0
        %v1224 = vadd.f32 %v1097, %v1223
        %v1225 = vpop.f32.mrf.mxu0
        %v1226 = vadd.f32 %v1102, %v1225
        %1227 = vmatmul.bf16.gmra.mxu0 %v1184
        %v1228 = vpop.f32.mrf.mxu0
        %v1229 = vadd.f32 %v1107, %v1228
        %v1230 = vpop.f32.mrf.mxu0
        %v1231 = vadd.f32 %v1112, %v1230
        %1232 = vmatmul.bf16.gmra.mxu0 %v1187
        %v1233 = vpop.f32.mrf.mxu0
        %v1234 = vadd.f32 %v1117, %v1233
        %v1235 = vpop.f32.mrf.mxu0
        %v1236 = vadd.f32 %v1122, %v1235
        %1237 = vdwg.mxu0
        %1238 = vmatpush.bf16.msra.mxu0 0
        %1239 = vmatpush.bf16.msra.mxu0 0
        %1240 = vmatpush.bf16.msra.mxu0 0
        %1241 = vmatpush.bf16.msra.mxu0 0
        %1242 = vmatpush.bf16.msra.mxu0 0
        %1243 = vmatpush.bf16.msra.mxu0 0
        %1244 = vmatpush.bf16.msra.mxu0 0
        %1245 = vmatpush.bf16.msra.mxu0 %v1005
        %1246 = vmatmul.bf16.gmra.mxu0 %v1166
        %v1247 = vpop.f32.mrf.mxu0
        %v1248 = vadd.f32 %v1047, %v1247
        %v1249 = vpop.f32.mrf.mxu0
        %v1250 = vadd.f32 %v1052, %v1249
        %1251 = vmatmul.bf16.gmra.mxu0 %v1169
        %v1252 = vpop.f32.mrf.mxu0
        %v1253 = vadd.f32 %v1057, %v1252
        %v1254 = vpop.f32.mrf.mxu0
        %v1255 = vadd.f32 %v1062, %v1254
        %1256 = vmatmul.bf16.gmra.mxu0 %v1172
        %v1257 = vpop.f32.mrf.mxu0
        %v1258 = vadd.f32 %v1067, %v1257
        %v1259 = vpop.f32.mrf.mxu0
        %v1260 = vadd.f32 %v1072, %v1259
        %1261 = vmatmul.bf16.gmra.mxu0 %v1175
        %v1262 = vpop.f32.mrf.mxu0
        %v1263 = vadd.f32 %v1077, %v1262
        %v1264 = vpop.f32.mrf.mxu0
        %v1265 = vadd.f32 %v1082, %v1264
        %1266 = vmatmul.bf16.gmra.mxu0 %v1178
        %v1267 = vpop.f32.mrf.mxu0
        %v1268 = vadd.f32 %v1087, %v1267
        %v1269 = vpop.f32.mrf.mxu0
        %v1270 = vadd.f32 %v1092, %v1269
        %1271 = vmatmul.bf16.gmra.mxu0 %v1181
        %v1272 = vpop.f32.mrf.mxu0
        %v1273 = vadd.f32 %v1097, %v1272
        %v1274 = vpop.f32.mrf.mxu0
        %v1275 = vadd.f32 %v1102, %v1274
        %1276 = vmatmul.bf16.gmra.mxu0 %v1184
        %v1277 = vpop.f32.mrf.mxu0
        %v1278 = vadd.f32 %v1107, %v1277
        %v1279 = vpop.f32.mrf.mxu0
        %v1280 = vadd.f32 %v1112, %v1279
        %1281 = vmatmul.bf16.gmra.mxu0 %v1187
        %v1282 = vpop.f32.mrf.mxu0
        %v1283 = vadd.f32 %v1117, %v1282
        %v1284 = vpop.f32.mrf.mxu0
        %v1285 = vadd.f32 %v1122, %v1284
        %1286 = vdwg.mxu0
        %1287 = vmatpush.bf16.msra.mxu0 0
        %1288 = vmatpush.bf16.msra.mxu0 0
        %1289 = vmatpush.bf16.msra.mxu0 0
        %1290 = vmatpush.bf16.msra.mxu0 0
        %1291 = vmatpush.bf16.msra.mxu0 0
        %1292 = vmatpush.bf16.msra.mxu0 0
        %1293 = vmatpush.bf16.msra.mxu0 0
        %1294 = vmatpush.bf16.msra.mxu0 %v1006
        %1295 = vmatmul.bf16.gmra.mxu0 %v1166
        %v1296 = vpop.f32.mrf.mxu0
        %v1297 = vadd.f32 %v1047, %v1296
        %v1298 = vpop.f32.mrf.mxu0
        %v1299 = vadd.f32 %v1052, %v1298
        %1300 = vmatmul.bf16.gmra.mxu0 %v1169
        %v1301 = vpop.f32.mrf.mxu0
        %v1302 = vadd.f32 %v1057, %v1301
        %v1303 = vpop.f32.mrf.mxu0
        %v1304 = vadd.f32 %v1062, %v1303
        %1305 = vmatmul.bf16.gmra.mxu0 %v1172
        %v1306 = vpop.f32.mrf.mxu0
        %v1307 = vadd.f32 %v1067, %v1306
        %v1308 = vpop.f32.mrf.mxu0
        %v1309 = vadd.f32 %v1072, %v1308
        %1310 = vmatmul.bf16.gmra.mxu0 %v1175
        %v1311 = vpop.f32.mrf.mxu0
        %v1312 = vadd.f32 %v1077, %v1311
        %v1313 = vpop.f32.mrf.mxu0
        %v1314 = vadd.f32 %v1082, %v1313
        %1315 = vmatmul.bf16.gmra.mxu0 %v1178
        %v1316 = vpop.f32.mrf.mxu0
        %v1317 = vadd.f32 %v1087, %v1316
        %v1318 = vpop.f32.mrf.mxu0
        %v1319 = vadd.f32 %v1092, %v1318
        %1320 = vmatmul.bf16.gmra.mxu0 %v1181
        %v1321 = vpop.f32.mrf.mxu0
        %v1322 = vadd.f32 %v1097, %v1321
        %v1323 = vpop.f32.mrf.mxu0
        %v1324 = vadd.f32 %v1102, %v1323
        %1325 = vmatmul.bf16.gmra.mxu0 %v1184
        %v1326 = vpop.f32.mrf.mxu0
        %v1327 = vadd.f32 %v1107, %v1326
        %v1328 = vpop.f32.mrf.mxu0
        %v1329 = vadd.f32 %v1112, %v1328
        %1330 = vmatmul.bf16.gmra.mxu0 %v1187
        %v1331 = vpop.f32.mrf.mxu0
        %v1332 = vadd.f32 %v1117, %v1331
        %v1333 = vpop.f32.mrf.mxu0
        %v1334 = vadd.f32 %v1122, %v1333
        %1335 = vdwg.mxu0
        %1336 = vmatpush.bf16.msra.mxu0 0
        %1337 = vmatpush.bf16.msra.mxu0 0
        %1338 = vmatpush.bf16.msra.mxu0 0
        %1339 = vmatpush.bf16.msra.mxu0 0
        %1340 = vmatpush.bf16.msra.mxu0 0
        %1341 = vmatpush.bf16.msra.mxu0 0
        %1342 = vmatpush.bf16.msra.mxu0 0
        %1343 = vmatpush.bf16.msra.mxu0 %v1007
        %1344 = vmatmul.bf16.gmra.mxu0 %v1166
        %v1345 = vpop.f32.mrf.mxu0
        %v1346 = vadd.f32 %v1047, %v1345
        %v1347 = vpop.f32.mrf.mxu0
        %v1348 = vadd.f32 %v1052, %v1347
        %1349 = vmatmul.bf16.gmra.mxu0 %v1169
        %v1350 = vpop.f32.mrf.mxu0
        %v1351 = vadd.f32 %v1057, %v1350
        %v1352 = vpop.f32.mrf.mxu0
        %v1353 = vadd.f32 %v1062, %v1352
        %1354 = vmatmul.bf16.gmra.mxu0 %v1172
        %v1355 = vpop.f32.mrf.mxu0
        %v1356 = vadd.f32 %v1067, %v1355
        %v1357 = vpop.f32.mrf.mxu0
        %v1358 = vadd.f32 %v1072, %v1357
        %1359 = vmatmul.bf16.gmra.mxu0 %v1175
        %v1360 = vpop.f32.mrf.mxu0
        %v1361 = vadd.f32 %v1077, %v1360
        %v1362 = vpop.f32.mrf.mxu0
        %v1363 = vadd.f32 %v1082, %v1362
        %1364 = vmatmul.bf16.gmra.mxu0 %v1178
        %v1365 = vpop.f32.mrf.mxu0
        %v1366 = vadd.f32 %v1087, %v1365
        %v1367 = vpop.f32.mrf.mxu0
        %v1368 = vadd.f32 %v1092, %v1367
        %1369 = vmatmul.bf16.gmra.mxu0 %v1181
        %v1370 = vpop.f32.mrf.mxu0
        %v1371 = vadd.f32 %v1097, %v1370
        %v1372 = vpop.f32.mrf.mxu0
        %v1373 = vadd.f32 %v1102, %v1372
        %1374 = vmatmul.bf16.gmra.mxu0 %v1184
        %v1375 = vpop.f32.mrf.mxu0
        %v1376 = vadd.f32 %v1107, %v1375
        %v1377 = vpop.f32.mrf.mxu0
        %v1378 = vadd.f32 %v1112, %v1377
        %1379 = vmatmul.bf16.gmra.mxu0 %v1187
        %v1380 = vpop.f32.mrf.mxu0
        %v1381 = vadd.f32 %v1117, %v1380
        %v1382 = vpop.f32.mrf.mxu0
        %v1383 = vadd.f32 %v1122, %v1382
        %1384 = vdwg.mxu0
        %1385 = vmatpush.bf16.msra.mxu0 0
        %1386 = vmatpush.bf16.msra.mxu0 0
        %1387 = vmatpush.bf16.msra.mxu0 0
        %1388 = vmatpush.bf16.msra.mxu0 0
        %1389 = vmatpush.bf16.msra.mxu0 0
        %1390 = vmatpush.bf16.msra.mxu0 0
        %1391 = vmatpush.bf16.msra.mxu0 0
        %1392 = vmatpush.bf16.msra.mxu0 %v1008
        %1393 = vmatmul.bf16.gmra.mxu0 %v1166
        %v1394 = vpop.f32.mrf.mxu0
        %v1395 = vadd.f32 %v1047, %v1394
        %v1396 = vpop.f32.mrf.mxu0
        %v1397 = vadd.f32 %v1052, %v1396
        %1398 = vmatmul.bf16.gmra.mxu0 %v1169
        %v1399 = vpop.f32.mrf.mxu0
        %v1400 = vadd.f32 %v1057, %v1399
        %v1401 = vpop.f32.mrf.mxu0
        %v1402 = vadd.f32 %v1062, %v1401
        %1403 = vmatmul.bf16.gmra.mxu0 %v1172
        %v1404 = vpop.f32.mrf.mxu0
        %v1405 = vadd.f32 %v1067, %v1404
        %v1406 = vpop.f32.mrf.mxu0
        %v1407 = vadd.f32 %v1072, %v1406
        %1408 = vmatmul.bf16.gmra.mxu0 %v1175
        %v1409 = vpop.f32.mrf.mxu0
        %v1410 = vadd.f32 %v1077, %v1409
        %v1411 = vpop.f32.mrf.mxu0
        %v1412 = vadd.f32 %v1082, %v1411
        %1413 = vmatmul.bf16.gmra.mxu0 %v1178
        %v1414 = vpop.f32.mrf.mxu0
        %v1415 = vadd.f32 %v1087, %v1414
        %v1416 = vpop.f32.mrf.mxu0
        %v1417 = vadd.f32 %v1092, %v1416
        %1418 = vmatmul.bf16.gmra.mxu0 %v1181
        %v1419 = vpop.f32.mrf.mxu0
        %v1420 = vadd.f32 %v1097, %v1419
        %v1421 = vpop.f32.mrf.mxu0
        %v1422 = vadd.f32 %v1102, %v1421
        %1423 = vmatmul.bf16.gmra.mxu0 %v1184
        %v1424 = vpop.f32.mrf.mxu0
        %v1425 = vadd.f32 %v1107, %v1424
        %v1426 = vpop.f32.mrf.mxu0
        %v1427 = vadd.f32 %v1112, %v1426
        %1428 = vmatmul.bf16.gmra.mxu0 %v1187
        %v1429 = vpop.f32.mrf.mxu0
        %v1430 = vadd.f32 %v1117, %v1429
        %v1431 = vpop.f32.mrf.mxu0
        %v1432 = vadd.f32 %v1122, %v1431
        %1433 = vdwg.mxu0
        %1434 = vmatpush.bf16.msra.mxu0 0
        %1435 = vmatpush.bf16.msra.mxu0 0
        %1436 = vmatpush.bf16.msra.mxu0 0
        %1437 = vmatpush.bf16.msra.mxu0 0
        %1438 = vmatpush.bf16.msra.mxu0 0
        %1439 = vmatpush.bf16.msra.mxu0 0
        %1440 = vmatpush.bf16.msra.mxu0 0
        %1441 = vmatpush.bf16.msra.mxu0 %v1009
        %1442 = vmatmul.bf16.gmra.mxu0 %v1166
        %v1443 = vpop.f32.mrf.mxu0
        %v1444 = vadd.f32 %v1047, %v1443
        %v1445 = vpop.f32.mrf.mxu0
        %v1446 = vadd.f32 %v1052, %v1445
        %1447 = vmatmul.bf16.gmra.mxu0 %v1169
        %v1448 = vpop.f32.mrf.mxu0
        %v1449 = vadd.f32 %v1057, %v1448
        %v1450 = vpop.f32.mrf.mxu0
        %v1451 = vadd.f32 %v1062, %v1450
        %1452 = vmatmul.bf16.gmra.mxu0 %v1172
        %v1453 = vpop.f32.mrf.mxu0
        %v1454 = vadd.f32 %v1067, %v1453
        %v1455 = vpop.f32.mrf.mxu0
        %v1456 = vadd.f32 %v1072, %v1455
        %1457 = vmatmul.bf16.gmra.mxu0 %v1175
        %v1458 = vpop.f32.mrf.mxu0
        %v1459 = vadd.f32 %v1077, %v1458
        %v1460 = vpop.f32.mrf.mxu0
        %v1461 = vadd.f32 %v1082, %v1460
        %1462 = vmatmul.bf16.gmra.mxu0 %v1178
        %v1463 = vpop.f32.mrf.mxu0
        %v1464 = vadd.f32 %v1087, %v1463
        %v1465 = vpop.f32.mrf.mxu0
        %v1466 = vadd.f32 %v1092, %v1465
        %1467 = vmatmul.bf16.gmra.mxu0 %v1181
        %v1468 = vpop.f32.mrf.mxu0
        %v1469 = vadd.f32 %v1097, %v1468
        %v1470 = vpop.f32.mrf.mxu0
        %v1471 = vadd.f32 %v1102, %v1470
        %1472 = vmatmul.bf16.gmra.mxu0 %v1184
        %v1473 = vpop.f32.mrf.mxu0
        %v1474 = vadd.f32 %v1107, %v1473
        %v1475 = vpop.f32.mrf.mxu0
        %v1476 = vadd.f32 %v1112, %v1475
        %1477 = vmatmul.bf16.gmra.mxu0 %v1187
        %v1478 = vpop.f32.mrf.mxu0
        %v1479 = vadd.f32 %v1117, %v1478
        %v1480 = vpop.f32.mrf.mxu0
        %v1481 = vadd.f32 %v1122, %v1480
        %1482 = vdwg.mxu0
        %1483 = vmatpush.bf16.msra.mxu0 0
        %1484 = vmatpush.bf16.msra.mxu0 0
        %1485 = vmatpush.bf16.msra.mxu0 0
        %1486 = vmatpush.bf16.msra.mxu0 0
        %1487 = vmatpush.bf16.msra.mxu0 0
        %1488 = vmatpush.bf16.msra.mxu0 0
        %1489 = vmatpush.bf16.msra.mxu0 0
        %1490 = vmatpush.bf16.msra.mxu0 %v1010
        %1491 = vmatmul.bf16.gmra.mxu0 %v1166
        %v1492 = vpop.f32.mrf.mxu0
        %v1493 = vadd.f32 %v1047, %v1492
        %v1494 = vpop.f32.mrf.mxu0
        %v1495 = vadd.f32 %v1052, %v1494
        %1496 = vmatmul.bf16.gmra.mxu0 %v1169
        %v1497 = vpop.f32.mrf.mxu0
        %v1498 = vadd.f32 %v1057, %v1497
        %v1499 = vpop.f32.mrf.mxu0
        %v1500 = vadd.f32 %v1062, %v1499
        %1501 = vmatmul.bf16.gmra.mxu0 %v1172
        %v1502 = vpop.f32.mrf.mxu0
        %v1503 = vadd.f32 %v1067, %v1502
        %v1504 = vpop.f32.mrf.mxu0
        %v1505 = vadd.f32 %v1072, %v1504
        %1506 = vmatmul.bf16.gmra.mxu0 %v1175
        %v1507 = vpop.f32.mrf.mxu0
        %v1508 = vadd.f32 %v1077, %v1507
        %v1509 = vpop.f32.mrf.mxu0
        %v1510 = vadd.f32 %v1082, %v1509
        %1511 = vmatmul.bf16.gmra.mxu0 %v1178
        %v1512 = vpop.f32.mrf.mxu0
        %v1513 = vadd.f32 %v1087, %v1512
        %v1514 = vpop.f32.mrf.mxu0
        %v1515 = vadd.f32 %v1092, %v1514
        %1516 = vmatmul.bf16.gmra.mxu0 %v1181
        %v1517 = vpop.f32.mrf.mxu0
        %v1518 = vadd.f32 %v1097, %v1517
        %v1519 = vpop.f32.mrf.mxu0
        %v1520 = vadd.f32 %v1102, %v1519
        %1521 = vmatmul.bf16.gmra.mxu0 %v1184
        %v1522 = vpop.f32.mrf.mxu0
        %v1523 = vadd.f32 %v1107, %v1522
        %v1524 = vpop.f32.mrf.mxu0
        %v1525 = vadd.f32 %v1112, %v1524
        %1526 = vmatmul.bf16.gmra.mxu0 %v1187
        %v1527 = vpop.f32.mrf.mxu0
        %v1528 = vadd.f32 %v1117, %v1527
        %v1529 = vpop.f32.mrf.mxu0
        %v1530 = vadd.f32 %v1122, %v1529
        %1531 = vdwg.mxu0
        %1532 = vmatpush.bf16.msra.mxu0 0
        %1533 = vmatpush.bf16.msra.mxu0 0
        %1534 = vmatpush.bf16.msra.mxu0 0
        %1535 = vmatpush.bf16.msra.mxu0 0
        %1536 = vmatpush.bf16.msra.mxu0 0
        %1537 = vmatpush.bf16.msra.mxu0 0
        %1538 = vmatpush.bf16.msra.mxu0 0
        %1539 = vmatpush.bf16.msra.mxu0 %v1011
        %1540 = vmatmul.bf16.gmra.mxu0 %v1166
        %v1541 = vpop.f32.mrf.mxu0
        %v1542 = vadd.f32 %v1047, %v1541
        %v1543 = vpop.f32.mrf.mxu0
        %v1544 = vadd.f32 %v1052, %v1543
        %1545 = vmatmul.bf16.gmra.mxu0 %v1169
        %v1546 = vpop.f32.mrf.mxu0
        %v1547 = vadd.f32 %v1057, %v1546
        %v1548 = vpop.f32.mrf.mxu0
        %v1549 = vadd.f32 %v1062, %v1548
        %1550 = vmatmul.bf16.gmra.mxu0 %v1172
        %v1551 = vpop.f32.mrf.mxu0
        %v1552 = vadd.f32 %v1067, %v1551
        %v1553 = vpop.f32.mrf.mxu0
        %v1554 = vadd.f32 %v1072, %v1553
        %1555 = vmatmul.bf16.gmra.mxu0 %v1175
        %v1556 = vpop.f32.mrf.mxu0
        %v1557 = vadd.f32 %v1077, %v1556
        %v1558 = vpop.f32.mrf.mxu0
        %v1559 = vadd.f32 %v1082, %v1558
        %1560 = vmatmul.bf16.gmra.mxu0 %v1178
        %v1561 = vpop.f32.mrf.mxu0
        %v1562 = vadd.f32 %v1087, %v1561
        %v1563 = vpop.f32.mrf.mxu0
        %v1564 = vadd.f32 %v1092, %v1563
        %1565 = vmatmul.bf16.gmra.mxu0 %v1181
        %v1566 = vpop.f32.mrf.mxu0
        %v1567 = vadd.f32 %v1097, %v1566
        %v1568 = vpop.f32.mrf.mxu0
        %v1569 = vadd.f32 %v1102, %v1568
        %1570 = vmatmul.bf16.gmra.mxu0 %v1184
        %v1571 = vpop.f32.mrf.mxu0
        %v1572 = vadd.f32 %v1107, %v1571
        %v1573 = vpop.f32.mrf.mxu0
        %v1574 = vadd.f32 %v1112, %v1573
        %1575 = vmatmul.bf16.gmra.mxu0 %v1187
        %v1576 = vpop.f32.mrf.mxu0
        %v1577 = vadd.f32 %v1117, %v1576
        %v1578 = vpop.f32.mrf.mxu0
        %v1579 = vadd.f32 %v1122, %v1578
        %1580 = vdwg.mxu0
        %v1581 = vpack.c.bf16 %v1248, %v1199
        %v1582 = vpack.c.bf16 %v1346, %v1297
        %v1583 = vpack.c.bf16 %v1444, %v1395
        %v1584 = vpack.c.bf16 %v1542, %v1493
        %v1585 = vpack.c.bf16 %v1250, %v1201
        %v1586 = vpack.c.bf16 %v1348, %v1299
        %v1587 = vpack.c.bf16 %v1446, %v1397
        %v1588 = vpack.c.bf16 %v1544, %v1495
        %v1589 = vpack.c.bf16 %v1253, %v1204
        %v1590 = vpack.c.bf16 %v1351, %v1302
        %v1591 = vpack.c.bf16 %v1449, %v1400
        %v1592 = vpack.c.bf16 %v1547, %v1498
        %v1593 = vpack.c.bf16 %v1255, %v1206
        %v1594 = vpack.c.bf16 %v1353, %v1304
        %v1595 = vpack.c.bf16 %v1451, %v1402
        %v1596 = vpack.c.bf16 %v1549, %v1500
        %v1597 = vpack.c.bf16 %v1258, %v1209
        %v1598 = vpack.c.bf16 %v1356, %v1307
        %v1599 = vpack.c.bf16 %v1454, %v1405
        %v1600 = vpack.c.bf16 %v1552, %v1503
        %v1601 = vpack.c.bf16 %v1260, %v1211
        %v1602 = vpack.c.bf16 %v1358, %v1309
        %v1603 = vpack.c.bf16 %v1456, %v1407
        %v1604 = vpack.c.bf16 %v1554, %v1505
        %v1605 = vpack.c.bf16 %v1263, %v1214
        %v1606 = vpack.c.bf16 %v1361, %v1312
        %v1607 = vpack.c.bf16 %v1459, %v1410
        %v1608 = vpack.c.bf16 %v1557, %v1508
        %v1609 = vpack.c.bf16 %v1265, %v1216
        %v1610 = vpack.c.bf16 %v1363, %v1314
        %v1611 = vpack.c.bf16 %v1461, %v1412
        %v1612 = vpack.c.bf16 %v1559, %v1510
        %v1613 = vpack.c.bf16 %v1268, %v1219
        %v1614 = vpack.c.bf16 %v1366, %v1317
        %v1615 = vpack.c.bf16 %v1464, %v1415
        %v1616 = vpack.c.bf16 %v1562, %v1513
        %v1617 = vpack.c.bf16 %v1270, %v1221
        %v1618 = vpack.c.bf16 %v1368, %v1319
        %v1619 = vpack.c.bf16 %v1466, %v1417
        %v1620 = vpack.c.bf16 %v1564, %v1515
        %v1621 = vpack.c.bf16 %v1273, %v1224
        %v1622 = vpack.c.bf16 %v1371, %v1322
        %v1623 = vpack.c.bf16 %v1469, %v1420
        %v1624 = vpack.c.bf16 %v1567, %v1518
        %v1625 = vpack.c.bf16 %v1275, %v1226
        %v1626 = vpack.c.bf16 %v1373, %v1324
        %v1627 = vpack.c.bf16 %v1471, %v1422
        %v1628 = vpack.c.bf16 %v1569, %v1520
        %v1629 = vpack.c.bf16 %v1278, %v1229
        %v1630 = vpack.c.bf16 %v1376, %v1327
        %v1631 = vpack.c.bf16 %v1474, %v1425
        %v1632 = vpack.c.bf16 %v1572, %v1523
        %v1633 = vpack.c.bf16 %v1280, %v1231
        %v1634 = vpack.c.bf16 %v1378, %v1329
        %v1635 = vpack.c.bf16 %v1476, %v1427
        %v1636 = vpack.c.bf16 %v1574, %v1525
        %v1637 = vpack.c.bf16 %v1283, %v1234
        %v1638 = vpack.c.bf16 %v1381, %v1332
        %v1639 = vpack.c.bf16 %v1479, %v1430
        %v1640 = vpack.c.bf16 %v1577, %v1528
        %v1641 = vpack.c.bf16 %v1285, %v1236
        %v1642 = vpack.c.bf16 %v1383, %v1334
        %v1643 = vpack.c.bf16 %v1481, %v1432
        %v1644 = vpack.c.bf16 %v1579, %v1530
        %v1645 = vunpack.c.l.bf16 %v1581
        %v1646 = vunpack.c.h.bf16 %v1581
        %v1647 = vunpack.c.l.bf16 %v1582
        %v1648 = vunpack.c.h.bf16 %v1582
        %v1649 = vunpack.c.l.bf16 %v1583
        %v1650 = vunpack.c.h.bf16 %v1583
        %v1651 = vunpack.c.l.bf16 %v1584
        %v1652 = vunpack.c.h.bf16 %v1584
        %v1653 = vunpack.c.l.bf16 %v1585
        %v1654 = vunpack.c.h.bf16 %v1585
        %v1655 = vunpack.c.l.bf16 %v1586
        %v1656 = vunpack.c.h.bf16 %v1586
        %v1657 = vunpack.c.l.bf16 %v1587
        %v1658 = vunpack.c.h.bf16 %v1587
        %v1659 = vunpack.c.l.bf16 %v1588
        %v1660 = vunpack.c.h.bf16 %v1588
        %v1661 = vunpack.c.l.bf16 %v1589
        %v1662 = vunpack.c.h.bf16 %v1589
        %v1663 = vunpack.c.l.bf16 %v1590
        %v1664 = vunpack.c.h.bf16 %v1590
        %v1665 = vunpack.c.l.bf16 %v1591
        %v1666 = vunpack.c.h.bf16 %v1591
        %v1667 = vunpack.c.l.bf16 %v1592
        %v1668 = vunpack.c.h.bf16 %v1592
        %v1669 = vunpack.c.l.bf16 %v1593
        %v1670 = vunpack.c.h.bf16 %v1593
        %v1671 = vunpack.c.l.bf16 %v1594
        %v1672 = vunpack.c.h.bf16 %v1594
        %v1673 = vunpack.c.l.bf16 %v1595
        %v1674 = vunpack.c.h.bf16 %v1595
        %v1675 = vunpack.c.l.bf16 %v1596
        %v1676 = vunpack.c.h.bf16 %v1596
        %v1677 = vunpack.c.l.bf16 %v1597
        %v1678 = vunpack.c.h.bf16 %v1597
        %v1679 = vunpack.c.l.bf16 %v1598
        %v1680 = vunpack.c.h.bf16 %v1598
        %v1681 = vunpack.c.l.bf16 %v1599
        %v1682 = vunpack.c.h.bf16 %v1599
        %v1683 = vunpack.c.l.bf16 %v1600
        %v1684 = vunpack.c.h.bf16 %v1600
        %v1685 = vunpack.c.l.bf16 %v1601
        %v1686 = vunpack.c.h.bf16 %v1601
        %v1687 = vunpack.c.l.bf16 %v1602
        %v1688 = vunpack.c.h.bf16 %v1602
        %v1689 = vunpack.c.l.bf16 %v1603
        %v1690 = vunpack.c.h.bf16 %v1603
        %v1691 = vunpack.c.l.bf16 %v1604
        %v1692 = vunpack.c.h.bf16 %v1604
        %v1693 = vunpack.c.l.bf16 %v1605
        %v1694 = vunpack.c.h.bf16 %v1605
        %v1695 = vunpack.c.l.bf16 %v1606
        %v1696 = vunpack.c.h.bf16 %v1606
        %v1697 = vunpack.c.l.bf16 %v1607
        %v1698 = vunpack.c.h.bf16 %v1607
        %v1699 = vunpack.c.l.bf16 %v1608
        %v1700 = vunpack.c.h.bf16 %v1608
        %v1701 = vunpack.c.l.bf16 %v1609
        %v1702 = vunpack.c.h.bf16 %v1609
        %v1703 = vunpack.c.l.bf16 %v1610
        %v1704 = vunpack.c.h.bf16 %v1610
        %v1705 = vunpack.c.l.bf16 %v1611
        %v1706 = vunpack.c.h.bf16 %v1611
        %v1707 = vunpack.c.l.bf16 %v1612
        %v1708 = vunpack.c.h.bf16 %v1612
        %v1709 = vunpack.c.l.bf16 %v1613
        %v1710 = vunpack.c.h.bf16 %v1613
        %v1711 = vunpack.c.l.bf16 %v1614
        %v1712 = vunpack.c.h.bf16 %v1614
        %v1713 = vunpack.c.l.bf16 %v1615
        %v1714 = vunpack.c.h.bf16 %v1615
        %v1715 = vunpack.c.l.bf16 %v1616
        %v1716 = vunpack.c.h.bf16 %v1616
        %v1717 = vunpack.c.l.bf16 %v1617
        %v1718 = vunpack.c.h.bf16 %v1617
        %v1719 = vunpack.c.l.bf16 %v1618
        %v1720 = vunpack.c.h.bf16 %v1618
        %v1721 = vunpack.c.l.bf16 %v1619
        %v1722 = vunpack.c.h.bf16 %v1619
        %v1723 = vunpack.c.l.bf16 %v1620
        %v1724 = vunpack.c.h.bf16 %v1620
        %v1725 = vunpack.c.l.bf16 %v1621
        %v1726 = vunpack.c.h.bf16 %v1621
        %v1727 = vunpack.c.l.bf16 %v1622
        %v1728 = vunpack.c.h.bf16 %v1622
        %v1729 = vunpack.c.l.bf16 %v1623
        %v1730 = vunpack.c.h.bf16 %v1623
        %v1731 = vunpack.c.l.bf16 %v1624
        %v1732 = vunpack.c.h.bf16 %v1624
        %v1733 = vunpack.c.l.bf16 %v1625
        %v1734 = vunpack.c.h.bf16 %v1625
        %v1735 = vunpack.c.l.bf16 %v1626
        %v1736 = vunpack.c.h.bf16 %v1626
        %v1737 = vunpack.c.l.bf16 %v1627
        %v1738 = vunpack.c.h.bf16 %v1627
        %v1739 = vunpack.c.l.bf16 %v1628
        %v1740 = vunpack.c.h.bf16 %v1628
        %v1741 = vunpack.c.l.bf16 %v1629
        %v1742 = vunpack.c.h.bf16 %v1629
        %v1743 = vunpack.c.l.bf16 %v1630
        %v1744 = vunpack.c.h.bf16 %v1630
        %v1745 = vunpack.c.l.bf16 %v1631
        %v1746 = vunpack.c.h.bf16 %v1631
        %v1747 = vunpack.c.l.bf16 %v1632
        %v1748 = vunpack.c.h.bf16 %v1632
        %v1749 = vunpack.c.l.bf16 %v1633
        %v1750 = vunpack.c.h.bf16 %v1633
        %v1751 = vunpack.c.l.bf16 %v1634
        %v1752 = vunpack.c.h.bf16 %v1634
        %v1753 = vunpack.c.l.bf16 %v1635
        %v1754 = vunpack.c.h.bf16 %v1635
        %v1755 = vunpack.c.l.bf16 %v1636
        %v1756 = vunpack.c.h.bf16 %v1636
        %v1757 = vunpack.c.l.bf16 %v1637
        %v1758 = vunpack.c.h.bf16 %v1637
        %v1759 = vunpack.c.l.bf16 %v1638
        %v1760 = vunpack.c.h.bf16 %v1638
        %v1761 = vunpack.c.l.bf16 %v1639
        %v1762 = vunpack.c.h.bf16 %v1639
        %v1763 = vunpack.c.l.bf16 %v1640
        %v1764 = vunpack.c.h.bf16 %v1640
        %v1765 = vunpack.c.l.bf16 %v1641
        %v1766 = vunpack.c.h.bf16 %v1641
        %v1767 = vunpack.c.l.bf16 %v1642
        %v1768 = vunpack.c.h.bf16 %v1642
        %v1769 = vunpack.c.l.bf16 %v1643
        %v1770 = vunpack.c.h.bf16 %v1643
        %v1771 = vunpack.c.l.bf16 %v1644
        %v1772 = vunpack.c.h.bf16 %v1644
        %v1773 = vmax.f32 %v1645, 0.0
        %v1774 = vmax.f32 %v1646, 0.0
        %v1775 = vmax.f32 %v1647, 0.0
        %v1776 = vmax.f32 %v1648, 0.0
        %v1777 = vmax.f32 %v1649, 0.0
        %v1778 = vmax.f32 %v1650, 0.0
        %v1779 = vmax.f32 %v1651, 0.0
        %v1780 = vmax.f32 %v1652, 0.0
        %v1781 = vmax.f32 %v1653, 0.0
        %v1782 = vmax.f32 %v1654, 0.0
        %v1783 = vmax.f32 %v1655, 0.0
        %v1784 = vmax.f32 %v1656, 0.0
        %v1785 = vmax.f32 %v1657, 0.0
        %v1786 = vmax.f32 %v1658, 0.0
        %v1787 = vmax.f32 %v1659, 0.0
        %v1788 = vmax.f32 %v1660, 0.0
        %v1789 = vmax.f32 %v1661, 0.0
        %v1790 = vmax.f32 %v1662, 0.0
        %v1791 = vmax.f32 %v1663, 0.0
        %v1792 = vmax.f32 %v1664, 0.0
        %v1793 = vmax.f32 %v1665, 0.0
        %v1794 = vmax.f32 %v1666, 0.0
        %v1795 = vmax.f32 %v1667, 0.0
        %v1796 = vmax.f32 %v1668, 0.0
        %v1797 = vmax.f32 %v1669, 0.0
        %v1798 = vmax.f32 %v1670, 0.0
        %v1799 = vmax.f32 %v1671, 0.0
        %v1800 = vmax.f32 %v1672, 0.0
        %v1801 = vmax.f32 %v1673, 0.0
        %v1802 = vmax.f32 %v1674, 0.0
        %v1803 = vmax.f32 %v1675, 0.0
        %v1804 = vmax.f32 %v1676, 0.0
        %v1805 = vmax.f32 %v1677, 0.0
        %v1806 = vmax.f32 %v1678, 0.0
        %v1807 = vmax.f32 %v1679, 0.0
        %v1808 = vmax.f32 %v1680, 0.0
        %v1809 = vmax.f32 %v1681, 0.0
        %v1810 = vmax.f32 %v1682, 0.0
        %v1811 = vmax.f32 %v1683, 0.0
        %v1812 = vmax.f32 %v1684, 0.0
        %v1813 = vmax.f32 %v1685, 0.0
        %v1814 = vmax.f32 %v1686, 0.0
        %v1815 = vmax.f32 %v1687, 0.0
        %v1816 = vmax.f32 %v1688, 0.0
        %v1817 = vmax.f32 %v1689, 0.0
        %v1818 = vmax.f32 %v1690, 0.0
        %v1819 = vmax.f32 %v1691, 0.0
        %v1820 = vmax.f32 %v1692, 0.0
        %v1821 = vmax.f32 %v1693, 0.0
        %v1822 = vmax.f32 %v1694, 0.0
        %v1823 = vmax.f32 %v1695, 0.0
        %v1824 = vmax.f32 %v1696, 0.0
        %v1825 = vmax.f32 %v1697, 0.0
        %v1826 = vmax.f32 %v1698, 0.0
        %v1827 = vmax.f32 %v1699, 0.0
        %v1828 = vmax.f32 %v1700, 0.0
        %v1829 = vmax.f32 %v1701, 0.0
        %v1830 = vmax.f32 %v1702, 0.0
        %v1831 = vmax.f32 %v1703, 0.0
        %v1832 = vmax.f32 %v1704, 0.0
        %v1833 = vmax.f32 %v1705, 0.0
        %v1834 = vmax.f32 %v1706, 0.0
        %v1835 = vmax.f32 %v1707, 0.0
        %v1836 = vmax.f32 %v1708, 0.0
        %v1837 = vmax.f32 %v1709, 0.0
        %v1838 = vmax.f32 %v1710, 0.0
        %v1839 = vmax.f32 %v1711, 0.0
        %v1840 = vmax.f32 %v1712, 0.0
        %v1841 = vmax.f32 %v1713, 0.0
        %v1842 = vmax.f32 %v1714, 0.0
        %v1843 = vmax.f32 %v1715, 0.0
        %v1844 = vmax.f32 %v1716, 0.0
        %v1845 = vmax.f32 %v1717, 0.0
        %v1846 = vmax.f32 %v1718, 0.0
        %v1847 = vmax.f32 %v1719, 0.0
        %v1848 = vmax.f32 %v1720, 0.0
        %v1849 = vmax.f32 %v1721, 0.0
        %v1850 = vmax.f32 %v1722, 0.0
        %v1851 = vmax.f32 %v1723, 0.0
        %v1852 = vmax.f32 %v1724, 0.0
        %v1853 = vmax.f32 %v1725, 0.0
        %v1854 = vmax.f32 %v1726, 0.0
        %v1855 = vmax.f32 %v1727, 0.0
        %v1856 = vmax.f32 %v1728, 0.0
        %v1857 = vmax.f32 %v1729, 0.0
        %v1858 = vmax.f32 %v1730, 0.0
        %v1859 = vmax.f32 %v1731, 0.0
        %v1860 = vmax.f32 %v1732, 0.0
        %v1861 = vmax.f32 %v1733, 0.0
        %v1862 = vmax.f32 %v1734, 0.0
        %v1863 = vmax.f32 %v1735, 0.0
        %v1864 = vmax.f32 %v1736, 0.0
        %v1865 = vmax.f32 %v1737, 0.0
        %v1866 = vmax.f32 %v1738, 0.0
        %v1867 = vmax.f32 %v1739, 0.0
        %v1868 = vmax.f32 %v1740, 0.0
        %v1869 = vmax.f32 %v1741, 0.0
        %v1870 = vmax.f32 %v1742, 0.0
        %v1871 = vmax.f32 %v1743, 0.0
        %v1872 = vmax.f32 %v1744, 0.0
        %v1873 = vmax.f32 %v1745, 0.0
        %v1874 = vmax.f32 %v1746, 0.0
        %v1875 = vmax.f32 %v1747, 0.0
        %v1876 = vmax.f32 %v1748, 0.0
        %v1877 = vmax.f32 %v1749, 0.0
        %v1878 = vmax.f32 %v1750, 0.0
        %v1879 = vmax.f32 %v1751, 0.0
        %v1880 = vmax.f32 %v1752, 0.0
        %v1881 = vmax.f32 %v1753, 0.0
        %v1882 = vmax.f32 %v1754, 0.0
        %v1883 = vmax.f32 %v1755, 0.0
        %v1884 = vmax.f32 %v1756, 0.0
        %v1885 = vmax.f32 %v1757, 0.0
        %v1886 = vmax.f32 %v1758, 0.0
        %v1887 = vmax.f32 %v1759, 0.0
        %v1888 = vmax.f32 %v1760, 0.0
        %v1889 = vmax.f32 %v1761, 0.0
        %v1890 = vmax.f32 %v1762, 0.0
        %v1891 = vmax.f32 %v1763, 0.0
        %v1892 = vmax.f32 %v1764, 0.0
        %v1893 = vmax.f32 %v1765, 0.0
        %v1894 = vmax.f32 %v1766, 0.0
        %v1895 = vmax.f32 %v1767, 0.0
        %v1896 = vmax.f32 %v1768, 0.0
        %v1897 = vmax.f32 %v1769, 0.0
        %v1898 = vmax.f32 %v1770, 0.0
        %v1899 = vmax.f32 %v1771, 0.0
        %v1900 = vmax.f32 %v1772, 0.0
        %v1901 = vpack.c.bf16 %v1781, %v1773
        %v1902 = vpack.c.bf16 %v1782, %v1774
        %v1903 = vpack.c.bf16 %v1783, %v1775
        %v1904 = vpack.c.bf16 %v1784, %v1776
        %v1905 = vpack.c.bf16 %v1785, %v1777
        %v1906 = vpack.c.bf16 %v1786, %v1778
        %v1907 = vpack.c.bf16 %v1787, %v1779
        %v1908 = vpack.c.bf16 %v1788, %v1780
        %v1909 = vpack.c.bf16 %v1797, %v1789
        %v1910 = vpack.c.bf16 %v1798, %v1790
        %v1911 = vpack.c.bf16 %v1799, %v1791
        %v1912 = vpack.c.bf16 %v1800, %v1792
        %v1913 = vpack.c.bf16 %v1801, %v1793
        %v1914 = vpack.c.bf16 %v1802, %v1794
        %v1915 = vpack.c.bf16 %v1803, %v1795
        %v1916 = vpack.c.bf16 %v1804, %v1796
        %v1917 = vpack.c.bf16 %v1813, %v1805
        %v1918 = vpack.c.bf16 %v1814, %v1806
        %v1919 = vpack.c.bf16 %v1815, %v1807
        %v1920 = vpack.c.bf16 %v1816, %v1808
        %v1921 = vpack.c.bf16 %v1817, %v1809
        %v1922 = vpack.c.bf16 %v1818, %v1810
        %v1923 = vpack.c.bf16 %v1819, %v1811
        %v1924 = vpack.c.bf16 %v1820, %v1812
        %v1925 = vpack.c.bf16 %v1829, %v1821
        %v1926 = vpack.c.bf16 %v1830, %v1822
        %v1927 = vpack.c.bf16 %v1831, %v1823
        %v1928 = vpack.c.bf16 %v1832, %v1824
        %v1929 = vpack.c.bf16 %v1833, %v1825
        %v1930 = vpack.c.bf16 %v1834, %v1826
        %v1931 = vpack.c.bf16 %v1835, %v1827
        %v1932 = vpack.c.bf16 %v1836, %v1828
        %v1933 = vpack.c.bf16 %v1845, %v1837
        %v1934 = vpack.c.bf16 %v1846, %v1838
        %v1935 = vpack.c.bf16 %v1847, %v1839
        %v1936 = vpack.c.bf16 %v1848, %v1840
        %v1937 = vpack.c.bf16 %v1849, %v1841
        %v1938 = vpack.c.bf16 %v1850, %v1842
        %v1939 = vpack.c.bf16 %v1851, %v1843
        %v1940 = vpack.c.bf16 %v1852, %v1844
        %v1941 = vpack.c.bf16 %v1861, %v1853
        %v1942 = vpack.c.bf16 %v1862, %v1854
        %v1943 = vpack.c.bf16 %v1863, %v1855
        %v1944 = vpack.c.bf16 %v1864, %v1856
        %v1945 = vpack.c.bf16 %v1865, %v1857
        %v1946 = vpack.c.bf16 %v1866, %v1858
        %v1947 = vpack.c.bf16 %v1867, %v1859
        %v1948 = vpack.c.bf16 %v1868, %v1860
        %v1949 = vpack.c.bf16 %v1877, %v1869
        %v1950 = vpack.c.bf16 %v1878, %v1870
        %v1951 = vpack.c.bf16 %v1879, %v1871
        %v1952 = vpack.c.bf16 %v1880, %v1872
        %v1953 = vpack.c.bf16 %v1881, %v1873
        %v1954 = vpack.c.bf16 %v1882, %v1874
        %v1955 = vpack.c.bf16 %v1883, %v1875
        %v1956 = vpack.c.bf16 %v1884, %v1876
        %v1957 = vpack.c.bf16 %v1893, %v1885
        %v1958 = vpack.c.bf16 %v1894, %v1886
        %v1959 = vpack.c.bf16 %v1895, %v1887
        %v1960 = vpack.c.bf16 %v1896, %v1888
        %v1961 = vpack.c.bf16 %v1897, %v1889
        %v1962 = vpack.c.bf16 %v1898, %v1890
        %v1963 = vpack.c.bf16 %v1899, %v1891
        %v1964 = vpack.c.bf16 %v1900, %v1892
        %v1965 = vld [vmem:[%s5] sm:$0xf]
        %v1966 = vld [vmem:[%s5 + $0x4] sm:$0xf]
        %v1967 = vld [vmem:[%s5 + $0x8] sm:$0xf]
        %v1968 = vld [vmem:[%s5 + $0xc] sm:$0xf]
        %v1969 = vld [vmem:[%s5 + $0x10] sm:$0xf]
        %v1970 = vld [vmem:[%s5 + $0x14] sm:$0xf]
        %v1971 = vld [vmem:[%s5 + $0x18] sm:$0xf]
        %v1972 = vld [vmem:[%s5 + $0x1c] sm:$0xf]
        %v1973 = vld [vmem:[%s6] sm:$0xff]
        %v1974 = vld [vmem:[%s6 + $0x8] sm:$0xff]
        %v1975 = vld [vmem:[%s6 + $0x10] sm:$0xff]
        %v1976 = vld [vmem:[%s6 + $0x18] sm:$0xff]
        %v1977 = vld [vmem:[%s6 + $0x20] sm:$0xff]
        %v1978 = vld [vmem:[%s6 + $0x28] sm:$0xff]
        %v1979 = vld [vmem:[%s6 + $0x30] sm:$0xff]
        %v1980 = vld [vmem:[%s6 + $0x38] sm:$0xff]
        %1982 = vset.pattern.permute.xlu0 0
        %1983 = vperm.xlu0 %1982, %v1973
        %v1984 = vpop.permute.xlu0 %1983
        %1987 = vset.pattern.permute.xlu0 0
        %1988 = vperm.xlu0 %1987, %v1974
        %v1989 = vpop.permute.xlu0 %1988
        %1992 = vset.pattern.permute.xlu0 0
        %1993 = vperm.xlu0 %1992, %v1975
        %v1994 = vpop.permute.xlu0 %1993
        %1997 = vset.pattern.permute.xlu0 0
        %1998 = vperm.xlu0 %1997, %v1976
        %v1999 = vpop.permute.xlu0 %1998
        %2002 = vset.pattern.permute.xlu0 0
        %2003 = vperm.xlu0 %2002, %v1977
        %v2004 = vpop.permute.xlu0 %2003
        %2007 = vset.pattern.permute.xlu0 0
        %2008 = vperm.xlu0 %2007, %v1978
        %v2009 = vpop.permute.xlu0 %2008
        %2012 = vset.pattern.permute.xlu0 0
        %2013 = vperm.xlu0 %2012, %v1979
        %v2014 = vpop.permute.xlu0 %2013
        %2017 = vset.pattern.permute.xlu0 0
        %2018 = vperm.xlu0 %2017, %v1980
        %v2019 = vpop.permute.xlu0 %2018
        %v2029 = vunpack.c.l.b16 %v1965
        %v2030 = vunpack.c.l.b16 %v1966
        %v2031 = vunpack.c.l.b16 %v1967
        %v2032 = vunpack.c.l.b16 %v1968
        %v2033 = vunpack.c.l.b16 %v1969
        %v2034 = vunpack.c.l.b16 %v1970
        %v2035 = vunpack.c.l.b16 %v1971
        %v2036 = vunpack.c.l.b16 %v1972
        %v2037 = vpack.c.b16 %v2030, %v2029
        %v2038 = vpack.c.b16 %v2032, %v2031
        %v2039 = vpack.c.b16 %v2034, %v2033
        %v2040 = vpack.c.b16 %v2036, %v2035
        %2045 = vmatpush.bf16.msra.mxu0 %v1957
        %2046 = vmatpush.bf16.msra.mxu0 %v1949
        %2047 = vmatpush.bf16.msra.mxu0 %v1941
        %2048 = vmatpush.bf16.msra.mxu0 %v1933
        %2049 = vmatpush.bf16.msra.mxu0 %v1925
        %2050 = vmatpush.bf16.msra.mxu0 %v1917
        %2051 = vmatpush.bf16.msra.mxu0 %v1909
        %2052 = vmatpush.bf16.msra.mxu0 %v1901
        %2053 = vmatmul.bf16.gmra.mxu0 %v2037
        %v2054 = vpop.f32.mrf.mxu0
        %v2055 = vadd.f32 %v1984, %v2054
        %v2056 = vpop.f32.mrf.mxu0
        %v2057 = vadd.f32 %v1989, %v2056
        %2058 = vmatmul.bf16.gmra.mxu0 %v2038
        %v2059 = vpop.f32.mrf.mxu0
        %v2060 = vadd.f32 %v1994, %v2059
        %v2061 = vpop.f32.mrf.mxu0
        %v2062 = vadd.f32 %v1999, %v2061
        %2063 = vmatmul.bf16.gmra.mxu0 %v2039
        %v2064 = vpop.f32.mrf.mxu0
        %v2065 = vadd.f32 %v2004, %v2064
        %v2066 = vpop.f32.mrf.mxu0
        %v2067 = vadd.f32 %v2009, %v2066
        %2068 = vmatmul.bf16.gmra.mxu0 %v2040
        %v2069 = vpop.f32.mrf.mxu0
        %v2070 = vadd.f32 %v2014, %v2069
        %v2071 = vpop.f32.mrf.mxu0
        %v2072 = vadd.f32 %v2019, %v2071
        %2073 = vdwg.mxu0
        %2074 = vmatpush.bf16.msra.mxu0 %v1958
        %2075 = vmatpush.bf16.msra.mxu0 %v1950
        %2076 = vmatpush.bf16.msra.mxu0 %v1942
        %2077 = vmatpush.bf16.msra.mxu0 %v1934
        %2078 = vmatpush.bf16.msra.mxu0 %v1926
        %2079 = vmatpush.bf16.msra.mxu0 %v1918
        %2080 = vmatpush.bf16.msra.mxu0 %v1910
        %2081 = vmatpush.bf16.msra.mxu0 %v1902
        %2082 = vmatmul.bf16.gmra.mxu0 %v2037
        %v2083 = vpop.f32.mrf.mxu0
        %v2084 = vadd.f32 %v1984, %v2083
        %v2085 = vpop.f32.mrf.mxu0
        %v2086 = vadd.f32 %v1989, %v2085
        %2087 = vmatmul.bf16.gmra.mxu0 %v2038
        %v2088 = vpop.f32.mrf.mxu0
        %v2089 = vadd.f32 %v1994, %v2088
        %v2090 = vpop.f32.mrf.mxu0
        %v2091 = vadd.f32 %v1999, %v2090
        %2092 = vmatmul.bf16.gmra.mxu0 %v2039
        %v2093 = vpop.f32.mrf.mxu0
        %v2094 = vadd.f32 %v2004, %v2093
        %v2095 = vpop.f32.mrf.mxu0
        %v2096 = vadd.f32 %v2009, %v2095
        %2097 = vmatmul.bf16.gmra.mxu0 %v2040
        %v2098 = vpop.f32.mrf.mxu0
        %v2099 = vadd.f32 %v2014, %v2098
        %v2100 = vpop.f32.mrf.mxu0
        %v2101 = vadd.f32 %v2019, %v2100
        %2102 = vdwg.mxu0
        %2103 = vmatpush.bf16.msra.mxu0 %v1959
        %2104 = vmatpush.bf16.msra.mxu0 %v1951
        %2105 = vmatpush.bf16.msra.mxu0 %v1943
        %2106 = vmatpush.bf16.msra.mxu0 %v1935
        %2107 = vmatpush.bf16.msra.mxu0 %v1927
        %2108 = vmatpush.bf16.msra.mxu0 %v1919
        %2109 = vmatpush.bf16.msra.mxu0 %v1911
        %2110 = vmatpush.bf16.msra.mxu0 %v1903
        %2111 = vmatmul.bf16.gmra.mxu0 %v2037
        %v2112 = vpop.f32.mrf.mxu0
        %v2113 = vadd.f32 %v1984, %v2112
        %v2114 = vpop.f32.mrf.mxu0
        %v2115 = vadd.f32 %v1989, %v2114
        %2116 = vmatmul.bf16.gmra.mxu0 %v2038
        %v2117 = vpop.f32.mrf.mxu0
        %v2118 = vadd.f32 %v1994, %v2117
        %v2119 = vpop.f32.mrf.mxu0
        %v2120 = vadd.f32 %v1999, %v2119
        %2121 = vmatmul.bf16.gmra.mxu0 %v2039
        %v2122 = vpop.f32.mrf.mxu0
        %v2123 = vadd.f32 %v2004, %v2122
        %v2124 = vpop.f32.mrf.mxu0
        %v2125 = vadd.f32 %v2009, %v2124
        %2126 = vmatmul.bf16.gmra.mxu0 %v2040
        %v2127 = vpop.f32.mrf.mxu0
        %v2128 = vadd.f32 %v2014, %v2127
        %v2129 = vpop.f32.mrf.mxu0
        %v2130 = vadd.f32 %v2019, %v2129
        %2131 = vdwg.mxu0
        %2132 = vmatpush.bf16.msra.mxu0 %v1960
        %2133 = vmatpush.bf16.msra.mxu0 %v1952
        %2134 = vmatpush.bf16.msra.mxu0 %v1944
        %2135 = vmatpush.bf16.msra.mxu0 %v1936
        %2136 = vmatpush.bf16.msra.mxu0 %v1928
        %2137 = vmatpush.bf16.msra.mxu0 %v1920
        %2138 = vmatpush.bf16.msra.mxu0 %v1912
        %2139 = vmatpush.bf16.msra.mxu0 %v1904
        %2140 = vmatmul.bf16.gmra.mxu0 %v2037
        %v2141 = vpop.f32.mrf.mxu0
        %v2142 = vadd.f32 %v1984, %v2141
        %v2143 = vpop.f32.mrf.mxu0
        %v2144 = vadd.f32 %v1989, %v2143
        %2145 = vmatmul.bf16.gmra.mxu0 %v2038
        %v2146 = vpop.f32.mrf.mxu0
        %v2147 = vadd.f32 %v1994, %v2146
        %v2148 = vpop.f32.mrf.mxu0
        %v2149 = vadd.f32 %v1999, %v2148
        %2150 = vmatmul.bf16.gmra.mxu0 %v2039
        %v2151 = vpop.f32.mrf.mxu0
        %v2152 = vadd.f32 %v2004, %v2151
        %v2153 = vpop.f32.mrf.mxu0
        %v2154 = vadd.f32 %v2009, %v2153
        %2155 = vmatmul.bf16.gmra.mxu0 %v2040
        %v2156 = vpop.f32.mrf.mxu0
        %v2157 = vadd.f32 %v2014, %v2156
        %v2158 = vpop.f32.mrf.mxu0
        %v2159 = vadd.f32 %v2019, %v2158
        %2160 = vdwg.mxu0
        %2161 = vmatpush.bf16.msra.mxu0 %v1961
        %2162 = vmatpush.bf16.msra.mxu0 %v1953
        %2163 = vmatpush.bf16.msra.mxu0 %v1945
        %2164 = vmatpush.bf16.msra.mxu0 %v1937
        %2165 = vmatpush.bf16.msra.mxu0 %v1929
        %2166 = vmatpush.bf16.msra.mxu0 %v1921
        %2167 = vmatpush.bf16.msra.mxu0 %v1913
        %2168 = vmatpush.bf16.msra.mxu0 %v1905
        %2169 = vmatmul.bf16.gmra.mxu0 %v2037
        %v2170 = vpop.f32.mrf.mxu0
        %v2171 = vadd.f32 %v1984, %v2170
        %v2172 = vpop.f32.mrf.mxu0
        %v2173 = vadd.f32 %v1989, %v2172
        %2174 = vmatmul.bf16.gmra.mxu0 %v2038
        %v2175 = vpop.f32.mrf.mxu0
        %v2176 = vadd.f32 %v1994, %v2175
        %v2177 = vpop.f32.mrf.mxu0
        %v2178 = vadd.f32 %v1999, %v2177
        %2179 = vmatmul.bf16.gmra.mxu0 %v2039
        %v2180 = vpop.f32.mrf.mxu0
        %v2181 = vadd.f32 %v2004, %v2180
        %v2182 = vpop.f32.mrf.mxu0
        %v2183 = vadd.f32 %v2009, %v2182
        %2184 = vmatmul.bf16.gmra.mxu0 %v2040
        %v2185 = vpop.f32.mrf.mxu0
        %v2186 = vadd.f32 %v2014, %v2185
        %v2187 = vpop.f32.mrf.mxu0
        %v2188 = vadd.f32 %v2019, %v2187
        %2189 = vdwg.mxu0
        %2190 = vmatpush.bf16.msra.mxu0 %v1962
        %2191 = vmatpush.bf16.msra.mxu0 %v1954
        %2192 = vmatpush.bf16.msra.mxu0 %v1946
        %2193 = vmatpush.bf16.msra.mxu0 %v1938
        %2194 = vmatpush.bf16.msra.mxu0 %v1930
        %2195 = vmatpush.bf16.msra.mxu0 %v1922
        %2196 = vmatpush.bf16.msra.mxu0 %v1914
        %2197 = vmatpush.bf16.msra.mxu0 %v1906
        %2198 = vmatmul.bf16.gmra.mxu0 %v2037
        %v2199 = vpop.f32.mrf.mxu0
        %v2200 = vadd.f32 %v1984, %v2199
        %v2201 = vpop.f32.mrf.mxu0
        %v2202 = vadd.f32 %v1989, %v2201
        %2203 = vmatmul.bf16.gmra.mxu0 %v2038
        %v2204 = vpop.f32.mrf.mxu0
        %v2205 = vadd.f32 %v1994, %v2204
        %v2206 = vpop.f32.mrf.mxu0
        %v2207 = vadd.f32 %v1999, %v2206
        %2208 = vmatmul.bf16.gmra.mxu0 %v2039
        %v2209 = vpop.f32.mrf.mxu0
        %v2210 = vadd.f32 %v2004, %v2209
        %v2211 = vpop.f32.mrf.mxu0
        %v2212 = vadd.f32 %v2009, %v2211
        %2213 = vmatmul.bf16.gmra.mxu0 %v2040
        %v2214 = vpop.f32.mrf.mxu0
        %v2215 = vadd.f32 %v2014, %v2214
        %v2216 = vpop.f32.mrf.mxu0
        %v2217 = vadd.f32 %v2019, %v2216
        %2218 = vdwg.mxu0
        %2219 = vmatpush.bf16.msra.mxu0 %v1963
        %2220 = vmatpush.bf16.msra.mxu0 %v1955
        %2221 = vmatpush.bf16.msra.mxu0 %v1947
        %2222 = vmatpush.bf16.msra.mxu0 %v1939
        %2223 = vmatpush.bf16.msra.mxu0 %v1931
        %2224 = vmatpush.bf16.msra.mxu0 %v1923
        %2225 = vmatpush.bf16.msra.mxu0 %v1915
        %2226 = vmatpush.bf16.msra.mxu0 %v1907
        %2227 = vmatmul.bf16.gmra.mxu0 %v2037
        %v2228 = vpop.f32.mrf.mxu0
        %v2229 = vadd.f32 %v1984, %v2228
        %v2230 = vpop.f32.mrf.mxu0
        %v2231 = vadd.f32 %v1989, %v2230
        %2232 = vmatmul.bf16.gmra.mxu0 %v2038
        %v2233 = vpop.f32.mrf.mxu0
        %v2234 = vadd.f32 %v1994, %v2233
        %v2235 = vpop.f32.mrf.mxu0
        %v2236 = vadd.f32 %v1999, %v2235
        %2237 = vmatmul.bf16.gmra.mxu0 %v2039
        %v2238 = vpop.f32.mrf.mxu0
        %v2239 = vadd.f32 %v2004, %v2238
        %v2240 = vpop.f32.mrf.mxu0
        %v2241 = vadd.f32 %v2009, %v2240
        %2242 = vmatmul.bf16.gmra.mxu0 %v2040
        %v2243 = vpop.f32.mrf.mxu0
        %v2244 = vadd.f32 %v2014, %v2243
        %v2245 = vpop.f32.mrf.mxu0
        %v2246 = vadd.f32 %v2019, %v2245
        %2247 = vdwg.mxu0
        %2248 = vmatpush.bf16.msra.mxu0 %v1964
        %2249 = vmatpush.bf16.msra.mxu0 %v1956
        %2250 = vmatpush.bf16.msra.mxu0 %v1948
        %2251 = vmatpush.bf16.msra.mxu0 %v1940
        %2252 = vmatpush.bf16.msra.mxu0 %v1932
        %2253 = vmatpush.bf16.msra.mxu0 %v1924
        %2254 = vmatpush.bf16.msra.mxu0 %v1916
        %2255 = vmatpush.bf16.msra.mxu0 %v1908
        %2256 = vmatmul.bf16.gmra.mxu0 %v2037
        %v2257 = vpop.f32.mrf.mxu0
        %v2258 = vadd.f32 %v1984, %v2257
        %v2259 = vpop.f32.mrf.mxu0
        %v2260 = vadd.f32 %v1989, %v2259
        %2261 = vmatmul.bf16.gmra.mxu0 %v2038
        %v2262 = vpop.f32.mrf.mxu0
        %v2263 = vadd.f32 %v1994, %v2262
        %v2264 = vpop.f32.mrf.mxu0
        %v2265 = vadd.f32 %v1999, %v2264
        %2266 = vmatmul.bf16.gmra.mxu0 %v2039
        %v2267 = vpop.f32.mrf.mxu0
        %v2268 = vadd.f32 %v2004, %v2267
        %v2269 = vpop.f32.mrf.mxu0
        %v2270 = vadd.f32 %v2009, %v2269
        %2271 = vmatmul.bf16.gmra.mxu0 %v2040
        %v2272 = vpop.f32.mrf.mxu0
        %v2273 = vadd.f32 %v2014, %v2272
        %v2274 = vpop.f32.mrf.mxu0
        %v2275 = vadd.f32 %v2019, %v2274
        %2276 = vdwg.mxu0
        %v2277 = vpack.c.bf16 %v2084, %v2055
        %v2278 = vpack.c.bf16 %v2142, %v2113
        %v2279 = vpack.c.bf16 %v2200, %v2171
        %v2280 = vpack.c.bf16 %v2258, %v2229
        %v2281 = vpack.c.bf16 %v2086, %v2057
        %v2282 = vpack.c.bf16 %v2144, %v2115
        %v2283 = vpack.c.bf16 %v2202, %v2173
        %v2284 = vpack.c.bf16 %v2260, %v2231
        %v2285 = vpack.c.bf16 %v2089, %v2060
        %v2286 = vpack.c.bf16 %v2147, %v2118
        %v2287 = vpack.c.bf16 %v2205, %v2176
        %v2288 = vpack.c.bf16 %v2263, %v2234
        %v2289 = vpack.c.bf16 %v2091, %v2062
        %v2290 = vpack.c.bf16 %v2149, %v2120
        %v2291 = vpack.c.bf16 %v2207, %v2178
        %v2292 = vpack.c.bf16 %v2265, %v2236
        %v2293 = vpack.c.bf16 %v2094, %v2065
        %v2294 = vpack.c.bf16 %v2152, %v2123
        %v2295 = vpack.c.bf16 %v2210, %v2181
        %v2296 = vpack.c.bf16 %v2268, %v2239
        %v2297 = vpack.c.bf16 %v2096, %v2067
        %v2298 = vpack.c.bf16 %v2154, %v2125
        %v2299 = vpack.c.bf16 %v2212, %v2183
        %v2300 = vpack.c.bf16 %v2270, %v2241
        %v2301 = vpack.c.bf16 %v2099, %v2070
        %v2302 = vpack.c.bf16 %v2157, %v2128
        %v2303 = vpack.c.bf16 %v2215, %v2186
        %v2304 = vpack.c.bf16 %v2273, %v2244
        %v2305 = vpack.c.bf16 %v2101, %v2072
        %v2306 = vpack.c.bf16 %v2159, %v2130
        %v2307 = vpack.c.bf16 %v2217, %v2188
        %v2308 = vpack.c.bf16 %v2275, %v2246
        %v2309 = vunpack.c.l.bf16 %v2277
        %v2310 = vunpack.c.h.bf16 %v2277
        %v2311 = vunpack.c.l.bf16 %v2278
        %v2312 = vunpack.c.h.bf16 %v2278
        %v2313 = vunpack.c.l.bf16 %v2279
        %v2314 = vunpack.c.h.bf16 %v2279
        %v2315 = vunpack.c.l.bf16 %v2280
        %v2316 = vunpack.c.h.bf16 %v2280
        %v2317 = vunpack.c.l.bf16 %v2281
        %v2318 = vunpack.c.h.bf16 %v2281
        %v2319 = vunpack.c.l.bf16 %v2282
        %v2320 = vunpack.c.h.bf16 %v2282
        %v2321 = vunpack.c.l.bf16 %v2283
        %v2322 = vunpack.c.h.bf16 %v2283
        %v2323 = vunpack.c.l.bf16 %v2284
        %v2324 = vunpack.c.h.bf16 %v2284
        %v2325 = vunpack.c.l.bf16 %v2285
        %v2326 = vunpack.c.h.bf16 %v2285
        %v2327 = vunpack.c.l.bf16 %v2286
        %v2328 = vunpack.c.h.bf16 %v2286
        %v2329 = vunpack.c.l.bf16 %v2287
        %v2330 = vunpack.c.h.bf16 %v2287
        %v2331 = vunpack.c.l.bf16 %v2288
        %v2332 = vunpack.c.h.bf16 %v2288
        %v2333 = vunpack.c.l.bf16 %v2289
        %v2334 = vunpack.c.h.bf16 %v2289
        %v2335 = vunpack.c.l.bf16 %v2290
        %v2336 = vunpack.c.h.bf16 %v2290
        %v2337 = vunpack.c.l.bf16 %v2291
        %v2338 = vunpack.c.h.bf16 %v2291
        %v2339 = vunpack.c.l.bf16 %v2292
        %v2340 = vunpack.c.h.bf16 %v2292
        %v2341 = vunpack.c.l.bf16 %v2293
        %v2342 = vunpack.c.h.bf16 %v2293
        %v2343 = vunpack.c.l.bf16 %v2294
        %v2344 = vunpack.c.h.bf16 %v2294
        %v2345 = vunpack.c.l.bf16 %v2295
        %v2346 = vunpack.c.h.bf16 %v2295
        %v2347 = vunpack.c.l.bf16 %v2296
        %v2348 = vunpack.c.h.bf16 %v2296
        %v2349 = vunpack.c.l.bf16 %v2297
        %v2350 = vunpack.c.h.bf16 %v2297
        %v2351 = vunpack.c.l.bf16 %v2298
        %v2352 = vunpack.c.h.bf16 %v2298
        %v2353 = vunpack.c.l.bf16 %v2299
        %v2354 = vunpack.c.h.bf16 %v2299
        %v2355 = vunpack.c.l.bf16 %v2300
        %v2356 = vunpack.c.h.bf16 %v2300
        %v2357 = vunpack.c.l.bf16 %v2301
        %v2358 = vunpack.c.h.bf16 %v2301
        %v2359 = vunpack.c.l.bf16 %v2302
        %v2360 = vunpack.c.h.bf16 %v2302
        %v2361 = vunpack.c.l.bf16 %v2303
        %v2362 = vunpack.c.h.bf16 %v2303
        %v2363 = vunpack.c.l.bf16 %v2304
        %v2364 = vunpack.c.h.bf16 %v2304
        %v2365 = vunpack.c.l.bf16 %v2305
        %v2366 = vunpack.c.h.bf16 %v2305
        %v2367 = vunpack.c.l.bf16 %v2306
        %v2368 = vunpack.c.h.bf16 %v2306
        %v2369 = vunpack.c.l.bf16 %v2307
        %v2370 = vunpack.c.h.bf16 %v2307
        %v2371 = vunpack.c.l.bf16 %v2308
        %v2372 = vunpack.c.h.bf16 %v2308
        %v2373 = vmax.f32 %v2309, 0.0
        %v2374 = vmax.f32 %v2310, 0.0
        %v2375 = vmax.f32 %v2311, 0.0
        %v2376 = vmax.f32 %v2312, 0.0
        %v2377 = vmax.f32 %v2313, 0.0
        %v2378 = vmax.f32 %v2314, 0.0
        %v2379 = vmax.f32 %v2315, 0.0
        %v2380 = vmax.f32 %v2316, 0.0
        %v2381 = vmax.f32 %v2317, 0.0
        %v2382 = vmax.f32 %v2318, 0.0
        %v2383 = vmax.f32 %v2319, 0.0
        %v2384 = vmax.f32 %v2320, 0.0
        %v2385 = vmax.f32 %v2321, 0.0
        %v2386 = vmax.f32 %v2322, 0.0
        %v2387 = vmax.f32 %v2323, 0.0
        %v2388 = vmax.f32 %v2324, 0.0
        %v2389 = vmax.f32 %v2325, 0.0
        %v2390 = vmax.f32 %v2326, 0.0
        %v2391 = vmax.f32 %v2327, 0.0
        %v2392 = vmax.f32 %v2328, 0.0
        %v2393 = vmax.f32 %v2329, 0.0
        %v2394 = vmax.f32 %v2330, 0.0
        %v2395 = vmax.f32 %v2331, 0.0
        %v2396 = vmax.f32 %v2332, 0.0
        %v2397 = vmax.f32 %v2333, 0.0
        %v2398 = vmax.f32 %v2334, 0.0
        %v2399 = vmax.f32 %v2335, 0.0
        %v2400 = vmax.f32 %v2336, 0.0
        %v2401 = vmax.f32 %v2337, 0.0
        %v2402 = vmax.f32 %v2338, 0.0
        %v2403 = vmax.f32 %v2339, 0.0
        %v2404 = vmax.f32 %v2340, 0.0
        %v2405 = vmax.f32 %v2341, 0.0
        %v2406 = vmax.f32 %v2342, 0.0
        %v2407 = vmax.f32 %v2343, 0.0
        %v2408 = vmax.f32 %v2344, 0.0
        %v2409 = vmax.f32 %v2345, 0.0
        %v2410 = vmax.f32 %v2346, 0.0
        %v2411 = vmax.f32 %v2347, 0.0
        %v2412 = vmax.f32 %v2348, 0.0
        %v2413 = vmax.f32 %v2349, 0.0
        %v2414 = vmax.f32 %v2350, 0.0
        %v2415 = vmax.f32 %v2351, 0.0
        %v2416 = vmax.f32 %v2352, 0.0
        %v2417 = vmax.f32 %v2353, 0.0
        %v2418 = vmax.f32 %v2354, 0.0
        %v2419 = vmax.f32 %v2355, 0.0
        %v2420 = vmax.f32 %v2356, 0.0
        %v2421 = vmax.f32 %v2357, 0.0
        %v2422 = vmax.f32 %v2358, 0.0
        %v2423 = vmax.f32 %v2359, 0.0
        %v2424 = vmax.f32 %v2360, 0.0
        %v2425 = vmax.f32 %v2361, 0.0
        %v2426 = vmax.f32 %v2362, 0.0
        %v2427 = vmax.f32 %v2363, 0.0
        %v2428 = vmax.f32 %v2364, 0.0
        %v2429 = vmax.f32 %v2365, 0.0
        %v2430 = vmax.f32 %v2366, 0.0
        %v2431 = vmax.f32 %v2367, 0.0
        %v2432 = vmax.f32 %v2368, 0.0
        %v2433 = vmax.f32 %v2369, 0.0
        %v2434 = vmax.f32 %v2370, 0.0
        %v2435 = vmax.f32 %v2371, 0.0
        %v2436 = vmax.f32 %v2372, 0.0
        %v2437 = vpack.c.bf16 %v2381, %v2373
        %v2438 = vpack.c.bf16 %v2382, %v2374
        %v2439 = vpack.c.bf16 %v2383, %v2375
        %v2440 = vpack.c.bf16 %v2384, %v2376
        %v2441 = vpack.c.bf16 %v2385, %v2377
        %v2442 = vpack.c.bf16 %v2386, %v2378
        %v2443 = vpack.c.bf16 %v2387, %v2379
        %v2444 = vpack.c.bf16 %v2388, %v2380
        %v2445 = vpack.c.bf16 %v2397, %v2389
        %v2446 = vpack.c.bf16 %v2398, %v2390
        %v2447 = vpack.c.bf16 %v2399, %v2391
        %v2448 = vpack.c.bf16 %v2400, %v2392
        %v2449 = vpack.c.bf16 %v2401, %v2393
        %v2450 = vpack.c.bf16 %v2402, %v2394
        %v2451 = vpack.c.bf16 %v2403, %v2395
        %v2452 = vpack.c.bf16 %v2404, %v2396
        %v2453 = vpack.c.bf16 %v2413, %v2405
        %v2454 = vpack.c.bf16 %v2414, %v2406
        %v2455 = vpack.c.bf16 %v2415, %v2407
        %v2456 = vpack.c.bf16 %v2416, %v2408
        %v2457 = vpack.c.bf16 %v2417, %v2409
        %v2458 = vpack.c.bf16 %v2418, %v2410
        %v2459 = vpack.c.bf16 %v2419, %v2411
        %v2460 = vpack.c.bf16 %v2420, %v2412
        %v2461 = vpack.c.bf16 %v2429, %v2421
        %v2462 = vpack.c.bf16 %v2430, %v2422
        %v2463 = vpack.c.bf16 %v2431, %v2423
        %v2464 = vpack.c.bf16 %v2432, %v2424
        %v2465 = vpack.c.bf16 %v2433, %v2425
        %v2466 = vpack.c.bf16 %v2434, %v2426
        %v2467 = vpack.c.bf16 %v2435, %v2427
        %v2468 = vpack.c.bf16 %v2436, %v2428
        %v2469 = vld [vmem:[%s7] sm:$0xf]
        %v2470 = vld [vmem:[%s7 + $0x4] sm:$0xf]
        %v2471 = vld [vmem:[%s7 + $0x8] sm:$0xf]
        %v2472 = vld [vmem:[%s7 + $0xc] sm:$0xf]
        %v2473 = vld [vmem:[%s7 + $0x10] sm:$0xf]
        %v2474 = vld [vmem:[%s7 + $0x14] sm:$0xf]
        %v2475 = vld [vmem:[%s7 + $0x18] sm:$0xf]
        %v2476 = vld [vmem:[%s7 + $0x1c] sm:$0xf]
        %v2477 = vld [vmem:[%s8] sm:$0xff]
        %v2478 = vld [vmem:[%s8 + $0x8] sm:$0xff]
        %v2479 = vld [vmem:[%s8 + $0x10] sm:$0xff]
        %v2480 = vld [vmem:[%s8 + $0x18] sm:$0xff]
        %v2481 = vld [vmem:[%s8 + $0x20] sm:$0xff]
        %v2482 = vld [vmem:[%s8 + $0x28] sm:$0xff]
        %v2483 = vld [vmem:[%s8 + $0x30] sm:$0xff]
        %v2484 = vld [vmem:[%s8 + $0x38] sm:$0xff]
        %2486 = vset.pattern.permute.xlu0 0
        %2487 = vperm.xlu0 %2486, %v2477
        %v2488 = vpop.permute.xlu0 %2487
        %2491 = vset.pattern.permute.xlu0 0
        %2492 = vperm.xlu0 %2491, %v2478
        %v2493 = vpop.permute.xlu0 %2492
        %2496 = vset.pattern.permute.xlu0 0
        %2497 = vperm.xlu0 %2496, %v2479
        %v2498 = vpop.permute.xlu0 %2497
        %2501 = vset.pattern.permute.xlu0 0
        %2502 = vperm.xlu0 %2501, %v2480
        %v2503 = vpop.permute.xlu0 %2502
        %2506 = vset.pattern.permute.xlu0 0
        %2507 = vperm.xlu0 %2506, %v2481
        %v2508 = vpop.permute.xlu0 %2507
        %2511 = vset.pattern.permute.xlu0 0
        %2512 = vperm.xlu0 %2511, %v2482
        %v2513 = vpop.permute.xlu0 %2512
        %2516 = vset.pattern.permute.xlu0 0
        %2517 = vperm.xlu0 %2516, %v2483
        %v2518 = vpop.permute.xlu0 %2517
        %2521 = vset.pattern.permute.xlu0 0
        %2522 = vperm.xlu0 %2521, %v2484
        %v2523 = vpop.permute.xlu0 %2522
        %v2533 = vunpack.c.l.b16 %v2469
        %v2534 = vunpack.c.l.b16 %v2470
        %v2535 = vunpack.c.l.b16 %v2471
        %v2536 = vunpack.c.l.b16 %v2472
        %v2537 = vunpack.c.l.b16 %v2473
        %v2538 = vunpack.c.l.b16 %v2474
        %v2539 = vunpack.c.l.b16 %v2475
        %v2540 = vunpack.c.l.b16 %v2476
        %v2541 = vpack.c.b16 %v2534, %v2533
        %v2542 = vpack.c.b16 %v2536, %v2535
        %v2543 = vpack.c.b16 %v2538, %v2537
        %v2544 = vpack.c.b16 %v2540, %v2539
        %vm2545 = vcmask 523264
        %v2547 = vsel %vm2545, %v2541, 0
        %v2550 = vsel %vm2545, %v2542, 0
        %v2553 = vsel %vm2545, %v2543, 0
        %v2556 = vsel %vm2545, %v2544, 0
        %2558 = vmatpush.bf16.msra.mxu0 0
        %2559 = vmatpush.bf16.msra.mxu0 0
        %2560 = vmatpush.bf16.msra.mxu0 0
        %2561 = vmatpush.bf16.msra.mxu0 0
        %2562 = vmatpush.bf16.msra.mxu0 %v2461
        %2563 = vmatpush.bf16.msra.mxu0 %v2453
        %2564 = vmatpush.bf16.msra.mxu0 %v2445
        %2565 = vmatpush.bf16.msra.mxu0 %v2437
        %2566 = vmatmul.bf16.gmra.mxu0 %v2547
        %v2567 = vpop.f32.mrf.mxu0
        %v2568 = vadd.f32 %v2488, %v2567
        %v2569 = vpop.f32.mrf.mxu0
        %v2570 = vadd.f32 %v2493, %v2569
        %2571 = vmatmul.bf16.gmra.mxu0 %v2550
        %v2572 = vpop.f32.mrf.mxu0
        %v2573 = vadd.f32 %v2498, %v2572
        %v2574 = vpop.f32.mrf.mxu0
        %v2575 = vadd.f32 %v2503, %v2574
        %2576 = vmatmul.bf16.gmra.mxu0 %v2553
        %v2577 = vpop.f32.mrf.mxu0
        %v2578 = vadd.f32 %v2508, %v2577
        %v2579 = vpop.f32.mrf.mxu0
        %v2580 = vadd.f32 %v2513, %v2579
        %2581 = vmatmul.bf16.gmra.mxu0 %v2556
        %v2582 = vpop.f32.mrf.mxu0
        %v2583 = vadd.f32 %v2518, %v2582
        %v2584 = vpop.f32.mrf.mxu0
        %v2585 = vadd.f32 %v2523, %v2584
        %2586 = vdwg.mxu0
        %2587 = vmatpush.bf16.msra.mxu0 0
        %2588 = vmatpush.bf16.msra.mxu0 0
        %2589 = vmatpush.bf16.msra.mxu0 0
        %2590 = vmatpush.bf16.msra.mxu0 0
        %2591 = vmatpush.bf16.msra.mxu0 %v2462
        %2592 = vmatpush.bf16.msra.mxu0 %v2454
        %2593 = vmatpush.bf16.msra.mxu0 %v2446
        %2594 = vmatpush.bf16.msra.mxu0 %v2438
        %2595 = vmatmul.bf16.gmra.mxu0 %v2547
        %v2596 = vpop.f32.mrf.mxu0
        %v2597 = vadd.f32 %v2488, %v2596
        %v2598 = vpop.f32.mrf.mxu0
        %v2599 = vadd.f32 %v2493, %v2598
        %2600 = vmatmul.bf16.gmra.mxu0 %v2550
        %v2601 = vpop.f32.mrf.mxu0
        %v2602 = vadd.f32 %v2498, %v2601
        %v2603 = vpop.f32.mrf.mxu0
        %v2604 = vadd.f32 %v2503, %v2603
        %2605 = vmatmul.bf16.gmra.mxu0 %v2553
        %v2606 = vpop.f32.mrf.mxu0
        %v2607 = vadd.f32 %v2508, %v2606
        %v2608 = vpop.f32.mrf.mxu0
        %v2609 = vadd.f32 %v2513, %v2608
        %2610 = vmatmul.bf16.gmra.mxu0 %v2556
        %v2611 = vpop.f32.mrf.mxu0
        %v2612 = vadd.f32 %v2518, %v2611
        %v2613 = vpop.f32.mrf.mxu0
        %v2614 = vadd.f32 %v2523, %v2613
        %2615 = vdwg.mxu0
        %2616 = vmatpush.bf16.msra.mxu0 0
        %2617 = vmatpush.bf16.msra.mxu0 0
        %2618 = vmatpush.bf16.msra.mxu0 0
        %2619 = vmatpush.bf16.msra.mxu0 0
        %2620 = vmatpush.bf16.msra.mxu0 %v2463
        %2621 = vmatpush.bf16.msra.mxu0 %v2455
        %2622 = vmatpush.bf16.msra.mxu0 %v2447
        %2623 = vmatpush.bf16.msra.mxu0 %v2439
        %2624 = vmatmul.bf16.gmra.mxu0 %v2547
        %v2625 = vpop.f32.mrf.mxu0
        %v2626 = vadd.f32 %v2488, %v2625
        %v2627 = vpop.f32.mrf.mxu0
        %v2628 = vadd.f32 %v2493, %v2627
        %2629 = vmatmul.bf16.gmra.mxu0 %v2550
        %v2630 = vpop.f32.mrf.mxu0
        %v2631 = vadd.f32 %v2498, %v2630
        %v2632 = vpop.f32.mrf.mxu0
        %v2633 = vadd.f32 %v2503, %v2632
        %2634 = vmatmul.bf16.gmra.mxu0 %v2553
        %v2635 = vpop.f32.mrf.mxu0
        %v2636 = vadd.f32 %v2508, %v2635
        %v2637 = vpop.f32.mrf.mxu0
        %v2638 = vadd.f32 %v2513, %v2637
        %2639 = vmatmul.bf16.gmra.mxu0 %v2556
        %v2640 = vpop.f32.mrf.mxu0
        %v2641 = vadd.f32 %v2518, %v2640
        %v2642 = vpop.f32.mrf.mxu0
        %v2643 = vadd.f32 %v2523, %v2642
        %2644 = vdwg.mxu0
        %2645 = vmatpush.bf16.msra.mxu0 0
        %2646 = vmatpush.bf16.msra.mxu0 0
        %2647 = vmatpush.bf16.msra.mxu0 0
        %2648 = vmatpush.bf16.msra.mxu0 0
        %2649 = vmatpush.bf16.msra.mxu0 %v2464
        %2650 = vmatpush.bf16.msra.mxu0 %v2456
        %2651 = vmatpush.bf16.msra.mxu0 %v2448
        %2652 = vmatpush.bf16.msra.mxu0 %v2440
        %2653 = vmatmul.bf16.gmra.mxu0 %v2547
        %v2654 = vpop.f32.mrf.mxu0
        %v2655 = vadd.f32 %v2488, %v2654
        %v2656 = vpop.f32.mrf.mxu0
        %v2657 = vadd.f32 %v2493, %v2656
        %2658 = vmatmul.bf16.gmra.mxu0 %v2550
        %v2659 = vpop.f32.mrf.mxu0
        %v2660 = vadd.f32 %v2498, %v2659
        %v2661 = vpop.f32.mrf.mxu0
        %v2662 = vadd.f32 %v2503, %v2661
        %2663 = vmatmul.bf16.gmra.mxu0 %v2553
        %v2664 = vpop.f32.mrf.mxu0
        %v2665 = vadd.f32 %v2508, %v2664
        %v2666 = vpop.f32.mrf.mxu0
        %v2667 = vadd.f32 %v2513, %v2666
        %2668 = vmatmul.bf16.gmra.mxu0 %v2556
        %v2669 = vpop.f32.mrf.mxu0
        %v2670 = vadd.f32 %v2518, %v2669
        %v2671 = vpop.f32.mrf.mxu0
        %v2672 = vadd.f32 %v2523, %v2671
        %2673 = vdwg.mxu0
        %2674 = vmatpush.bf16.msra.mxu0 0
        %2675 = vmatpush.bf16.msra.mxu0 0
        %2676 = vmatpush.bf16.msra.mxu0 0
        %2677 = vmatpush.bf16.msra.mxu0 0
        %2678 = vmatpush.bf16.msra.mxu0 %v2465
        %2679 = vmatpush.bf16.msra.mxu0 %v2457
        %2680 = vmatpush.bf16.msra.mxu0 %v2449
        %2681 = vmatpush.bf16.msra.mxu0 %v2441
        %2682 = vmatmul.bf16.gmra.mxu0 %v2547
        %v2683 = vpop.f32.mrf.mxu0
        %v2684 = vadd.f32 %v2488, %v2683
        %v2685 = vpop.f32.mrf.mxu0
        %v2686 = vadd.f32 %v2493, %v2685
        %2687 = vmatmul.bf16.gmra.mxu0 %v2550
        %v2688 = vpop.f32.mrf.mxu0
        %v2689 = vadd.f32 %v2498, %v2688
        %v2690 = vpop.f32.mrf.mxu0
        %v2691 = vadd.f32 %v2503, %v2690
        %2692 = vmatmul.bf16.gmra.mxu0 %v2553
        %v2693 = vpop.f32.mrf.mxu0
        %v2694 = vadd.f32 %v2508, %v2693
        %v2695 = vpop.f32.mrf.mxu0
        %v2696 = vadd.f32 %v2513, %v2695
        %2697 = vmatmul.bf16.gmra.mxu0 %v2556
        %v2698 = vpop.f32.mrf.mxu0
        %v2699 = vadd.f32 %v2518, %v2698
        %v2700 = vpop.f32.mrf.mxu0
        %v2701 = vadd.f32 %v2523, %v2700
        %2702 = vdwg.mxu0
        %2703 = vmatpush.bf16.msra.mxu0 0
        %2704 = vmatpush.bf16.msra.mxu0 0
        %2705 = vmatpush.bf16.msra.mxu0 0
        %2706 = vmatpush.bf16.msra.mxu0 0
        %2707 = vmatpush.bf16.msra.mxu0 %v2466
        %2708 = vmatpush.bf16.msra.mxu0 %v2458
        %2709 = vmatpush.bf16.msra.mxu0 %v2450
        %2710 = vmatpush.bf16.msra.mxu0 %v2442
        %2711 = vmatmul.bf16.gmra.mxu0 %v2547
        %v2712 = vpop.f32.mrf.mxu0
        %v2713 = vadd.f32 %v2488, %v2712
        %v2714 = vpop.f32.mrf.mxu0
        %v2715 = vadd.f32 %v2493, %v2714
        %2716 = vmatmul.bf16.gmra.mxu0 %v2550
        %v2717 = vpop.f32.mrf.mxu0
        %v2718 = vadd.f32 %v2498, %v2717
        %v2719 = vpop.f32.mrf.mxu0
        %v2720 = vadd.f32 %v2503, %v2719
        %2721 = vmatmul.bf16.gmra.mxu0 %v2553
        %v2722 = vpop.f32.mrf.mxu0
        %v2723 = vadd.f32 %v2508, %v2722
        %v2724 = vpop.f32.mrf.mxu0
        %v2725 = vadd.f32 %v2513, %v2724
        %2726 = vmatmul.bf16.gmra.mxu0 %v2556
        %v2727 = vpop.f32.mrf.mxu0
        %v2728 = vadd.f32 %v2518, %v2727
        %v2729 = vpop.f32.mrf.mxu0
        %v2730 = vadd.f32 %v2523, %v2729
        %2731 = vdwg.mxu0
        %2732 = vmatpush.bf16.msra.mxu0 0
        %2733 = vmatpush.bf16.msra.mxu0 0
        %2734 = vmatpush.bf16.msra.mxu0 0
        %2735 = vmatpush.bf16.msra.mxu0 0
        %2736 = vmatpush.bf16.msra.mxu0 %v2467
        %2737 = vmatpush.bf16.msra.mxu0 %v2459
        %2738 = vmatpush.bf16.msra.mxu0 %v2451
        %2739 = vmatpush.bf16.msra.mxu0 %v2443
        %2740 = vmatmul.bf16.gmra.mxu0 %v2547
        %v2741 = vpop.f32.mrf.mxu0
        %v2742 = vadd.f32 %v2488, %v2741
        %v2743 = vpop.f32.mrf.mxu0
        %v2744 = vadd.f32 %v2493, %v2743
        %2745 = vmatmul.bf16.gmra.mxu0 %v2550
        %v2746 = vpop.f32.mrf.mxu0
        %v2747 = vadd.f32 %v2498, %v2746
        %v2748 = vpop.f32.mrf.mxu0
        %v2749 = vadd.f32 %v2503, %v2748
        %2750 = vmatmul.bf16.gmra.mxu0 %v2553
        %v2751 = vpop.f32.mrf.mxu0
        %v2752 = vadd.f32 %v2508, %v2751
        %v2753 = vpop.f32.mrf.mxu0
        %v2754 = vadd.f32 %v2513, %v2753
        %2755 = vmatmul.bf16.gmra.mxu0 %v2556
        %v2756 = vpop.f32.mrf.mxu0
        %v2757 = vadd.f32 %v2518, %v2756
        %v2758 = vpop.f32.mrf.mxu0
        %v2759 = vadd.f32 %v2523, %v2758
        %2760 = vdwg.mxu0
        %2761 = vmatpush.bf16.msra.mxu0 0
        %2762 = vmatpush.bf16.msra.mxu0 0
        %2763 = vmatpush.bf16.msra.mxu0 0
        %2764 = vmatpush.bf16.msra.mxu0 0
        %2765 = vmatpush.bf16.msra.mxu0 %v2468
        %2766 = vmatpush.bf16.msra.mxu0 %v2460
        %2767 = vmatpush.bf16.msra.mxu0 %v2452
        %2768 = vmatpush.bf16.msra.mxu0 %v2444
        %2769 = vmatmul.bf16.gmra.mxu0 %v2547
        %v2770 = vpop.f32.mrf.mxu0
        %v2771 = vadd.f32 %v2488, %v2770
        %v2772 = vpop.f32.mrf.mxu0
        %v2773 = vadd.f32 %v2493, %v2772
        %2774 = vmatmul.bf16.gmra.mxu0 %v2550
        %v2775 = vpop.f32.mrf.mxu0
        %v2776 = vadd.f32 %v2498, %v2775
        %v2777 = vpop.f32.mrf.mxu0
        %v2778 = vadd.f32 %v2503, %v2777
        %2779 = vmatmul.bf16.gmra.mxu0 %v2553
        %v2780 = vpop.f32.mrf.mxu0
        %v2781 = vadd.f32 %v2508, %v2780
        %v2782 = vpop.f32.mrf.mxu0
        %v2783 = vadd.f32 %v2513, %v2782
        %2784 = vmatmul.bf16.gmra.mxu0 %v2556
        %v2785 = vpop.f32.mrf.mxu0
        %v2786 = vadd.f32 %v2518, %v2785
        %v2787 = vpop.f32.mrf.mxu0
        %v2788 = vadd.f32 %v2523, %v2787
        %2789 = vdwg.mxu0
        %v2790 = vpack.c.bf16 %v2597, %v2568
        %v2791 = vpack.c.bf16 %v2655, %v2626
        %v2792 = vpack.c.bf16 %v2713, %v2684
        %v2793 = vpack.c.bf16 %v2771, %v2742
        %v2794 = vpack.c.bf16 %v2599, %v2570
        %v2795 = vpack.c.bf16 %v2657, %v2628
        %v2796 = vpack.c.bf16 %v2715, %v2686
        %v2797 = vpack.c.bf16 %v2773, %v2744
        %v2798 = vpack.c.bf16 %v2602, %v2573
        %v2799 = vpack.c.bf16 %v2660, %v2631
        %v2800 = vpack.c.bf16 %v2718, %v2689
        %v2801 = vpack.c.bf16 %v2776, %v2747
        %v2802 = vpack.c.bf16 %v2604, %v2575
        %v2803 = vpack.c.bf16 %v2662, %v2633
        %v2804 = vpack.c.bf16 %v2720, %v2691
        %v2805 = vpack.c.bf16 %v2778, %v2749
        %v2806 = vpack.c.bf16 %v2607, %v2578
        %v2807 = vpack.c.bf16 %v2665, %v2636
        %v2808 = vpack.c.bf16 %v2723, %v2694
        %v2809 = vpack.c.bf16 %v2781, %v2752
        %v2810 = vpack.c.bf16 %v2609, %v2580
        %v2811 = vpack.c.bf16 %v2667, %v2638
        %v2812 = vpack.c.bf16 %v2725, %v2696
        %v2813 = vpack.c.bf16 %v2783, %v2754
        %v2814 = vpack.c.bf16 %v2612, %v2583
        %v2815 = vpack.c.bf16 %v2670, %v2641
        %v2816 = vpack.c.bf16 %v2728, %v2699
        %v2817 = vpack.c.bf16 %v2786, %v2757
        %v2818 = vpack.c.bf16 %v2614, %v2585
        %v2819 = vpack.c.bf16 %v2672, %v2643
        %v2820 = vpack.c.bf16 %v2730, %v2701
        %v2821 = vpack.c.bf16 %v2788, %v2759
        %v2822 = vunpack.c.l.bf16 %v2790
        %v2823 = vunpack.c.h.bf16 %v2790
        %v2824 = vunpack.c.l.bf16 %v2791
        %v2825 = vunpack.c.h.bf16 %v2791
        %v2826 = vunpack.c.l.bf16 %v2792
        %v2827 = vunpack.c.h.bf16 %v2792
        %v2828 = vunpack.c.l.bf16 %v2793
        %v2829 = vunpack.c.h.bf16 %v2793
        %v2830 = vunpack.c.l.bf16 %v2794
        %v2831 = vunpack.c.h.bf16 %v2794
        %v2832 = vunpack.c.l.bf16 %v2795
        %v2833 = vunpack.c.h.bf16 %v2795
        %v2834 = vunpack.c.l.bf16 %v2796
        %v2835 = vunpack.c.h.bf16 %v2796
        %v2836 = vunpack.c.l.bf16 %v2797
        %v2837 = vunpack.c.h.bf16 %v2797
        %v2838 = vunpack.c.l.bf16 %v2798
        %v2839 = vunpack.c.h.bf16 %v2798
        %v2840 = vunpack.c.l.bf16 %v2799
        %v2841 = vunpack.c.h.bf16 %v2799
        %v2842 = vunpack.c.l.bf16 %v2800
        %v2843 = vunpack.c.h.bf16 %v2800
        %v2844 = vunpack.c.l.bf16 %v2801
        %v2845 = vunpack.c.h.bf16 %v2801
        %v2846 = vunpack.c.l.bf16 %v2802
        %v2847 = vunpack.c.h.bf16 %v2802
        %v2848 = vunpack.c.l.bf16 %v2803
        %v2849 = vunpack.c.h.bf16 %v2803
        %v2850 = vunpack.c.l.bf16 %v2804
        %v2851 = vunpack.c.h.bf16 %v2804
        %v2852 = vunpack.c.l.bf16 %v2805
        %v2853 = vunpack.c.h.bf16 %v2805
        %v2854 = vunpack.c.l.bf16 %v2806
        %v2855 = vunpack.c.h.bf16 %v2806
        %v2856 = vunpack.c.l.bf16 %v2807
        %v2857 = vunpack.c.h.bf16 %v2807
        %v2858 = vunpack.c.l.bf16 %v2808
        %v2859 = vunpack.c.h.bf16 %v2808
        %v2860 = vunpack.c.l.bf16 %v2809
        %v2861 = vunpack.c.h.bf16 %v2809
        %v2862 = vunpack.c.l.bf16 %v2810
        %v2863 = vunpack.c.h.bf16 %v2810
        %v2864 = vunpack.c.l.bf16 %v2811
        %v2865 = vunpack.c.h.bf16 %v2811
        %v2866 = vunpack.c.l.bf16 %v2812
        %v2867 = vunpack.c.h.bf16 %v2812
        %v2868 = vunpack.c.l.bf16 %v2813
        %v2869 = vunpack.c.h.bf16 %v2813
        %v2870 = vunpack.c.l.bf16 %v2814
        %v2871 = vunpack.c.h.bf16 %v2814
        %v2872 = vunpack.c.l.bf16 %v2815
        %v2873 = vunpack.c.h.bf16 %v2815
        %v2874 = vunpack.c.l.bf16 %v2816
        %v2875 = vunpack.c.h.bf16 %v2816
        %v2876 = vunpack.c.l.bf16 %v2817
        %v2877 = vunpack.c.h.bf16 %v2817
        %v2878 = vunpack.c.l.bf16 %v2818
        %v2879 = vunpack.c.h.bf16 %v2818
        %v2880 = vunpack.c.l.bf16 %v2819
        %v2881 = vunpack.c.h.bf16 %v2819
        %v2882 = vunpack.c.l.bf16 %v2820
        %v2883 = vunpack.c.h.bf16 %v2820
        %v2884 = vunpack.c.l.bf16 %v2821
        %v2885 = vunpack.c.h.bf16 %v2821
        %v2886 = vmax.f32 %v2822, 0.0
        %v2887 = vmax.f32 %v2823, 0.0
        %v2888 = vmax.f32 %v2824, 0.0
        %v2889 = vmax.f32 %v2825, 0.0
        %v2890 = vmax.f32 %v2826, 0.0
        %v2891 = vmax.f32 %v2827, 0.0
        %v2892 = vmax.f32 %v2828, 0.0
        %v2893 = vmax.f32 %v2829, 0.0
        %v2894 = vmax.f32 %v2830, 0.0
        %v2895 = vmax.f32 %v2831, 0.0
        %v2896 = vmax.f32 %v2832, 0.0
        %v2897 = vmax.f32 %v2833, 0.0
        %v2898 = vmax.f32 %v2834, 0.0
        %v2899 = vmax.f32 %v2835, 0.0
        %v2900 = vmax.f32 %v2836, 0.0
        %v2901 = vmax.f32 %v2837, 0.0
        %v2902 = vmax.f32 %v2838, 0.0
        %v2903 = vmax.f32 %v2839, 0.0
        %v2904 = vmax.f32 %v2840, 0.0
        %v2905 = vmax.f32 %v2841, 0.0
        %v2906 = vmax.f32 %v2842, 0.0
        %v2907 = vmax.f32 %v2843, 0.0
        %v2908 = vmax.f32 %v2844, 0.0
        %v2909 = vmax.f32 %v2845, 0.0
        %v2910 = vmax.f32 %v2846, 0.0
        %v2911 = vmax.f32 %v2847, 0.0
        %v2912 = vmax.f32 %v2848, 0.0
        %v2913 = vmax.f32 %v2849, 0.0
        %v2914 = vmax.f32 %v2850, 0.0
        %v2915 = vmax.f32 %v2851, 0.0
        %v2916 = vmax.f32 %v2852, 0.0
        %v2917 = vmax.f32 %v2853, 0.0
        %v2918 = vmax.f32 %v2854, 0.0
        %v2919 = vmax.f32 %v2855, 0.0
        %v2920 = vmax.f32 %v2856, 0.0
        %v2921 = vmax.f32 %v2857, 0.0
        %v2922 = vmax.f32 %v2858, 0.0
        %v2923 = vmax.f32 %v2859, 0.0
        %v2924 = vmax.f32 %v2860, 0.0
        %v2925 = vmax.f32 %v2861, 0.0
        %v2926 = vmax.f32 %v2862, 0.0
        %v2927 = vmax.f32 %v2863, 0.0
        %v2928 = vmax.f32 %v2864, 0.0
        %v2929 = vmax.f32 %v2865, 0.0
        %v2930 = vmax.f32 %v2866, 0.0
        %v2931 = vmax.f32 %v2867, 0.0
        %v2932 = vmax.f32 %v2868, 0.0
        %v2933 = vmax.f32 %v2869, 0.0
        %v2934 = vmax.f32 %v2870, 0.0
        %v2935 = vmax.f32 %v2871, 0.0
        %v2936 = vmax.f32 %v2872, 0.0
        %v2937 = vmax.f32 %v2873, 0.0
        %v2938 = vmax.f32 %v2874, 0.0
        %v2939 = vmax.f32 %v2875, 0.0
        %v2940 = vmax.f32 %v2876, 0.0
        %v2941 = vmax.f32 %v2877, 0.0
        %v2942 = vmax.f32 %v2878, 0.0
        %v2943 = vmax.f32 %v2879, 0.0
        %v2944 = vmax.f32 %v2880, 0.0
        %v2945 = vmax.f32 %v2881, 0.0
        %v2946 = vmax.f32 %v2882, 0.0
        %v2947 = vmax.f32 %v2883, 0.0
        %v2948 = vmax.f32 %v2884, 0.0
        %v2949 = vmax.f32 %v2885, 0.0
        %v2950 = vpack.c.bf16 %v2894, %v2886
        %v2951 = vpack.c.bf16 %v2895, %v2887
        %v2952 = vpack.c.bf16 %v2896, %v2888
        %v2953 = vpack.c.bf16 %v2897, %v2889
        %v2954 = vpack.c.bf16 %v2898, %v2890
        %v2955 = vpack.c.bf16 %v2899, %v2891
        %v2956 = vpack.c.bf16 %v2900, %v2892
        %v2957 = vpack.c.bf16 %v2901, %v2893
        %v2958 = vpack.c.bf16 %v2910, %v2902
        %v2959 = vpack.c.bf16 %v2911, %v2903
        %v2960 = vpack.c.bf16 %v2912, %v2904
        %v2961 = vpack.c.bf16 %v2913, %v2905
        %v2962 = vpack.c.bf16 %v2914, %v2906
        %v2963 = vpack.c.bf16 %v2915, %v2907
        %v2964 = vpack.c.bf16 %v2916, %v2908
        %v2965 = vpack.c.bf16 %v2917, %v2909
        %v2966 = vpack.c.bf16 %v2926, %v2918
        %v2967 = vpack.c.bf16 %v2927, %v2919
        %v2968 = vpack.c.bf16 %v2928, %v2920
        %v2969 = vpack.c.bf16 %v2929, %v2921
        %v2970 = vpack.c.bf16 %v2930, %v2922
        %v2971 = vpack.c.bf16 %v2931, %v2923
        %v2972 = vpack.c.bf16 %v2932, %v2924
        %v2973 = vpack.c.bf16 %v2933, %v2925
        %v2974 = vpack.c.bf16 %v2942, %v2934
        %v2975 = vpack.c.bf16 %v2943, %v2935
        %v2976 = vpack.c.bf16 %v2944, %v2936
        %v2977 = vpack.c.bf16 %v2945, %v2937
        %v2978 = vpack.c.bf16 %v2946, %v2938
        %v2979 = vpack.c.bf16 %v2947, %v2939
        %v2980 = vpack.c.bf16 %v2948, %v2940
        %v2981 = vpack.c.bf16 %v2949, %v2941
        %v2982 = vld [vmem:[%s9] sm:$0xf]
        %v2983 = vld [vmem:[%s10] sm:$0xff]
        %2985 = vset.pattern.permute.xlu0 0
        %2986 = vperm.xlu0 %2985, %v2983
        %v2987 = vpop.permute.xlu0 %2986
        %v2990 = vsel %vm2545, %v2982, 0
        %2992 = vmatpush.bf16.msra.mxu0 0
        %2993 = vmatpush.bf16.msra.mxu0 0
        %2994 = vmatpush.bf16.msra.mxu0 0
        %2995 = vmatpush.bf16.msra.mxu0 0
        %2996 = vmatpush.bf16.msra.mxu0 %v2974
        %2997 = vmatpush.bf16.msra.mxu0 %v2966
        %2998 = vmatpush.bf16.msra.mxu0 %v2958
        %2999 = vmatpush.bf16.msra.mxu0 %v2950
        %3000 = vmatmul.bf16.gmra.mxu0 %v2990
        %v3001 = vpop.f32.mrf.mxu0
        %v3002 = vadd.f32 %v2987, %v3001
        %v3003 = vpop.f32.mrf.mxu0
        %3004 = vdwg.mxu0
        %3005 = vmatpush.bf16.msra.mxu0 0
        %3006 = vmatpush.bf16.msra.mxu0 0
        %3007 = vmatpush.bf16.msra.mxu0 0
        %3008 = vmatpush.bf16.msra.mxu0 0
        %3009 = vmatpush.bf16.msra.mxu0 %v2975
        %3010 = vmatpush.bf16.msra.mxu0 %v2967
        %3011 = vmatpush.bf16.msra.mxu0 %v2959
        %3012 = vmatpush.bf16.msra.mxu0 %v2951
        %3013 = vmatmul.bf16.gmra.mxu0 %v2990
        %v3014 = vpop.f32.mrf.mxu0
        %v3015 = vadd.f32 %v2987, %v3014
        %v3016 = vpop.f32.mrf.mxu0
        %3017 = vdwg.mxu0
        %3018 = vmatpush.bf16.msra.mxu0 0
        %3019 = vmatpush.bf16.msra.mxu0 0
        %3020 = vmatpush.bf16.msra.mxu0 0
        %3021 = vmatpush.bf16.msra.mxu0 0
        %3022 = vmatpush.bf16.msra.mxu0 %v2976
        %3023 = vmatpush.bf16.msra.mxu0 %v2968
        %3024 = vmatpush.bf16.msra.mxu0 %v2960
        %3025 = vmatpush.bf16.msra.mxu0 %v2952
        %3026 = vmatmul.bf16.gmra.mxu0 %v2990
        %v3027 = vpop.f32.mrf.mxu0
        %v3028 = vadd.f32 %v2987, %v3027
        %v3029 = vpop.f32.mrf.mxu0
        %3030 = vdwg.mxu0
        %3031 = vmatpush.bf16.msra.mxu0 0
        %3032 = vmatpush.bf16.msra.mxu0 0
        %3033 = vmatpush.bf16.msra.mxu0 0
        %3034 = vmatpush.bf16.msra.mxu0 0
        %3035 = vmatpush.bf16.msra.mxu0 %v2977
        %3036 = vmatpush.bf16.msra.mxu0 %v2969
        %3037 = vmatpush.bf16.msra.mxu0 %v2961
        %3038 = vmatpush.bf16.msra.mxu0 %v2953
        %3039 = vmatmul.bf16.gmra.mxu0 %v2990
        %v3040 = vpop.f32.mrf.mxu0
        %v3041 = vadd.f32 %v2987, %v3040
        %v3042 = vpop.f32.mrf.mxu0
        %3043 = vdwg.mxu0
        %3044 = vmatpush.bf16.msra.mxu0 0
        %3045 = vmatpush.bf16.msra.mxu0 0
        %3046 = vmatpush.bf16.msra.mxu0 0
        %3047 = vmatpush.bf16.msra.mxu0 0
        %3048 = vmatpush.bf16.msra.mxu0 %v2978
        %3049 = vmatpush.bf16.msra.mxu0 %v2970
        %3050 = vmatpush.bf16.msra.mxu0 %v2962
        %3051 = vmatpush.bf16.msra.mxu0 %v2954
        %3052 = vmatmul.bf16.gmra.mxu0 %v2990
        %v3053 = vpop.f32.mrf.mxu0
        %v3054 = vadd.f32 %v2987, %v3053
        %v3055 = vpop.f32.mrf.mxu0
        %3056 = vdwg.mxu0
        %3057 = vmatpush.bf16.msra.mxu0 0
        %3058 = vmatpush.bf16.msra.mxu0 0
        %3059 = vmatpush.bf16.msra.mxu0 0
        %3060 = vmatpush.bf16.msra.mxu0 0
        %3061 = vmatpush.bf16.msra.mxu0 %v2979
        %3062 = vmatpush.bf16.msra.mxu0 %v2971
        %3063 = vmatpush.bf16.msra.mxu0 %v2963
        %3064 = vmatpush.bf16.msra.mxu0 %v2955
        %3065 = vmatmul.bf16.gmra.mxu0 %v2990
        %v3066 = vpop.f32.mrf.mxu0
        %v3067 = vadd.f32 %v2987, %v3066
        %v3068 = vpop.f32.mrf.mxu0
        %3069 = vdwg.mxu0
        %3070 = vmatpush.bf16.msra.mxu0 0
        %3071 = vmatpush.bf16.msra.mxu0 0
        %3072 = vmatpush.bf16.msra.mxu0 0
        %3073 = vmatpush.bf16.msra.mxu0 0
        %3074 = vmatpush.bf16.msra.mxu0 %v2980
        %3075 = vmatpush.bf16.msra.mxu0 %v2972
        %3076 = vmatpush.bf16.msra.mxu0 %v2964
        %3077 = vmatpush.bf16.msra.mxu0 %v2956
        %3078 = vmatmul.bf16.gmra.mxu0 %v2990
        %v3079 = vpop.f32.mrf.mxu0
        %v3080 = vadd.f32 %v2987, %v3079
        %v3081 = vpop.f32.mrf.mxu0
        %3082 = vdwg.mxu0
        %3083 = vmatpush.bf16.msra.mxu0 0
        %3084 = vmatpush.bf16.msra.mxu0 0
        %3085 = vmatpush.bf16.msra.mxu0 0
        %3086 = vmatpush.bf16.msra.mxu0 0
        %3087 = vmatpush.bf16.msra.mxu0 %v2981
        %3088 = vmatpush.bf16.msra.mxu0 %v2973
        %3089 = vmatpush.bf16.msra.mxu0 %v2965
        %3090 = vmatpush.bf16.msra.mxu0 %v2957
        %3091 = vmatmul.bf16.gmra.mxu0 %v2990
        %v3092 = vpop.f32.mrf.mxu0
        %v3093 = vadd.f32 %v2987, %v3092
        %v3094 = vpop.f32.mrf.mxu0
        %3095 = vdwg.mxu0
        %v3096 = vmax.f32 %v3002, 0.0
        %v3097 = vmax.f32 %v3015, 0.0
        %v3098 = vmax.f32 %v3028, 0.0
        %v3099 = vmax.f32 %v3041, 0.0
        %v3100 = vmax.f32 %v3054, 0.0
        %v3101 = vmax.f32 %v3067, 0.0
        %v3102 = vmax.f32 %v3080, 0.0
        %v3103 = vmax.f32 %v3093, 0.0
        %v3104 = vld [vmem:[%s11] sm:$0xff]
        %3106 = vset.pattern.permute.xlu0 0
        %3107 = vperm.xlu0 %3106, %v3104
        %v3108 = vpop.permute.xlu0 %3107
        %v3110 = vmul.f32 %v3108, %v3096
        %v3111 = vmul.f32 %v3108, %v3097
        %v3112 = vmul.f32 %v3108, %v3098
        %v3113 = vmul.f32 %v3108, %v3099
        %v3114 = vmul.f32 %v3108, %v3100
        %v3115 = vmul.f32 %v3108, %v3101
        %v3116 = vmul.f32 %v3108, %v3102
        %v3117 = vmul.f32 %v3108, %v3103
        %v3118 = vrot.slane %v3110, 4
        %v3119 = vadd.f32 %v3110, %v3118
        %v3120 = vrot.slane %v3119, 2
        %v3121 = vadd.f32 %v3119, %v3120
        %v3122 = vrot.slane %v3121, 1
        %v3123 = vadd.f32 %v3121, %v3122
        %v3124 = vrot.slane %v3111, 4
        %v3125 = vadd.f32 %v3111, %v3124
        %v3126 = vrot.slane %v3125, 2
        %v3127 = vadd.f32 %v3125, %v3126
        %v3128 = vrot.slane %v3127, 1
        %v3129 = vadd.f32 %v3127, %v3128
        %v3130 = vrot.slane %v3112, 4
        %v3131 = vadd.f32 %v3112, %v3130
        %v3132 = vrot.slane %v3131, 2
        %v3133 = vadd.f32 %v3131, %v3132
        %v3134 = vrot.slane %v3133, 1
        %v3135 = vadd.f32 %v3133, %v3134
        %v3136 = vrot.slane %v3113, 4
        %v3137 = vadd.f32 %v3113, %v3136
        %v3138 = vrot.slane %v3137, 2
        %v3139 = vadd.f32 %v3137, %v3138
        %v3140 = vrot.slane %v3139, 1
        %v3141 = vadd.f32 %v3139, %v3140
        %v3142 = vrot.slane %v3114, 4
        %v3143 = vadd.f32 %v3114, %v3142
        %v3144 = vrot.slane %v3143, 2
        %v3145 = vadd.f32 %v3143, %v3144
        %v3146 = vrot.slane %v3145, 1
        %v3147 = vadd.f32 %v3145, %v3146
        %v3148 = vrot.slane %v3115, 4
        %v3149 = vadd.f32 %v3115, %v3148
        %v3150 = vrot.slane %v3149, 2
        %v3151 = vadd.f32 %v3149, %v3150
        %v3152 = vrot.slane %v3151, 1
        %v3153 = vadd.f32 %v3151, %v3152
        %v3154 = vrot.slane %v3116, 4
        %v3155 = vadd.f32 %v3116, %v3154
        %v3156 = vrot.slane %v3155, 2
        %v3157 = vadd.f32 %v3155, %v3156
        %v3158 = vrot.slane %v3157, 1
        %v3159 = vadd.f32 %v3157, %v3158
        %v3160 = vrot.slane %v3117, 4
        %v3161 = vadd.f32 %v3117, %v3160
        %v3162 = vrot.slane %v3161, 2
        %v3163 = vadd.f32 %v3161, %v3162
        %v3164 = vrot.slane %v3163, 1
        %v3165 = vadd.f32 %v3163, %v3164
        %v3166 = vld [vmem:[#allocation2] sm:$0x1]
        %3168 = vset.pattern.permute.xlu0 0
        %3169 = vperm.xlu0 %3168, %v3166
        %v3170 = vpop.permute.xlu0 %3169
        %v3172 = vperm.slane %v3170, 0
        %v3173 = vadd.f32 %v3123, %v3172
        %v3174 = vadd.f32 %v3129, %v3172
        %v3175 = vadd.f32 %v3135, %v3172
        %v3176 = vadd.f32 %v3141, %v3172
        %v3177 = vadd.f32 %v3147, %v3172
        %v3178 = vadd.f32 %v3153, %v3172
        %v3179 = vadd.f32 %v3159, %v3172
        %v3180 = vadd.f32 %v3165, %v3172
        %v3181 = vsub.f32 0.0, %v3173
        %v3182 = vsub.f32 0.0, %v3174
        %v3183 = vsub.f32 0.0, %v3175
        %v3184 = vsub.f32 0.0, %v3176
        %v3185 = vsub.f32 0.0, %v3177
        %v3186 = vsub.f32 0.0, %v3178
        %v3187 = vsub.f32 0.0, %v3179
        %v3188 = vsub.f32 0.0, %v3180
        %v3189 = vmul.f32 %v3181, 1.442695
        %v3190 = vpow.pop %v3189
        %v3191 = vmul.f32 %v3182, 1.442695
        %v3192 = vpow.pop %v3191
        %v3193 = vmul.f32 %v3183, 1.442695
        %v3194 = vpow.pop %v3193
        %v3195 = vmul.f32 %v3184, 1.442695
        %v3196 = vpow.pop %v3195
        %v3197 = vmul.f32 %v3185, 1.442695
        %v3198 = vpow.pop %v3197
        %v3199 = vmul.f32 %v3186, 1.442695
        %v3200 = vpow.pop %v3199
        %v3201 = vmul.f32 %v3187, 1.442695
        %v3202 = vpow.pop %v3201
        %v3203 = vmul.f32 %v3188, 1.442695
        %v3204 = vpow.pop %v3203
        %v3205 = vadd.f32 %v3190, 1.0
        %v3206 = vadd.f32 %v3192, 1.0
        %v3207 = vadd.f32 %v3194, 1.0
        %v3208 = vadd.f32 %v3196, 1.0
        %v3209 = vadd.f32 %v3198, 1.0
        %v3210 = vadd.f32 %v3200, 1.0
        %v3211 = vadd.f32 %v3202, 1.0
        %v3212 = vadd.f32 %v3204, 1.0
        %v3213 = vrcp.pop %v3205
        %v3214 = vmul.f32 %v3205, %v3213
        %v3215 = vsub.f32 1.0, %v3214
        %v3216 = vmul.f32 %v3213, %v3215
        %v3217 = vadd.f32 %v3213, %v3216
        %vm3218 = vweird.f32 %v3205
        %vm3219 = vweird.f32 %v3213
        %vm3220 = vmor %vm3218, %vm3219
        %v3221 = vsel %vm3220, %v3213, %v3217
        %v3222 = vand.u32 2147483647, %v3205
        %vm3223 = vcmp.eq.f32.partialorder %v3222, 8.507059e+37
        %v3224 = vand.u32 %v3205, 2147483648
        %v3225 = vor.u32 1.1754944e-38, %v3224
        %v3226 = vsel %vm3223, %v3225, %v3221
        %v3227 = vmul.f32 1.0, %v3226
        %v3228 = vrcp.pop %v3206
        %v3229 = vmul.f32 %v3206, %v3228
        %v3230 = vsub.f32 1.0, %v3229
        %v3231 = vmul.f32 %v3228, %v3230
        %v3232 = vadd.f32 %v3228, %v3231
        %vm3233 = vweird.f32 %v3206
        %vm3234 = vweird.f32 %v3228
        %vm3235 = vmor %vm3233, %vm3234
        %v3236 = vsel %vm3235, %v3228, %v3232
        %v3237 = vand.u32 2147483647, %v3206
        %vm3238 = vcmp.eq.f32.partialorder %v3237, 8.507059e+37
        %v3239 = vand.u32 %v3206, 2147483648
        %v3240 = vor.u32 1.1754944e-38, %v3239
        %v3241 = vsel %vm3238, %v3240, %v3236
        %v3242 = vmul.f32 1.0, %v3241
        %v3243 = vrcp.pop %v3207
        %v3244 = vmul.f32 %v3207, %v3243
        %v3245 = vsub.f32 1.0, %v3244
        %v3246 = vmul.f32 %v3243, %v3245
        %v3247 = vadd.f32 %v3243, %v3246
        %vm3248 = vweird.f32 %v3207
        %vm3249 = vweird.f32 %v3243
        %vm3250 = vmor %vm3248, %vm3249
        %v3251 = vsel %vm3250, %v3243, %v3247
        %v3252 = vand.u32 2147483647, %v3207
        %vm3253 = vcmp.eq.f32.partialorder %v3252, 8.507059e+37
        %v3254 = vand.u32 %v3207, 2147483648
        %v3255 = vor.u32 1.1754944e-38, %v3254
        %v3256 = vsel %vm3253, %v3255, %v3251
        %v3257 = vmul.f32 1.0, %v3256
        %v3258 = vrcp.pop %v3208
        %v3259 = vmul.f32 %v3208, %v3258
        %v3260 = vsub.f32 1.0, %v3259
        %v3261 = vmul.f32 %v3258, %v3260
        %v3262 = vadd.f32 %v3258, %v3261
        %vm3263 = vweird.f32 %v3208
        %vm3264 = vweird.f32 %v3258
        %vm3265 = vmor %vm3263, %vm3264
        %v3266 = vsel %vm3265, %v3258, %v3262
        %v3267 = vand.u32 2147483647, %v3208
        %vm3268 = vcmp.eq.f32.partialorder %v3267, 8.507059e+37
        %v3269 = vand.u32 %v3208, 2147483648
        %v3270 = vor.u32 1.1754944e-38, %v3269
        %v3271 = vsel %vm3268, %v3270, %v3266
        %v3272 = vmul.f32 1.0, %v3271
        %v3273 = vrcp.pop %v3209
        %v3274 = vmul.f32 %v3209, %v3273
        %v3275 = vsub.f32 1.0, %v3274
        %v3276 = vmul.f32 %v3273, %v3275
        %v3277 = vadd.f32 %v3273, %v3276
        %vm3278 = vweird.f32 %v3209
        %vm3279 = vweird.f32 %v3273
        %vm3280 = vmor %vm3278, %vm3279
        %v3281 = vsel %vm3280, %v3273, %v3277
        %v3282 = vand.u32 2147483647, %v3209
        %vm3283 = vcmp.eq.f32.partialorder %v3282, 8.507059e+37
        %v3284 = vand.u32 %v3209, 2147483648
        %v3285 = vor.u32 1.1754944e-38, %v3284
        %v3286 = vsel %vm3283, %v3285, %v3281
        %v3287 = vmul.f32 1.0, %v3286
        %v3288 = vrcp.pop %v3210
        %v3289 = vmul.f32 %v3210, %v3288
        %v3290 = vsub.f32 1.0, %v3289
        %v3291 = vmul.f32 %v3288, %v3290
        %v3292 = vadd.f32 %v3288, %v3291
        %vm3293 = vweird.f32 %v3210
        %vm3294 = vweird.f32 %v3288
        %vm3295 = vmor %vm3293, %vm3294
        %v3296 = vsel %vm3295, %v3288, %v3292
        %v3297 = vand.u32 2147483647, %v3210
        %vm3298 = vcmp.eq.f32.partialorder %v3297, 8.507059e+37
        %v3299 = vand.u32 %v3210, 2147483648
        %v3300 = vor.u32 1.1754944e-38, %v3299
        %v3301 = vsel %vm3298, %v3300, %v3296
        %v3302 = vmul.f32 1.0, %v3301
        %v3303 = vrcp.pop %v3211
        %v3304 = vmul.f32 %v3211, %v3303
        %v3305 = vsub.f32 1.0, %v3304
        %v3306 = vmul.f32 %v3303, %v3305
        %v3307 = vadd.f32 %v3303, %v3306
        %vm3308 = vweird.f32 %v3211
        %vm3309 = vweird.f32 %v3303
        %vm3310 = vmor %vm3308, %vm3309
        %v3311 = vsel %vm3310, %v3303, %v3307
        %v3312 = vand.u32 2147483647, %v3211
        %vm3313 = vcmp.eq.f32.partialorder %v3312, 8.507059e+37
        %v3314 = vand.u32 %v3211, 2147483648
        %v3315 = vor.u32 1.1754944e-38, %v3314
        %v3316 = vsel %vm3313, %v3315, %v3311
        %v3317 = vmul.f32 1.0, %v3316
        %v3318 = vrcp.pop %v3212
        %v3319 = vmul.f32 %v3212, %v3318
        %v3320 = vsub.f32 1.0, %v3319
        %v3321 = vmul.f32 %v3318, %v3320
        %v3322 = vadd.f32 %v3318, %v3321
        %vm3323 = vweird.f32 %v3212
        %vm3324 = vweird.f32 %v3318
        %vm3325 = vmor %vm3323, %vm3324
        %v3326 = vsel %vm3325, %v3318, %v3322
        %v3327 = vand.u32 2147483647, %v3212
        %vm3328 = vcmp.eq.f32.partialorder %v3327, 8.507059e+37
        %v3329 = vand.u32 %v3212, 2147483648
        %v3330 = vor.u32 1.1754944e-38, %v3329
        %v3331 = vsel %vm3328, %v3330, %v3326
        %v3332 = vmul.f32 1.0, %v3331
        %v3341 = vrot.slane %v3242, 7
        %v3342 = vrot.slane %v3257, 6
        %v3343 = vrot.slane %v3272, 5
        %v3344 = vrot.slane %v3287, 4
        %v3345 = vrot.slane %v3302, 3
        %v3346 = vrot.slane %v3317, 2
        %v3347 = vrot.slane %v3332, 1
        %vm3348 = vcmask 1040384
        %v3349 = vsel %vm3348, %v3227, %v3341
        %vm3350 = vcmask 1042434
        %v3351 = vsel %vm3350, %v3342, %v3343
        %vm3352 = vcmask 1041408
        %v3353 = vsel %vm3352, %v3349, %v3351
        %vm3354 = vcmask 1044484
        %v3355 = vsel %vm3354, %v3344, %v3345
        %vm3356 = vcmask 1046534
        %v3357 = vsel %vm3356, %v3346, %v3347
        %vm3358 = vcmask 1045508
        %v3359 = vsel %vm3358, %v3355, %v3357
        %vm3360 = vcmask 1043456
        %v3361 = vsel %vm3360, %v3353, %v3359
        %3363 = vst [vmem:[%s436] sm:$0xff] %v3361
        %s3364 = sand.u32 %s315, 1
        %s3365 = scalar_lea.sflag [#allocation4], %s3364
        %s3366 = sand.u32 %s315, 1
        %s3367 = smul.addr %s3366, 8
        %s3368 = scalar_lea.vmem [#allocation3], %s3367
        // Predicated region
        $region73: #{tpu_custom_call.1} parent=71 // pred_check
          %p3369 = pneg %p325
        $region74: #{tpu_custom_call.1} parent=71 // pred_check_branch
          %3371 = sbr.rel (%p3369) target = $region76
        $region75: #{tpu_custom_call.1} parent=71 // pred_region
          %s3372 = smul.u32 8, %s29
          %3374 = vsyncadd %s3365, 0
          %s3375 = scalar_lea.hbm %s13, %s3372
          %s3377 = sshll.u32 %s3368, 4
          %s3378 = int_to_ptr.vmem [resolvable:$true] %s3377
          %s3379 = sshll.u32 %s3375, 4
          %s3380 = int_to_ptr.hbm [resolvable:$true] %s3379
          %3382 = dma.vmem_to_hbm [thread:$0]  %s3378, 128, %s3380, %s3365
        $region76: #{tpu_custom_call.1} parent=71 // pred_fallthru
          _
      $region72: #{tpu_custom_call.1} parent=5 // pred_fallthru
        _
      %p3383 = scmp.le.s32.totalorder 2, %s24
      // Predicated region
      $region77: #{tpu_custom_call.1} parent=5 // pred_check
        %p3384 = pneg %p3383
      $region78: #{tpu_custom_call.1} parent=5 // pred_check_branch
        %3386 = sbr.rel (%p3384) target = $region80
      $region79: #{tpu_custom_call.1} parent=5 // pred_region
        %s3387 = ssub.s32 %s24, 2
        // Predicated region
        $region81: #{tpu_custom_call.1} parent=79 // pred_check
          %p3388 = pneg %p331
        $region82: #{tpu_custom_call.1} parent=79 // pred_check_branch
          %3390 = sbr.rel (%p3388) target = $region84
        $region83: #{tpu_custom_call.1} parent=79 // pred_region
          %s3391 = sand.u32 %s316, 1
          %s3392 = scalar_lea.sflag [#allocation4], %s3391
          %s3393 = sand.u32 %s316, 1
          %s3394 = smul.addr %s3393, 8
          %s3395 = scalar_lea.vmem [#allocation3], %s3394
          %3397 = dma.done %s3392, 128
        $region84: #{tpu_custom_call.1} parent=79 // pred_fallthru
          _
      $region80: #{tpu_custom_call.1} parent=5 // pred_fallthru
        _
    $region6: #{tpu_custom_call.1} parent=1 // loop_footer
      %s28 = sadd.s32 1, %s24
    $region7: #{tpu_custom_call.1} parent=1 // loop_footer_branch
      %23 = sbr.rel target = $region3
    $region8: #{tpu_custom_call.1} parent=1 // loop_exit
      _
    %3398 = vsyncpa [#allocation4], 1
    %s3399 = scalar_lea.sflag [#allocation4], 1
    %3400 = vsyncpa %s3399, 1

</llo_original>
